<compile_context>
chip_gen: v5e
topology: v5e:2x2
jax: 0.10.0
libtpu: 0.0.40
codegen_flags: <defaults>
</compile_context>

<pallas_src>
import jax
import jax.numpy as jnp
from jax import lax
from jax.experimental import pallas as pl
from jax.experimental.pallas import tpu as pltpu

_TAPS = tuple((dy, dx) for dy in range(3) for dx in range(3))


def _round_up(x, m):
    return ((x + m - 1) // m) * m


def conv_block_kernel(x_ref, w1_ref, s1_ref, b1_ref, w2_ref, s2_ref, b2_ref,
                      o_ref, y1_ref, p1_ref, p2_ref):
    """Fused [conv3x3 -> BN(eval) -> ReLU] x 2 for one batch element.

    x_ref : (1, H+2, W+2, Ci)   input, spatially pre-padded for layer 1
    w1_ref: (9*Ci, Cp)          layer-1 weights, 3x3 taps folded into K (im2col)
    w2_ref: (9*Cp, Cp)          layer-2 weights, taps folded into K
    s*/b* : (1, Cp)             folded BatchNorm scale / bias per layer
    o_ref : (1, H, W, Cp)       output (Cp = Cout rounded up to 128 lanes)
    y1_ref: (H+2, W+2, Cp)      VMEM scratch: layer-1 activation + zero border
    p1_ref: (H*W, 9*Ci)         VMEM scratch: layer-1 im2col patches
    p2_ref: (H*W, 9*Cp)         VMEM scratch: layer-2 im2col patches
    """
    H = o_ref.shape[1]
    W = o_ref.shape[2]
    Cp = o_ref.shape[3]
    Ci = x_ref.shape[3]

    # ---- layer 1: pack the 9 taps into the contraction axis, one MXU matmul.
    xp = x_ref[0]                                          # (H+2, W+2, Ci)
    for k, (dy, dx) in enumerate(_TAPS):
        p1_ref[:, k * Ci:(k + 1) * Ci] = (
            xp[dy:dy + H, dx:dx + W, :].reshape(H * W, Ci))
    y1 = jnp.dot(p1_ref[...], w1_ref[...],
                 preferred_element_type=jnp.float32)       # (H*W, Cp)
    y1 = jnp.maximum(y1 * s1_ref[...] + b1_ref[...], 0.0)  # folded BN + ReLU

    # Keep the layer-1 activation in VMEM; its zero border is layer-2's pad=1.
    y1_ref[...] = jnp.zeros(y1_ref.shape, y1_ref.dtype)
    y1_ref[1:H + 1, 1:W + 1, :] = y1.reshape(H, W, Cp)

    # ---- layer 2: same im2col + single matmul, reading the VMEM scratch.
    yp = y1_ref[...]                                       # (H+2, W+2, Cp)
    for k, (dy, dx) in enumerate(_TAPS):
        p2_ref[:, k * Cp:(k + 1) * Cp] = (
            yp[dy:dy + H, dx:dx + W, :].reshape(H * W, Cp))
    y2 = jnp.dot(p2_ref[...], w2_ref[...],
                 preferred_element_type=jnp.float32)       # (H*W, Cp)
    y2 = jnp.maximum(y2 * s2_ref[...] + b2_ref[...], 0.0)
    o_ref[0] = y2.reshape(H, W, Cp).astype(o_ref.dtype)


def conv_block_pallas(x_nhwc, params):
    """Fused two-layer conv block. x_nhwc: (N,H,W,Cin) f32 -> (N,H,W,Cout) f32."""
    (w1, s1, b1), (w2, s2, b2) = params     # HWIO weights + folded BN scale/bias
    N, H, W, Ci = x_nhwc.shape
    C = w1.shape[-1]

    # Lane-dense channel axes: round channel dims up to a multiple of 128 with
    # zero padding so im2col chunks, stores and the affine are full-lane ops.
    Cip = _round_up(Ci, 128)
    Cp = _round_up(C, 128)

    # im2col weight layout: (3,3,I,O) -> (9*I, O); tap order (dy, dx) row-major
    # matches the in-kernel patch packing.
    w1_r = jnp.pad(w1.astype(jnp.float32),
                   ((0, 0), (0, 0), (0, Cip - Ci), (0, Cp - C))
                   ).reshape(9 * Cip, Cp)
    w2_r = jnp.pad(w2.astype(jnp.float32),
                   ((0, 0), (0, 0), (0, Cp - C), (0, Cp - C))
                   ).reshape(9 * Cp, Cp)

    def pad_vec(v):
        return jnp.pad(v.astype(jnp.float32), (0, Cp - C)).reshape(1, Cp)

    s1p, b1p, s2p, b2p = (pad_vec(v) for v in (s1, b1, s2, b2))

    # Layer-1 spatial halo (cheap glue); layer-2 padding is the in-kernel zero
    # border, so the intermediate activation never visits HBM.
    xp = jnp.pad(x_nhwc.astype(jnp.float32),
                 ((0, 0), (1, 1), (1, 1), (0, Cip - Ci)))

    out = pl.pallas_call(
        conv_block_kernel,
        out_shape=jax.ShapeDtypeStruct((N, H, W, Cp), jnp.float32),
        grid_spec=pltpu.PrefetchScalarGridSpec(
            num_scalar_prefetch=0,
            grid=(N,),
            in_specs=[
                pl.BlockSpec((1, H + 2, W + 2, Cip), lambda n: (n, 0, 0, 0)),
                pl.BlockSpec((9 * Cip, Cp), lambda n: (0, 0)),
                pl.BlockSpec((1, Cp), lambda n: (0, 0)),
                pl.BlockSpec((1, Cp), lambda n: (0, 0)),
                pl.BlockSpec((9 * Cp, Cp), lambda n: (0, 0)),
                pl.BlockSpec((1, Cp), lambda n: (0, 0)),
                pl.BlockSpec((1, Cp), lambda n: (0, 0)),
            ],
            out_specs=pl.BlockSpec((1, H, W, Cp), lambda n: (n, 0, 0, 0)),
            scratch_shapes=[
                pltpu.VMEM((H + 2, W + 2, Cp), jnp.float32),
                pltpu.VMEM((H * W, 9 * Cip), jnp.float32),
                pltpu.VMEM((H * W, 9 * Cp), jnp.float32),
            ],
        ),
        compiler_params=pltpu.CompilerParams(
            dimension_semantics=("parallel",),
            vmem_limit_bytes=32 * 1024 * 1024,
        ),
    )(xp, w1_r, s1p, b1p, w2_r, s2p, b2p)

    return out[..., :C]        # drop the lane padding


def fold_bn(w_oihw, conv_bias, gamma, beta, running_mean, running_var,
            eps=1e-5):
    """Fold eval-mode BatchNorm into per-channel scale/bias; OIHW -> HWIO."""
    s = gamma / jnp.sqrt(running_var + eps)
    w_hwio = jnp.transpose(w_oihw, (2, 3, 1, 0))
    bias = beta + s * (conv_bias - running_mean)
    return w_hwio, s, bias


def init_params(key, in_channels, out_channels):
    """Deterministic synthetic parameters for the two conv/BN layers."""
    params = []
    c_in = in_channels
    for layer in range(2):
        keys = jax.random.split(jax.random.fold_in(key, layer), 6)
        fan_in = c_in * 9
        w = jax.random.normal(keys[0], (out_channels, c_in, 3, 3),
                              jnp.float32) * (1.0 / jnp.sqrt(fan_in))
        b = 0.05 * jax.random.normal(keys[1], (out_channels,), jnp.float32)
        gamma = 1.0 + 0.1 * jax.random.normal(keys[2], (out_channels,),
                                              jnp.float32)
        beta = 0.1 * jax.random.normal(keys[3], (out_channels,), jnp.float32)
        rmean = 0.1 * jax.random.normal(keys[4], (out_channels,), jnp.float32)
        rvar = 1.0 + 0.1 * jnp.abs(
            jax.random.normal(keys[5], (out_channels,), jnp.float32))
        params.append(fold_bn(w, b, gamma, beta, rmean, rvar))
        c_in = out_channels
    return params


@jax.jit
def conv_block_forward(x_nchw, params):
    # NCHW (PyTorch) -> NHWC (kernel) -> NCHW (PyTorch)
    x = jnp.transpose(x_nchw, (0, 2, 3, 1))
    y = conv_block_pallas(x, params)
    return jnp.transpose(y, (0, 3, 1, 2))


def reference_forward(x_nchw, params):
    """Pure-JAX reference (lax.conv) for correctness checking."""
    x = jnp.transpose(x_nchw, (0, 2, 3, 1))
    for (w_hwio, scale, bias) in params:
        y = lax.conv_general_dilated(
            x, w_hwio, window_strides=(1, 1), padding=((1, 1), (1, 1)),
            dimension_numbers=("NHWC", "HWIO", "NHWC"))
        y = y * scale[None, None, None, :] + bias[None, None, None, :]
        x = jnp.maximum(y, 0.0)
    return jnp.transpose(x, (0, 3, 1, 2))


if __name__ == "__main__":
    N, C_IN, H, W = 2, 4, 16, 16
    C_OUT = 8

    root = jax.random.PRNGKey(0)
    k_x, k_p = jax.random.split(root)

    x = jax.random.normal(k_x, (N, C_IN, H, W), jnp.float32)
    params = init_params(k_p, C_IN, C_OUT)

    out = jax.block_until_ready(conv_block_forward(x, params))
    ref = reference_forward(x, params)

    assert out.shape == (N, C_OUT, H, W)
    assert jnp.allclose(out, ref, atol=1e-4, rtol=1e-4)

    print("KERNEL_OK")
</pallas_src>

<mosaic_0001>
module attributes {stable_mosaic.version = 11 : i64} {
  func.func @conv_block_kernel(%arg0: i32, %arg1: memref<1x18x18x128xf32, #tpu.memory_space<vmem>>, %arg2: memref<1152x128xf32, #tpu.memory_space<vmem>>, %arg3: memref<1x128xf32, #tpu.memory_space<vmem>>, %arg4: memref<1x128xf32, #tpu.memory_space<vmem>>, %arg5: memref<1152x128xf32, #tpu.memory_space<vmem>>, %arg6: memref<1x128xf32, #tpu.memory_space<vmem>>, %arg7: memref<1x128xf32, #tpu.memory_space<vmem>>, %arg8: memref<1x16x16x128xf32, #tpu.memory_space<vmem>>, %arg9: memref<18x18x128xf32, #tpu.memory_space<vmem>>, %arg10: memref<256x1152xf32, #tpu.memory_space<vmem>>, %arg11: memref<256x1152xf32, #tpu.memory_space<vmem>>) attributes {dimension_semantics = [#tpu.dimension_semantics<parallel>], iteration_bounds = array<i64: 2>, scalar_prefetch = 0 : i64, scratch_operands = 3 : i64, tpu.core_type = #tpu.core_type<tc>, window_params = [{transform_indices = @transform_0, window_bounds = array<i64: 1, 18, 18, 128>}, {pipeline_mode = #tpu.pipeline_mode<synchronous>, transform_indices = @transform_1, window_bounds = array<i64: 1152, 128>}, {pipeline_mode = #tpu.pipeline_mode<synchronous>, transform_indices = @transform_2, window_bounds = array<i64: 1, 128>}, {pipeline_mode = #tpu.pipeline_mode<synchronous>, transform_indices = @transform_3, window_bounds = array<i64: 1, 128>}, {pipeline_mode = #tpu.pipeline_mode<synchronous>, transform_indices = @transform_4, window_bounds = array<i64: 1152, 128>}, {pipeline_mode = #tpu.pipeline_mode<synchronous>, transform_indices = @transform_5, window_bounds = array<i64: 1, 128>}, {pipeline_mode = #tpu.pipeline_mode<synchronous>, transform_indices = @transform_6, window_bounds = array<i64: 1, 128>}, {transform_indices = @transform_7, window_bounds = array<i64: 1, 16, 16, 128>}]} {
    %c0 = arith.constant 0 : index
    %c0_0 = arith.constant 0 : index
    %c0_1 = arith.constant 0 : index
    %c0_2 = arith.constant 0 : index
    %0 = vector.load %arg1[%c0, %c0_0, %c0_1, %c0_2] : memref<1x18x18x128xf32, #tpu.memory_space<vmem>>, vector<1x18x18x128xf32>
    %1 = vector.shape_cast %0 : vector<1x18x18x128xf32> to vector<18x18x128xf32>
    %2 = vector.extract_strided_slice %1 {offsets = [0, 0, 0], sizes = [16, 16, 128], strides = [1, 1, 1]} : vector<18x18x128xf32> to vector<16x16x128xf32>
    %3 = vector.shape_cast %2 : vector<16x16x128xf32> to vector<256x128xf32>
    %c0_3 = arith.constant 0 : index
    %c0_4 = arith.constant 0 : index
    %4 = vector.load %arg10[%c0_3, %c0_4] : memref<256x1152xf32, #tpu.memory_space<vmem>>, vector<256x128xf32>
    tpu.vector_store %arg10[%c0_3, %c0_4], %3 {strides = array<i32>} : memref<256x1152xf32, #tpu.memory_space<vmem>>, vector<256x128xf32>,
    %5 = vector.extract_strided_slice %1 {offsets = [0, 1, 0], sizes = [16, 16, 128], strides = [1, 1, 1]} : vector<18x18x128xf32> to vector<16x16x128xf32>
    %6 = vector.shape_cast %5 : vector<16x16x128xf32> to vector<256x128xf32>
    %c0_5 = arith.constant 0 : index
    %c128 = arith.constant 128 : index
    %7 = vector.load %arg10[%c0_5, %c128] : memref<256x1152xf32, #tpu.memory_space<vmem>>, vector<256x128xf32>
    tpu.vector_store %arg10[%c0_5, %c128], %6 {strides = array<i32>} : memref<256x1152xf32, #tpu.memory_space<vmem>>, vector<256x128xf32>,
    %8 = vector.extract_strided_slice %1 {offsets = [0, 2, 0], sizes = [16, 16, 128], strides = [1, 1, 1]} : vector<18x18x128xf32> to vector<16x16x128xf32>
    %9 = vector.shape_cast %8 : vector<16x16x128xf32> to vector<256x128xf32>
    %c0_6 = arith.constant 0 : index
    %c256 = arith.constant 256 : index
    %10 = vector.load %arg10[%c0_6, %c256] : memref<256x1152xf32, #tpu.memory_space<vmem>>, vector<256x128xf32>
    tpu.vector_store %arg10[%c0_6, %c256], %9 {strides = array<i32>} : memref<256x1152xf32, #tpu.memory_space<vmem>>, vector<256x128xf32>,
    %11 = vector.extract_strided_slice %1 {offsets = [1, 0, 0], sizes = [16, 16, 128], strides = [1, 1, 1]} : vector<18x18x128xf32> to vector<16x16x128xf32>
    %12 = vector.shape_cast %11 : vector<16x16x128xf32> to vector<256x128xf32>
    %c0_7 = arith.constant 0 : index
    %c384 = arith.constant 384 : index
    %13 = vector.load %arg10[%c0_7, %c384] : memref<256x1152xf32, #tpu.memory_space<vmem>>, vector<256x128xf32>
    tpu.vector_store %arg10[%c0_7, %c384], %12 {strides = array<i32>} : memref<256x1152xf32, #tpu.memory_space<vmem>>, vector<256x128xf32>,
    %14 = vector.extract_strided_slice %1 {offsets = [1, 1, 0], sizes = [16, 16, 128], strides = [1, 1, 1]} : vector<18x18x128xf32> to vector<16x16x128xf32>
    %15 = vector.shape_cast %14 : vector<16x16x128xf32> to vector<256x128xf32>
    %c0_8 = arith.constant 0 : index
    %c512 = arith.constant 512 : index
    %16 = vector.load %arg10[%c0_8, %c512] : memref<256x1152xf32, #tpu.memory_space<vmem>>, vector<256x128xf32>
    tpu.vector_store %arg10[%c0_8, %c512], %15 {strides = array<i32>} : memref<256x1152xf32, #tpu.memory_space<vmem>>, vector<256x128xf32>,
    %17 = vector.extract_strided_slice %1 {offsets = [1, 2, 0], sizes = [16, 16, 128], strides = [1, 1, 1]} : vector<18x18x128xf32> to vector<16x16x128xf32>
    %18 = vector.shape_cast %17 : vector<16x16x128xf32> to vector<256x128xf32>
    %c0_9 = arith.constant 0 : index
    %c640 = arith.constant 640 : index
    %19 = vector.load %arg10[%c0_9, %c640] : memref<256x1152xf32, #tpu.memory_space<vmem>>, vector<256x128xf32>
    tpu.vector_store %arg10[%c0_9, %c640], %18 {strides = array<i32>} : memref<256x1152xf32, #tpu.memory_space<vmem>>, vector<256x128xf32>,
    %20 = vector.extract_strided_slice %1 {offsets = [2, 0, 0], sizes = [16, 16, 128], strides = [1, 1, 1]} : vector<18x18x128xf32> to vector<16x16x128xf32>
    %21 = vector.shape_cast %20 : vector<16x16x128xf32> to vector<256x128xf32>
    %c0_10 = arith.constant 0 : index
    %c768 = arith.constant 768 : index
    %22 = vector.load %arg10[%c0_10, %c768] : memref<256x1152xf32, #tpu.memory_space<vmem>>, vector<256x128xf32>
    tpu.vector_store %arg10[%c0_10, %c768], %21 {strides = array<i32>} : memref<256x1152xf32, #tpu.memory_space<vmem>>, vector<256x128xf32>,
    %23 = vector.extract_strided_slice %1 {offsets = [2, 1, 0], sizes = [16, 16, 128], strides = [1, 1, 1]} : vector<18x18x128xf32> to vector<16x16x128xf32>
    %24 = vector.shape_cast %23 : vector<16x16x128xf32> to vector<256x128xf32>
    %c0_11 = arith.constant 0 : index
    %c896 = arith.constant 896 : index
    %25 = vector.load %arg10[%c0_11, %c896] : memref<256x1152xf32, #tpu.memory_space<vmem>>, vector<256x128xf32>
    tpu.vector_store %arg10[%c0_11, %c896], %24 {strides = array<i32>} : memref<256x1152xf32, #tpu.memory_space<vmem>>, vector<256x128xf32>,
    %26 = vector.extract_strided_slice %1 {offsets = [2, 2, 0], sizes = [16, 16, 128], strides = [1, 1, 1]} : vector<18x18x128xf32> to vector<16x16x128xf32>
    %27 = vector.shape_cast %26 : vector<16x16x128xf32> to vector<256x128xf32>
    %c0_12 = arith.constant 0 : index
    %c1024 = arith.constant 1024 : index
    %28 = vector.load %arg10[%c0_12, %c1024] : memref<256x1152xf32, #tpu.memory_space<vmem>>, vector<256x128xf32>
    tpu.vector_store %arg10[%c0_12, %c1024], %27 {strides = array<i32>} : memref<256x1152xf32, #tpu.memory_space<vmem>>, vector<256x128xf32>,
    %c0_13 = arith.constant 0 : index
    %c0_14 = arith.constant 0 : index
    %29 = vector.load %arg10[%c0_13, %c0_14] : memref<256x1152xf32, #tpu.memory_space<vmem>>, vector<256x1152xf32>
    %c0_15 = arith.constant 0 : index
    %c0_16 = arith.constant 0 : index
    %30 = vector.load %arg2[%c0_15, %c0_16] : memref<1152x128xf32, #tpu.memory_space<vmem>>, vector<1152x128xf32>
    %cst = arith.constant dense<0.000000e+00> : vector<256x128xf32>
    %31 = tpu.matmul %29, %30, %cst {dimension_numbers = #tpu.dot_dimension_numbers<[1], [0], [0], [1], [0, 0, 1, 1], [], []>} : vector<256x1152xf32>, vector<1152x128xf32>, vector<256x128xf32> -> vector<256x128xf32>
    %c0_17 = arith.constant 0 : index
    %c0_18 = arith.constant 0 : index
    %32 = vector.load %arg3[%c0_17, %c0_18] : memref<1x128xf32, #tpu.memory_space<vmem>>, vector<1x128xf32>
    %33 = vector.broadcast %32 : vector<1x128xf32> to vector<256x128xf32>
    %34 = arith.mulf %31, %33 : vector<256x128xf32>
    %c0_19 = arith.constant 0 : index
    %c0_20 = arith.constant 0 : index
    %35 = vector.load %arg4[%c0_19, %c0_20] : memref<1x128xf32, #tpu.memory_space<vmem>>, vector<1x128xf32>
    %36 = vector.broadcast %35 : vector<1x128xf32> to vector<256x128xf32>
    %37 = arith.addf %34, %36 : vector<256x128xf32>
    %cst_21 = arith.constant 0.000000e+00 : f32
    %38 = vector.broadcast %cst_21 : f32 to vector<256x128xf32>
    %39 = arith.maximumf %37, %38 : vector<256x128xf32>
    %cst_22 = arith.constant 0.000000e+00 : f32
    %40 = vector.broadcast %cst_22 : f32 to vector<18x18x128xf32>
    %c0_23 = arith.constant 0 : index
    %c0_24 = arith.constant 0 : index
    %c0_25 = arith.constant 0 : index
    %41 = vector.load %arg9[%c0_23, %c0_24, %c0_25] : memref<18x18x128xf32, #tpu.memory_space<vmem>>, vector<18x18x128xf32>
    tpu.vector_store %arg9[%c0_23, %c0_24, %c0_25], %40 {strides = array<i32>} : memref<18x18x128xf32, #tpu.memory_space<vmem>>, vector<18x18x128xf32>,
    %42 = vector.shape_cast %39 : vector<256x128xf32> to vector<16x16x128xf32>
    %c1 = arith.constant 1 : index
    %c1_26 = arith.constant 1 : index
    %c0_27 = arith.constant 0 : index
    %43 = vector.load %arg9[%c1, %c1_26, %c0_27] : memref<18x18x128xf32, #tpu.memory_space<vmem>>, vector<16x16x128xf32>
    tpu.vector_store %arg9[%c1, %c1_26, %c0_27], %42 {strides = array<i32>} : memref<18x18x128xf32, #tpu.memory_space<vmem>>, vector<16x16x128xf32>,
    %c0_28 = arith.constant 0 : index
    %c0_29 = arith.constant 0 : index
    %c0_30 = arith.constant 0 : index
    %44 = vector.load %arg9[%c0_28, %c0_29, %c0_30] : memref<18x18x128xf32, #tpu.memory_space<vmem>>, vector<18x18x128xf32>
    %45 = vector.extract_strided_slice %44 {offsets = [0, 0, 0], sizes = [16, 16, 128], strides = [1, 1, 1]} : vector<18x18x128xf32> to vector<16x16x128xf32>
    %46 = vector.shape_cast %45 : vector<16x16x128xf32> to vector<256x128xf32>
    %c0_31 = arith.constant 0 : index
    %c0_32 = arith.constant 0 : index
    %47 = vector.load %arg11[%c0_31, %c0_32] : memref<256x1152xf32, #tpu.memory_space<vmem>>, vector<256x128xf32>
    tpu.vector_store %arg11[%c0_31, %c0_32], %46 {strides = array<i32>} : memref<256x1152xf32, #tpu.memory_space<vmem>>, vector<256x128xf32>,
    %48 = vector.extract_strided_slice %44 {offsets = [0, 1, 0], sizes = [16, 16, 128], strides = [1, 1, 1]} : vector<18x18x128xf32> to vector<16x16x128xf32>
    %49 = vector.shape_cast %48 : vector<16x16x128xf32> to vector<256x128xf32>
    %c0_33 = arith.constant 0 : index
    %c128_34 = arith.constant 128 : index
    %50 = vector.load %arg11[%c0_33, %c128_34] : memref<256x1152xf32, #tpu.memory_space<vmem>>, vector<256x128xf32>
    tpu.vector_store %arg11[%c0_33, %c128_34], %49 {strides = array<i32>} : memref<256x1152xf32, #tpu.memory_space<vmem>>, vector<256x128xf32>,
    %51 = vector.extract_strided_slice %44 {offsets = [0, 2, 0], sizes = [16, 16, 128], strides = [1, 1, 1]} : vector<18x18x128xf32> to vector<16x16x128xf32>
    %52 = vector.shape_cast %51 : vector<16x16x128xf32> to vector<256x128xf32>
    %c0_35 = arith.constant 0 : index
    %c256_36 = arith.constant 256 : index
    %53 = vector.load %arg11[%c0_35, %c256_36] : memref<256x1152xf32, #tpu.memory_space<vmem>>, vector<256x128xf32>
    tpu.vector_store %arg11[%c0_35, %c256_36], %52 {strides = array<i32>} : memref<256x1152xf32, #tpu.memory_space<vmem>>, vector<256x128xf32>,
    %54 = vector.extract_strided_slice %44 {offsets = [1, 0, 0], sizes = [16, 16, 128], strides = [1, 1, 1]} : vector<18x18x128xf32> to vector<16x16x128xf32>
    %55 = vector.shape_cast %54 : vector<16x16x128xf32> to vector<256x128xf32>
    %c0_37 = arith.constant 0 : index
    %c384_38 = arith.constant 384 : index
    %56 = vector.load %arg11[%c0_37, %c384_38] : memref<256x1152xf32, #tpu.memory_space<vmem>>, vector<256x128xf32>
    tpu.vector_store %arg11[%c0_37, %c384_38], %55 {strides = array<i32>} : memref<256x1152xf32, #tpu.memory_space<vmem>>, vector<256x128xf32>,
    %57 = vector.extract_strided_slice %44 {offsets = [1, 1, 0], sizes = [16, 16, 128], strides = [1, 1, 1]} : vector<18x18x128xf32> to vector<16x16x128xf32>
    %58 = vector.shape_cast %57 : vector<16x16x128xf32> to vector<256x128xf32>
    %c0_39 = arith.constant 0 : index
    %c512_40 = arith.constant 512 : index
    %59 = vector.load %arg11[%c0_39, %c512_40] : memref<256x1152xf32, #tpu.memory_space<vmem>>, vector<256x128xf32>
    tpu.vector_store %arg11[%c0_39, %c512_40], %58 {strides = array<i32>} : memref<256x1152xf32, #tpu.memory_space<vmem>>, vector<256x128xf32>,
    %60 = vector.extract_strided_slice %44 {offsets = [1, 2, 0], sizes = [16, 16, 128], strides = [1, 1, 1]} : vector<18x18x128xf32> to vector<16x16x128xf32>
    %61 = vector.shape_cast %60 : vector<16x16x128xf32> to vector<256x128xf32>
    %c0_41 = arith.constant 0 : index
    %c640_42 = arith.constant 640 : index
    %62 = vector.load %arg11[%c0_41, %c640_42] : memref<256x1152xf32, #tpu.memory_space<vmem>>, vector<256x128xf32>
    tpu.vector_store %arg11[%c0_41, %c640_42], %61 {strides = array<i32>} : memref<256x1152xf32, #tpu.memory_space<vmem>>, vector<256x128xf32>,
    %63 = vector.extract_strided_slice %44 {offsets = [2, 0, 0], sizes = [16, 16, 128], strides = [1, 1, 1]} : vector<18x18x128xf32> to vector<16x16x128xf32>
    %64 = vector.shape_cast %63 : vector<16x16x128xf32> to vector<256x128xf32>
    %c0_43 = arith.constant 0 : index
    %c768_44 = arith.constant 768 : index
    %65 = vector.load %arg11[%c0_43, %c768_44] : memref<256x1152xf32, #tpu.memory_space<vmem>>, vector<256x128xf32>
    tpu.vector_store %arg11[%c0_43, %c768_44], %64 {strides = array<i32>} : memref<256x1152xf32, #tpu.memory_space<vmem>>, vector<256x128xf32>,
    %66 = vector.extract_strided_slice %44 {offsets = [2, 1, 0], sizes = [16, 16, 128], strides = [1, 1, 1]} : vector<18x18x128xf32> to vector<16x16x128xf32>
    %67 = vector.shape_cast %66 : vector<16x16x128xf32> to vector<256x128xf32>
    %c0_45 = arith.constant 0 : index
    %c896_46 = arith.constant 896 : index
    %68 = vector.load %arg11[%c0_45, %c896_46] : memref<256x1152xf32, #tpu.memory_space<vmem>>, vector<256x128xf32>
    tpu.vector_store %arg11[%c0_45, %c896_46], %67 {strides = array<i32>} : memref<256x1152xf32, #tpu.memory_space<vmem>>, vector<256x128xf32>,
    %69 = vector.extract_strided_slice %44 {offsets = [2, 2, 0], sizes = [16, 16, 128], strides = [1, 1, 1]} : vector<18x18x128xf32> to vector<16x16x128xf32>
    %70 = vector.shape_cast %69 : vector<16x16x128xf32> to vector<256x128xf32>
    %c0_47 = arith.constant 0 : index
    %c1024_48 = arith.constant 1024 : index
    %71 = vector.load %arg11[%c0_47, %c1024_48] : memref<256x1152xf32, #tpu.memory_space<vmem>>, vector<256x128xf32>
    tpu.vector_store %arg11[%c0_47, %c1024_48], %70 {strides = array<i32>} : memref<256x1152xf32, #tpu.memory_space<vmem>>, vector<256x128xf32>,
    %c0_49 = arith.constant 0 : index
    %c0_50 = arith.constant 0 : index
    %72 = vector.load %arg11[%c0_49, %c0_50] : memref<256x1152xf32, #tpu.memory_space<vmem>>, vector<256x1152xf32>
    %c0_51 = arith.constant 0 : index
    %c0_52 = arith.constant 0 : index
    %73 = vector.load %arg5[%c0_51, %c0_52] : memref<1152x128xf32, #tpu.memory_space<vmem>>, vector<1152x128xf32>
    %cst_53 = arith.constant dense<0.000000e+00> : vector<256x128xf32>
    %74 = tpu.matmul %72, %73, %cst_53 {dimension_numbers = #tpu.dot_dimension_numbers<[1], [0], [0], [1], [0, 0, 1, 1], [], []>} : vector<256x1152xf32>, vector<1152x128xf32>, vector<256x128xf32> -> vector<256x128xf32>
    %c0_54 = arith.constant 0 : index
    %c0_55 = arith.constant 0 : index
    %75 = vector.load %arg6[%c0_54, %c0_55] : memref<1x128xf32, #tpu.memory_space<vmem>>, vector<1x128xf32>
    %76 = vector.broadcast %75 : vector<1x128xf32> to vector<256x128xf32>
    %77 = arith.mulf %74, %76 : vector<256x128xf32>
    %c0_56 = arith.constant 0 : index
    %c0_57 = arith.constant 0 : index
    %78 = vector.load %arg7[%c0_56, %c0_57] : memref<1x128xf32, #tpu.memory_space<vmem>>, vector<1x128xf32>
    %79 = vector.broadcast %78 : vector<1x128xf32> to vector<256x128xf32>
    %80 = arith.addf %77, %79 : vector<256x128xf32>
    %cst_58 = arith.constant 0.000000e+00 : f32
    %81 = vector.broadcast %cst_58 : f32 to vector<256x128xf32>
    %82 = arith.maximumf %80, %81 : vector<256x128xf32>
    %83 = vector.shape_cast %82 : vector<256x128xf32> to vector<16x16x128xf32>
    %c0_59 = arith.constant 0 : index
    %c0_60 = arith.constant 0 : index
    %c0_61 = arith.constant 0 : index
    %c0_62 = arith.constant 0 : index
    %84 = vector.load %arg8[%c0_59, %c0_60, %c0_61, %c0_62] : memref<1x16x16x128xf32, #tpu.memory_space<vmem>>, vector<1x16x16x128xf32>
    %85 = vector.shape_cast %84 : vector<1x16x16x128xf32> to vector<16x16x128xf32>
    %86 = vector.shape_cast %83 : vector<16x16x128xf32> to vector<1x16x16x128xf32>
    tpu.vector_store %arg8[%c0_59, %c0_60, %c0_61, %c0_62], %86 {strides = array<i32>} : memref<1x16x16x128xf32, #tpu.memory_space<vmem>>, vector<1x16x16x128xf32>,
    return
  }
  func.func @transform_0(%arg0: i32) -> (i32, i32, i32, i32) {
    %c0_i32 = arith.constant 0 : i32
    %c0_i32_0 = arith.constant 0 : i32
    %c0_i32_1 = arith.constant 0 : i32
    %c0_i32_2 = arith.constant 0 : i32
    return %arg0, %c0_i32, %c0_i32_0, %c0_i32_1 : i32, i32, i32, i32
  }
  func.func @transform_1(%arg0: i32) -> (i32, i32) {
    %c0_i32 = arith.constant 0 : i32
    %c0_i32_0 = arith.constant 0 : i32
    %c0_i32_1 = arith.constant 0 : i32
    return %c0_i32, %c0_i32_0 : i32, i32
  }
  func.func @transform_2(%arg0: i32) -> (i32, i32) {
    %c0_i32 = arith.constant 0 : i32
    %c0_i32_0 = arith.constant 0 : i32
    %c0_i32_1 = arith.constant 0 : i32
    return %c0_i32, %c0_i32_0 : i32, i32
  }
  func.func @transform_3(%arg0: i32) -> (i32, i32) {
    %c0_i32 = arith.constant 0 : i32
    %c0_i32_0 = arith.constant 0 : i32
    %c0_i32_1 = arith.constant 0 : i32
    return %c0_i32, %c0_i32_0 : i32, i32
  }
  func.func @transform_4(%arg0: i32) -> (i32, i32) {
    %c0_i32 = arith.constant 0 : i32
    %c0_i32_0 = arith.constant 0 : i32
    %c0_i32_1 = arith.constant 0 : i32
    return %c0_i32, %c0_i32_0 : i32, i32
  }
  func.func @transform_5(%arg0: i32) -> (i32, i32) {
    %c0_i32 = arith.constant 0 : i32
    %c0_i32_0 = arith.constant 0 : i32
    %c0_i32_1 = arith.constant 0 : i32
    return %c0_i32, %c0_i32_0 : i32, i32
  }
  func.func @transform_6(%arg0: i32) -> (i32, i32) {
    %c0_i32 = arith.constant 0 : i32
    %c0_i32_0 = arith.constant 0 : i32
    %c0_i32_1 = arith.constant 0 : i32
    return %c0_i32, %c0_i32_0 : i32, i32
  }
  func.func @transform_7(%arg0: i32) -> (i32, i32, i32, i32) {
    %c0_i32 = arith.constant 0 : i32
    %c0_i32_0 = arith.constant 0 : i32
    %c0_i32_1 = arith.constant 0 : i32
    %c0_i32_2 = arith.constant 0 : i32
    return %arg0, %c0_i32, %c0_i32_0, %c0_i32_1 : i32, i32, i32, i32
  }
}

</mosaic_0001>

<llo_original>
// kernel: conv_block_forward.1
$region0: #{conv_block_forward.1}
  #allocation0 [shape = 'u32[]', space=smem, size = 0x4, offset = 0x4, fixed_abs, tag = 'smem constant byte address 0x4 - core index']
  #allocation1 [shape = 'u32[72,128]{1,0:T(1,128)}', space=vmem, size = 0x9000, scoped, tag = 'internal scratch']
  #allocation2 [shape = 'f32[18,18,128]{2,1,0:T(8,128)}', space=vmem, size = 0x36000, scoped, tag = 'scratch operand']
  #allocation3 [shape = 'f32[256,1152]{1,0:T(8,128)}', space=vmem, size = 0x120000, scoped, tag = 'scratch operand']
  #allocation4 [shape = 'f32[256,1152]{1,0:T(8,128)}', space=vmem, size = 0x120000, scoped, tag = 'scratch operand']
  %s0 = inlined_call_operand.vmem [shape: f32[2,18,18,128], index: 0, kind: input, shape index: {}]
  %s1 = inlined_call_operand.vmem [shape: f32[1152,128], index: 1, kind: input, shape index: {}]
  %s2 = inlined_call_operand.vmem [shape: f32[1,128], index: 2, kind: input, shape index: {}]
  %s3 = inlined_call_operand.vmem [shape: f32[1,128], index: 3, kind: input, shape index: {}]
  %s4 = inlined_call_operand.vmem [shape: f32[1152,128], index: 4, kind: input, shape index: {}]
  %s5 = inlined_call_operand.vmem [shape: f32[1,128], index: 5, kind: input, shape index: {}]
  %s6 = inlined_call_operand.vmem [shape: f32[1,128], index: 6, kind: input, shape index: {}]
  %s7 = inlined_call_operand.vmem [shape: f32[2,16,16,128], index: 7, kind: output, shape index: {}]
  %s8 = sld [smem:[#allocation0]]
  $region61: #{conv_block_forward.1} parent=0
    _
  %s10 = ssub.s32 1, %s8
  %s11 = scalar_select 0, %s10, %s8
  loop: start=0, step=1, limit=4
  $region2: #{conv_block_forward.1} parent=0 // loop_pre_header
    _
  $region3: #{conv_block_forward.1} parent=0 // loop_header
    %s13 = sphi 0, %s17
    %p14 = scmp.ge.s32.totalorder %s13, 4
    %s23 = sphi 0, %s25
    %s26 = sphi 0, %s23
    %s27 = sphi 0, %s26
    %s43 = sphi 0, %s27
    %s47 = sphi 0, %s47
    %s49 = sphi 0, %s47
    %s50 = sphi 0, %s49
    %s64 = sphi 0, %s50
    %s68 = sphi 0, %s68
    %s70 = sphi 0, %s68
    %s71 = sphi 0, %s70
    %s85 = sphi 0, %s71
    %s89 = sphi 0, %s89
    %s91 = sphi 0, %s89
    %s92 = sphi 0, %s91
    %s106 = sphi 0, %s92
    %s110 = sphi 0, %s110
    %s112 = sphi 0, %s110
    %s113 = sphi 0, %s112
    %s127 = sphi 0, %s113
    %s131 = sphi 0, %s131
    %s133 = sphi 0, %s131
    %s134 = sphi 0, %s133
    %s148 = sphi 0, %s134
    %s152 = sphi 0, %s152
    %s154 = sphi 0, %s152
    %s155 = sphi 0, %s154
    %s169 = sphi 0, %s155
    %s175 = sphi 0, %s177
    %s178 = sphi 0, %s175
    %s179 = sphi 0, %s178
    %s195 = sphi 0, %s179
  $region4: #{conv_block_forward.1} parent=0 // loop_header_branch
    %16 = sbr.rel (%p14) target = $region8
  $region5: #{conv_block_forward.1} parent=0 // loop_body
    %s18 = ssub.s32 %s13, 1
    %s19 = ssub.s32 %s13, 2
    %s20 = sadd.s32 %s13, 1
    %s21 = ssub.s32 %s13, %s20
    %p22 = scmp.eq.s32.totalorder %s21, 0
    %s24 = sadd.s32 %s23, 1
    %s25 = scalar_select %p22, %s23, %s24
    %p28 = pneg %p22
    %p29 = scmp.eq.s32.totalorder %s13, 1
    %p30 = por %p28, %p29
    %p31 = scmp.ne.s32.totalorder %s23, %s26
    %p32 = scmp.eq.s32.totalorder %s13, 0
    %p33 = por %p31, %p32
    %p34 = scmp.ne.s32.totalorder %s23, %s26
    %p35 = scmp.eq.s32.totalorder %s18, 1
    %p36 = por %p34, %p35
    %p37 = scmp.ne.s32.totalorder %s26, %s27
    %p38 = scmp.eq.s32.totalorder %s18, 0
    %p39 = por %p37, %p38
    %p40 = scmp.ne.s32.totalorder %s26, %s27
    %p41 = scmp.eq.s32.totalorder %s19, 1
    %p42 = por %p40, %p41
    %p44 = scmp.ne.s32.totalorder %s27, %s43
    %p45 = scmp.eq.s32.totalorder %s19, 0
    %p46 = por %p44, %p45
    %s48 = sadd.s32 %s47, 1
    %p51 = scmp.eq.s32.totalorder %s13, 1
    %p52 = scmp.ne.s32.totalorder %s47, %s49
    %p53 = scmp.eq.s32.totalorder %s13, 0
    %p54 = por %p52, %p53
    %p55 = scmp.ne.s32.totalorder %s47, %s49
    %p56 = scmp.eq.s32.totalorder %s18, 1
    %p57 = por %p55, %p56
    %p58 = scmp.ne.s32.totalorder %s49, %s50
    %p59 = scmp.eq.s32.totalorder %s18, 0
    %p60 = por %p58, %p59
    %p61 = scmp.ne.s32.totalorder %s49, %s50
    %p62 = scmp.eq.s32.totalorder %s19, 1
    %p63 = por %p61, %p62
    %p65 = scmp.ne.s32.totalorder %s50, %s64
    %p66 = scmp.eq.s32.totalorder %s19, 0
    %p67 = por %p65, %p66
    %s69 = sadd.s32 %s68, 1
    %p72 = scmp.eq.s32.totalorder %s13, 1
    %p73 = scmp.ne.s32.totalorder %s68, %s70
    %p74 = scmp.eq.s32.totalorder %s13, 0
    %p75 = por %p73, %p74
    %p76 = scmp.ne.s32.totalorder %s68, %s70
    %p77 = scmp.eq.s32.totalorder %s18, 1
    %p78 = por %p76, %p77
    %p79 = scmp.ne.s32.totalorder %s70, %s71
    %p80 = scmp.eq.s32.totalorder %s18, 0
    %p81 = por %p79, %p80
    %p82 = scmp.ne.s32.totalorder %s70, %s71
    %p83 = scmp.eq.s32.totalorder %s19, 1
    %p84 = por %p82, %p83
    %p86 = scmp.ne.s32.totalorder %s71, %s85
    %p87 = scmp.eq.s32.totalorder %s19, 0
    %p88 = por %p86, %p87
    %s90 = sadd.s32 %s89, 1
    %p93 = scmp.eq.s32.totalorder %s13, 1
    %p94 = scmp.ne.s32.totalorder %s89, %s91
    %p95 = scmp.eq.s32.totalorder %s13, 0
    %p96 = por %p94, %p95
    %p97 = scmp.ne.s32.totalorder %s89, %s91
    %p98 = scmp.eq.s32.totalorder %s18, 1
    %p99 = por %p97, %p98
    %p100 = scmp.ne.s32.totalorder %s91, %s92
    %p101 = scmp.eq.s32.totalorder %s18, 0
    %p102 = por %p100, %p101
    %p103 = scmp.ne.s32.totalorder %s91, %s92
    %p104 = scmp.eq.s32.totalorder %s19, 1
    %p105 = por %p103, %p104
    %p107 = scmp.ne.s32.totalorder %s92, %s106
    %p108 = scmp.eq.s32.totalorder %s19, 0
    %p109 = por %p107, %p108
    %s111 = sadd.s32 %s110, 1
    %p114 = scmp.eq.s32.totalorder %s13, 1
    %p115 = scmp.ne.s32.totalorder %s110, %s112
    %p116 = scmp.eq.s32.totalorder %s13, 0
    %p117 = por %p115, %p116
    %p118 = scmp.ne.s32.totalorder %s110, %s112
    %p119 = scmp.eq.s32.totalorder %s18, 1
    %p120 = por %p118, %p119
    %p121 = scmp.ne.s32.totalorder %s112, %s113
    %p122 = scmp.eq.s32.totalorder %s18, 0
    %p123 = por %p121, %p122
    %p124 = scmp.ne.s32.totalorder %s112, %s113
    %p125 = scmp.eq.s32.totalorder %s19, 1
    %p126 = por %p124, %p125
    %p128 = scmp.ne.s32.totalorder %s113, %s127
    %p129 = scmp.eq.s32.totalorder %s19, 0
    %p130 = por %p128, %p129
    %s132 = sadd.s32 %s131, 1
    %p135 = scmp.eq.s32.totalorder %s13, 1
    %p136 = scmp.ne.s32.totalorder %s131, %s133
    %p137 = scmp.eq.s32.totalorder %s13, 0
    %p138 = por %p136, %p137
    %p139 = scmp.ne.s32.totalorder %s131, %s133
    %p140 = scmp.eq.s32.totalorder %s18, 1
    %p141 = por %p139, %p140
    %p142 = scmp.ne.s32.totalorder %s133, %s134
    %p143 = scmp.eq.s32.totalorder %s18, 0
    %p144 = por %p142, %p143
    %p145 = scmp.ne.s32.totalorder %s133, %s134
    %p146 = scmp.eq.s32.totalorder %s19, 1
    %p147 = por %p145, %p146
    %p149 = scmp.ne.s32.totalorder %s134, %s148
    %p150 = scmp.eq.s32.totalorder %s19, 0
    %p151 = por %p149, %p150
    %s153 = sadd.s32 %s152, 1
    %p156 = scmp.eq.s32.totalorder %s13, 1
    %p157 = scmp.ne.s32.totalorder %s152, %s154
    %p158 = scmp.eq.s32.totalorder %s13, 0
    %p159 = por %p157, %p158
    %p160 = scmp.ne.s32.totalorder %s152, %s154
    %p161 = scmp.eq.s32.totalorder %s18, 1
    %p162 = por %p160, %p161
    %p163 = scmp.ne.s32.totalorder %s154, %s155
    %p164 = scmp.eq.s32.totalorder %s18, 0
    %p165 = por %p163, %p164
    %p166 = scmp.ne.s32.totalorder %s154, %s155
    %p167 = scmp.eq.s32.totalorder %s19, 1
    %p168 = por %p166, %p167
    %p170 = scmp.ne.s32.totalorder %s155, %s169
    %p171 = scmp.eq.s32.totalorder %s19, 0
    %p172 = por %p170, %p171
    %s173 = ssub.s32 %s13, %s20
    %p174 = scmp.eq.s32.totalorder %s173, 0
    %s176 = sadd.s32 %s175, 1
    %s177 = scalar_select %p174, %s175, %s176
    %p180 = pneg %p174
    %p181 = scmp.eq.s32.totalorder %s13, 1
    %p182 = por %p180, %p181
    %p183 = scmp.ne.s32.totalorder %s175, %s178
    %p184 = scmp.eq.s32.totalorder %s13, 0
    %p185 = por %p183, %p184
    %p186 = scmp.ne.s32.totalorder %s175, %s178
    %p187 = scmp.eq.s32.totalorder %s18, 1
    %p188 = por %p186, %p187
    %p189 = scmp.ne.s32.totalorder %s178, %s179
    %p190 = scmp.eq.s32.totalorder %s18, 0
    %p191 = por %p189, %p190
    %p192 = scmp.ne.s32.totalorder %s178, %s179
    %p193 = scmp.eq.s32.totalorder %s19, 1
    %p194 = por %p192, %p193
    %p196 = scmp.ne.s32.totalorder %s179, %s195
    %p197 = scmp.eq.s32.totalorder %s19, 0
    %p198 = por %p196, %p197
    %p199 = scmp.le.s32.totalorder 1, %s13
    %p200 = scmp.lt.s32.totalorder %s13, 3
    %p201 = pnand %p199, %p200
    %p202 = pneg %p201
    // Predicated region
    $region9: #{conv_block_forward.1} parent=5 // pred_check
      _
    $region10: #{conv_block_forward.1} parent=5 // pred_check_branch
      %204 = sbr.rel (%p201) target = $region12
    $region11: #{conv_block_forward.1} parent=5 // pred_region
      %s205 = ssub.s32 %s13, 1
      // Predicated region
      $region13: #{conv_block_forward.1} parent=11 // pred_check
        %p206 = pneg %p60
      $region14: #{conv_block_forward.1} parent=11 // pred_check_branch
        %208 = sbr.rel (%p206) target = $region16
      $region15: #{conv_block_forward.1} parent=11 // pred_region
        _
      $region16: #{conv_block_forward.1} parent=11 // pred_fallthru
        _
      // Predicated region
      $region17: #{conv_block_forward.1} parent=11 // pred_check
        %p209 = pneg %p81
      $region18: #{conv_block_forward.1} parent=11 // pred_check_branch
        %211 = sbr.rel (%p209) target = $region20
      $region19: #{conv_block_forward.1} parent=11 // pred_region
        _
      $region20: #{conv_block_forward.1} parent=11 // pred_fallthru
        _
      // Predicated region
      $region21: #{conv_block_forward.1} parent=11 // pred_check
        %p212 = pneg %p102
      $region22: #{conv_block_forward.1} parent=11 // pred_check_branch
        %214 = sbr.rel (%p212) target = $region24
      $region23: #{conv_block_forward.1} parent=11 // pred_region
        _
      $region24: #{conv_block_forward.1} parent=11 // pred_fallthru
        _
      // Predicated region
      $region25: #{conv_block_forward.1} parent=11 // pred_check
        %p215 = pneg %p123
      $region26: #{conv_block_forward.1} parent=11 // pred_check_branch
        %217 = sbr.rel (%p215) target = $region28
      $region27: #{conv_block_forward.1} parent=11 // pred_region
        _
      $region28: #{conv_block_forward.1} parent=11 // pred_fallthru
        _
      // Predicated region
      $region29: #{conv_block_forward.1} parent=11 // pred_check
        %p218 = pneg %p144
      $region30: #{conv_block_forward.1} parent=11 // pred_check_branch
        %220 = sbr.rel (%p218) target = $region32
      $region31: #{conv_block_forward.1} parent=11 // pred_region
        _
      $region32: #{conv_block_forward.1} parent=11 // pred_fallthru
        _
      // Predicated region
      $region33: #{conv_block_forward.1} parent=11 // pred_check
        %p221 = pneg %p165
      $region34: #{conv_block_forward.1} parent=11 // pred_check_branch
        %223 = sbr.rel (%p221) target = $region36
      $region35: #{conv_block_forward.1} parent=11 // pred_region
        _
      $region36: #{conv_block_forward.1} parent=11 // pred_fallthru
        _
    $region12: #{conv_block_forward.1} parent=5 // pred_fallthru
      _
    %p224 = scmp.lt.s32.totalorder %s13, 2
    // Predicated region
    $region37: #{conv_block_forward.1} parent=5 // pred_check
      %p225 = pneg %p224
    $region38: #{conv_block_forward.1} parent=5 // pred_check_branch
      %227 = sbr.rel (%p225) target = $region40
    $region39: #{conv_block_forward.1} parent=5 // pred_region
      // Predicated region
      $region41: #{conv_block_forward.1} parent=39 // pred_check
        %p228 = pneg %p33
      $region42: #{conv_block_forward.1} parent=39 // pred_check_branch
        %230 = sbr.rel (%p228) target = $region44
      $region43: #{conv_block_forward.1} parent=39 // pred_region
        %p231 = scmp.lt.s32.totalorder %s13, 1
        %s232 = scalar_select %p231, %s13, 1
        %s233 = smul.addr %s232, 54
        %s234 = smul.addr %s233, 8
        %s235 = scalar_lea.vmem %s0, %s234
      $region44: #{conv_block_forward.1} parent=39 // pred_fallthru
        _
    $region40: #{conv_block_forward.1} parent=5 // pred_fallthru
      _
    %p236 = scmp.le.s32.totalorder 1, %s13
    %p237 = scmp.lt.s32.totalorder %s13, 3
    %p238 = pnand %p236, %p237
    %p239 = pneg %p238
    // Predicated region
    $region45: #{conv_block_forward.1} parent=5 // pred_check
      _
    $region46: #{conv_block_forward.1} parent=5 // pred_check_branch
      %241 = sbr.rel (%p238) target = $region48
    $region47: #{conv_block_forward.1} parent=5 // pred_region
      %s242 = ssub.s32 %s13, 1
      %p243 = scmp.lt.s32.totalorder %s18, 1
      %s244 = scalar_select %p243, %s18, 1
      %s245 = smul.addr %s244, 54
      %s246 = smul.addr %s245, 8
      %s247 = scalar_lea.vmem %s0, %s246
      %p248 = pneg %p39
      %p249 = pneg %p36
      %p250 = pneg %p60
      %p251 = pneg %p57
      %p252 = pneg %p81
      %p253 = pneg %p78
      %p254 = pneg %p102
      %p255 = pneg %p99
      %p256 = pneg %p123
      %p257 = pneg %p120
      %p258 = pneg %p144
      %p259 = pneg %p141
      %p260 = pneg %p165
      %p261 = pneg %p162
      %p262 = pneg %p191
      %p263 = pneg %p188
      %p264 = scmp.lt.s32.totalorder %s18, 1
      %s265 = scalar_select %p264, %s18, 1
      %s266 = smul.addr %s265, 32
      %s267 = smul.addr %s266, 8
      %s268 = scalar_lea.vmem %s7, %s267
      %p269 = scmp.lt.s32.totalorder %s18, 1
      %s270 = scalar_select %p269, %s18, 1
      %s271 = smul.addr %s270, 54
      %s272 = smul.addr %s271, 8
      %s273 = scalar_lea.vmem %s0, %s272
      %p274 = scmp.lt.s32.totalorder %s18, 1
      %s275 = scalar_select %p274, %s18, 1
      %s276 = smul.addr %s275, 32
      %s277 = smul.addr %s276, 8
      %s278 = scalar_lea.vmem %s7, %s277
      %v279 = vld [vmem:[%s273] sm:$0xff]
      %v280 = vld [vmem:[%s273 + $0x8] sm:$0xff]
      %v281 = vld [vmem:[%s273 + $0x10] sm:$0x3]
      %v282 = vld [vmem:[%s273 + $0x18] sm:$0xff]
      %v283 = vld [vmem:[%s273 + $0x20] sm:$0xff]
      %v284 = vld [vmem:[%s273 + $0x28] sm:$0x3]
      %v285 = vld [vmem:[%s273 + $0x30] sm:$0xff]
      %v286 = vld [vmem:[%s273 + $0x38] sm:$0xff]
      %v287 = vld [vmem:[%s273 + $0x40] sm:$0x3]
      %v288 = vld [vmem:[%s273 + $0x48] sm:$0xff]
      %v289 = vld [vmem:[%s273 + $0x50] sm:$0xff]
      %v290 = vld [vmem:[%s273 + $0x58] sm:$0x3]
      %v291 = vld [vmem:[%s273 + $0x60] sm:$0xff]
      %v292 = vld [vmem:[%s273 + $0x68] sm:$0xff]
      %v293 = vld [vmem:[%s273 + $0x70] sm:$0x3]
      %v294 = vld [vmem:[%s273 + $0x78] sm:$0xff]
      %v295 = vld [vmem:[%s273 + $0x80] sm:$0xff]
      %v296 = vld [vmem:[%s273 + $0x88] sm:$0x3]
      %v297 = vld [vmem:[%s273 + $0x90] sm:$0xff]
      %v298 = vld [vmem:[%s273 + $0x98] sm:$0xff]
      %v299 = vld [vmem:[%s273 + $0xa0] sm:$0x3]
      %v300 = vld [vmem:[%s273 + $0xa8] sm:$0xff]
      %v301 = vld [vmem:[%s273 + $0xb0] sm:$0xff]
      %v302 = vld [vmem:[%s273 + $0xb8] sm:$0x3]
      %v303 = vld [vmem:[%s273 + $0xc0] sm:$0xff]
      %v304 = vld [vmem:[%s273 + $0xc8] sm:$0xff]
      %v305 = vld [vmem:[%s273 + $0xd0] sm:$0x3]
      %v306 = vld [vmem:[%s273 + $0xd8] sm:$0xff]
      %v307 = vld [vmem:[%s273 + $0xe0] sm:$0xff]
      %v308 = vld [vmem:[%s273 + $0xe8] sm:$0x3]
      %v309 = vld [vmem:[%s273 + $0xf0] sm:$0xff]
      %v310 = vld [vmem:[%s273 + $0xf8] sm:$0xff]
      %v311 = vld [vmem:[%s273 + $0x100] sm:$0x3]
      %v312 = vld [vmem:[%s273 + $0x108] sm:$0xff]
      %v313 = vld [vmem:[%s273 + $0x110] sm:$0xff]
      %v314 = vld [vmem:[%s273 + $0x118] sm:$0x3]
      %v315 = vld [vmem:[%s273 + $0x120] sm:$0xff]
      %v316 = vld [vmem:[%s273 + $0x128] sm:$0xff]
      %v317 = vld [vmem:[%s273 + $0x130] sm:$0x3]
      %v318 = vld [vmem:[%s273 + $0x138] sm:$0xff]
      %v319 = vld [vmem:[%s273 + $0x140] sm:$0xff]
      %v320 = vld [vmem:[%s273 + $0x148] sm:$0x3]
      %v321 = vld [vmem:[%s273 + $0x150] sm:$0xff]
      %v322 = vld [vmem:[%s273 + $0x158] sm:$0xff]
      %v323 = vld [vmem:[%s273 + $0x160] sm:$0x3]
      %v324 = vld [vmem:[%s273 + $0x168] sm:$0xff]
      %v325 = vld [vmem:[%s273 + $0x170] sm:$0xff]
      %v326 = vld [vmem:[%s273 + $0x178] sm:$0x3]
      %v327 = vld [vmem:[%s273 + $0x180] sm:$0xff]
      %v328 = vld [vmem:[%s273 + $0x188] sm:$0xff]
      %v329 = vld [vmem:[%s273 + $0x190] sm:$0x3]
      %v330 = vld [vmem:[%s273 + $0x198] sm:$0xff]
      %v331 = vld [vmem:[%s273 + $0x1a0] sm:$0xff]
      %v332 = vld [vmem:[%s273 + $0x1a8] sm:$0x3]
      %333 = vst [vmem:[#allocation3] sm:$0xff] %v279
      %334 = vst [vmem:[#allocation3 + $0x48] sm:$0xff] %v280
      %335 = vst [vmem:[#allocation3 + $0x90] sm:$0xff] %v282
      %336 = vst [vmem:[#allocation3 + $0xd8] sm:$0xff] %v283
      %337 = vst [vmem:[#allocation3 + $0x120] sm:$0xff] %v285
      %338 = vst [vmem:[#allocation3 + $0x168] sm:$0xff] %v286
      %339 = vst [vmem:[#allocation3 + $0x1b0] sm:$0xff] %v288
      %340 = vst [vmem:[#allocation3 + $0x1f8] sm:$0xff] %v289
      %341 = vst [vmem:[#allocation3 + $0x240] sm:$0xff] %v291
      %342 = vst [vmem:[#allocation3 + $0x288] sm:$0xff] %v292
      %343 = vst [vmem:[#allocation3 + $0x2d0] sm:$0xff] %v294
      %344 = vst [vmem:[#allocation3 + $0x318] sm:$0xff] %v295
      %345 = vst [vmem:[#allocation3 + $0x360] sm:$0xff] %v297
      %346 = vst [vmem:[#allocation3 + $0x3a8] sm:$0xff] %v298
      %347 = vst [vmem:[#allocation3 + $0x3f0] sm:$0xff] %v300
      %348 = vst [vmem:[#allocation3 + $0x438] sm:$0xff] %v301
      %349 = vst [vmem:[#allocation3 + $0x480] sm:$0xff] %v303
      %350 = vst [vmem:[#allocation3 + $0x4c8] sm:$0xff] %v304
      %351 = vst [vmem:[#allocation3 + $0x510] sm:$0xff] %v306
      %352 = vst [vmem:[#allocation3 + $0x558] sm:$0xff] %v307
      %353 = vst [vmem:[#allocation3 + $0x5a0] sm:$0xff] %v309
      %354 = vst [vmem:[#allocation3 + $0x5e8] sm:$0xff] %v310
      %355 = vst [vmem:[#allocation3 + $0x630] sm:$0xff] %v312
      %356 = vst [vmem:[#allocation3 + $0x678] sm:$0xff] %v313
      %357 = vst [vmem:[#allocation3 + $0x6c0] sm:$0xff] %v315
      %358 = vst [vmem:[#allocation3 + $0x708] sm:$0xff] %v316
      %359 = vst [vmem:[#allocation3 + $0x750] sm:$0xff] %v318
      %360 = vst [vmem:[#allocation3 + $0x798] sm:$0xff] %v319
      %361 = vst [vmem:[#allocation3 + $0x7e0] sm:$0xff] %v321
      %362 = vst [vmem:[#allocation3 + $0x828] sm:$0xff] %v322
      %363 = vst [vmem:[#allocation3 + $0x870] sm:$0xff] %v324
      %364 = vst [vmem:[#allocation3 + $0x8b8] sm:$0xff] %v325
      %vm413 = vcmask 1046528
      %v414 = vrot.slane %v279, 1
      %v415 = vrot.slane %v280, 1
      %v416 = vsel %vm413, %v414, %v415
      %v417 = vrot.slane %v281, 1
      %v418 = vsel %vm413, %v415, %v417
      %v419 = vrot.slane %v282, 1
      %v420 = vrot.slane %v283, 1
      %v421 = vsel %vm413, %v419, %v420
      %v422 = vrot.slane %v284, 1
      %v423 = vsel %vm413, %v420, %v422
      %v424 = vrot.slane %v285, 1
      %v425 = vrot.slane %v286, 1
      %v426 = vsel %vm413, %v424, %v425
      %v427 = vrot.slane %v287, 1
      %v428 = vsel %vm413, %v425, %v427
      %v429 = vrot.slane %v288, 1
      %v430 = vrot.slane %v289, 1
      %v431 = vsel %vm413, %v429, %v430
      %v432 = vrot.slane %v290, 1
      %v433 = vsel %vm413, %v430, %v432
      %v434 = vrot.slane %v291, 1
      %v435 = vrot.slane %v292, 1
      %v436 = vsel %vm413, %v434, %v435
      %v437 = vrot.slane %v293, 1
      %v438 = vsel %vm413, %v435, %v437
      %v439 = vrot.slane %v294, 1
      %v440 = vrot.slane %v295, 1
      %v441 = vsel %vm413, %v439, %v440
      %v442 = vrot.slane %v296, 1
      %v443 = vsel %vm413, %v440, %v442
      %v444 = vrot.slane %v297, 1
      %v445 = vrot.slane %v298, 1
      %v446 = vsel %vm413, %v444, %v445
      %v447 = vrot.slane %v299, 1
      %v448 = vsel %vm413, %v445, %v447
      %v449 = vrot.slane %v300, 1
      %v450 = vrot.slane %v301, 1
      %v451 = vsel %vm413, %v449, %v450
      %v452 = vrot.slane %v302, 1
      %v453 = vsel %vm413, %v450, %v452
      %v454 = vrot.slane %v303, 1
      %v455 = vrot.slane %v304, 1
      %v456 = vsel %vm413, %v454, %v455
      %v457 = vrot.slane %v305, 1
      %v458 = vsel %vm413, %v455, %v457
      %v459 = vrot.slane %v306, 1
      %v460 = vrot.slane %v307, 1
      %v461 = vsel %vm413, %v459, %v460
      %v462 = vrot.slane %v308, 1
      %v463 = vsel %vm413, %v460, %v462
      %v464 = vrot.slane %v309, 1
      %v465 = vrot.slane %v310, 1
      %v466 = vsel %vm413, %v464, %v465
      %v467 = vrot.slane %v311, 1
      %v468 = vsel %vm413, %v465, %v467
      %v469 = vrot.slane %v312, 1
      %v470 = vrot.slane %v313, 1
      %v471 = vsel %vm413, %v469, %v470
      %v472 = vrot.slane %v314, 1
      %v473 = vsel %vm413, %v470, %v472
      %v474 = vrot.slane %v315, 1
      %v475 = vrot.slane %v316, 1
      %v476 = vsel %vm413, %v474, %v475
      %v477 = vrot.slane %v317, 1
      %v478 = vsel %vm413, %v475, %v477
      %v479 = vrot.slane %v318, 1
      %v480 = vrot.slane %v319, 1
      %v481 = vsel %vm413, %v479, %v480
      %v482 = vrot.slane %v320, 1
      %v483 = vsel %vm413, %v480, %v482
      %v484 = vrot.slane %v321, 1
      %v485 = vrot.slane %v322, 1
      %v486 = vsel %vm413, %v484, %v485
      %v487 = vrot.slane %v323, 1
      %v488 = vsel %vm413, %v485, %v487
      %v489 = vrot.slane %v324, 1
      %v490 = vrot.slane %v325, 1
      %v491 = vsel %vm413, %v489, %v490
      %v492 = vrot.slane %v326, 1
      %v493 = vsel %vm413, %v490, %v492
      %526 = vst [vmem:[#allocation3 + $0x8] sm:$0xff] %v416
      %527 = vst [vmem:[#allocation3 + $0x50] sm:$0xff] %v418
      %528 = vst [vmem:[#allocation3 + $0x98] sm:$0xff] %v421
      %529 = vst [vmem:[#allocation3 + $0xe0] sm:$0xff] %v423
      %530 = vst [vmem:[#allocation3 + $0x128] sm:$0xff] %v426
      %531 = vst [vmem:[#allocation3 + $0x170] sm:$0xff] %v428
      %532 = vst [vmem:[#allocation3 + $0x1b8] sm:$0xff] %v431
      %533 = vst [vmem:[#allocation3 + $0x200] sm:$0xff] %v433
      %534 = vst [vmem:[#allocation3 + $0x248] sm:$0xff] %v436
      %535 = vst [vmem:[#allocation3 + $0x290] sm:$0xff] %v438
      %536 = vst [vmem:[#allocation3 + $0x2d8] sm:$0xff] %v441
      %537 = vst [vmem:[#allocation3 + $0x320] sm:$0xff] %v443
      %538 = vst [vmem:[#allocation3 + $0x368] sm:$0xff] %v446
      %539 = vst [vmem:[#allocation3 + $0x3b0] sm:$0xff] %v448
      %540 = vst [vmem:[#allocation3 + $0x3f8] sm:$0xff] %v451
      %541 = vst [vmem:[#allocation3 + $0x440] sm:$0xff] %v453
      %542 = vst [vmem:[#allocation3 + $0x488] sm:$0xff] %v456
      %543 = vst [vmem:[#allocation3 + $0x4d0] sm:$0xff] %v458
      %544 = vst [vmem:[#allocation3 + $0x518] sm:$0xff] %v461
      %545 = vst [vmem:[#allocation3 + $0x560] sm:$0xff] %v463
      %546 = vst [vmem:[#allocation3 + $0x5a8] sm:$0xff] %v466
      %547 = vst [vmem:[#allocation3 + $0x5f0] sm:$0xff] %v468
      %548 = vst [vmem:[#allocation3 + $0x638] sm:$0xff] %v471
      %549 = vst [vmem:[#allocation3 + $0x680] sm:$0xff] %v473
      %550 = vst [vmem:[#allocation3 + $0x6c8] sm:$0xff] %v476
      %551 = vst [vmem:[#allocation3 + $0x710] sm:$0xff] %v478
      %552 = vst [vmem:[#allocation3 + $0x758] sm:$0xff] %v481
      %553 = vst [vmem:[#allocation3 + $0x7a0] sm:$0xff] %v483
      %554 = vst [vmem:[#allocation3 + $0x7e8] sm:$0xff] %v486
      %555 = vst [vmem:[#allocation3 + $0x830] sm:$0xff] %v488
      %556 = vst [vmem:[#allocation3 + $0x878] sm:$0xff] %v491
      %557 = vst [vmem:[#allocation3 + $0x8c0] sm:$0xff] %v493
      %vm558 = vcmask 1045504
      %v559 = vrot.slane %v279, 2
      %v560 = vrot.slane %v280, 2
      %v561 = vsel %vm558, %v559, %v560
      %v562 = vrot.slane %v281, 2
      %v563 = vsel %vm558, %v560, %v562
      %v564 = vrot.slane %v282, 2
      %v565 = vrot.slane %v283, 2
      %v566 = vsel %vm558, %v564, %v565
      %v567 = vrot.slane %v284, 2
      %v568 = vsel %vm558, %v565, %v567
      %v569 = vrot.slane %v285, 2
      %v570 = vrot.slane %v286, 2
      %v571 = vsel %vm558, %v569, %v570
      %v572 = vrot.slane %v287, 2
      %v573 = vsel %vm558, %v570, %v572
      %v574 = vrot.slane %v288, 2
      %v575 = vrot.slane %v289, 2
      %v576 = vsel %vm558, %v574, %v575
      %v577 = vrot.slane %v290, 2
      %v578 = vsel %vm558, %v575, %v577
      %v579 = vrot.slane %v291, 2
      %v580 = vrot.slane %v292, 2
      %v581 = vsel %vm558, %v579, %v580
      %v582 = vrot.slane %v293, 2
      %v583 = vsel %vm558, %v580, %v582
      %v584 = vrot.slane %v294, 2
      %v585 = vrot.slane %v295, 2
      %v586 = vsel %vm558, %v584, %v585
      %v587 = vrot.slane %v296, 2
      %v588 = vsel %vm558, %v585, %v587
      %v589 = vrot.slane %v297, 2
      %v590 = vrot.slane %v298, 2
      %v591 = vsel %vm558, %v589, %v590
      %v592 = vrot.slane %v299, 2
      %v593 = vsel %vm558, %v590, %v592
      %v594 = vrot.slane %v300, 2
      %v595 = vrot.slane %v301, 2
      %v596 = vsel %vm558, %v594, %v595
      %v597 = vrot.slane %v302, 2
      %v598 = vsel %vm558, %v595, %v597
      %v599 = vrot.slane %v303, 2
      %v600 = vrot.slane %v304, 2
      %v601 = vsel %vm558, %v599, %v600
      %v602 = vrot.slane %v305, 2
      %v603 = vsel %vm558, %v600, %v602
      %v604 = vrot.slane %v306, 2
      %v605 = vrot.slane %v307, 2
      %v606 = vsel %vm558, %v604, %v605
      %v607 = vrot.slane %v308, 2
      %v608 = vsel %vm558, %v605, %v607
      %v609 = vrot.slane %v309, 2
      %v610 = vrot.slane %v310, 2
      %v611 = vsel %vm558, %v609, %v610
      %v612 = vrot.slane %v311, 2
      %v613 = vsel %vm558, %v610, %v612
      %v614 = vrot.slane %v312, 2
      %v615 = vrot.slane %v313, 2
      %v616 = vsel %vm558, %v614, %v615
      %v617 = vrot.slane %v314, 2
      %v618 = vsel %vm558, %v615, %v617
      %v619 = vrot.slane %v315, 2
      %v620 = vrot.slane %v316, 2
      %v621 = vsel %vm558, %v619, %v620
      %v622 = vrot.slane %v317, 2
      %v623 = vsel %vm558, %v620, %v622
      %v624 = vrot.slane %v318, 2
      %v625 = vrot.slane %v319, 2
      %v626 = vsel %vm558, %v624, %v625
      %v627 = vrot.slane %v320, 2
      %v628 = vsel %vm558, %v625, %v627
      %v629 = vrot.slane %v321, 2
      %v630 = vrot.slane %v322, 2
      %v631 = vsel %vm558, %v629, %v630
      %v632 = vrot.slane %v323, 2
      %v633 = vsel %vm558, %v630, %v632
      %v634 = vrot.slane %v324, 2
      %v635 = vrot.slane %v325, 2
      %v636 = vsel %vm558, %v634, %v635
      %v637 = vrot.slane %v326, 2
      %v638 = vsel %vm558, %v635, %v637
      %671 = vst [vmem:[#allocation3 + $0x10] sm:$0xff] %v561
      %672 = vst [vmem:[#allocation3 + $0x58] sm:$0xff] %v563
      %673 = vst [vmem:[#allocation3 + $0xa0] sm:$0xff] %v566
      %674 = vst [vmem:[#allocation3 + $0xe8] sm:$0xff] %v568
      %675 = vst [vmem:[#allocation3 + $0x130] sm:$0xff] %v571
      %676 = vst [vmem:[#allocation3 + $0x178] sm:$0xff] %v573
      %677 = vst [vmem:[#allocation3 + $0x1c0] sm:$0xff] %v576
      %678 = vst [vmem:[#allocation3 + $0x208] sm:$0xff] %v578
      %679 = vst [vmem:[#allocation3 + $0x250] sm:$0xff] %v581
      %680 = vst [vmem:[#allocation3 + $0x298] sm:$0xff] %v583
      %681 = vst [vmem:[#allocation3 + $0x2e0] sm:$0xff] %v586
      %682 = vst [vmem:[#allocation3 + $0x328] sm:$0xff] %v588
      %683 = vst [vmem:[#allocation3 + $0x370] sm:$0xff] %v591
      %684 = vst [vmem:[#allocation3 + $0x3b8] sm:$0xff] %v593
      %685 = vst [vmem:[#allocation3 + $0x400] sm:$0xff] %v596
      %686 = vst [vmem:[#allocation3 + $0x448] sm:$0xff] %v598
      %687 = vst [vmem:[#allocation3 + $0x490] sm:$0xff] %v601
      %688 = vst [vmem:[#allocation3 + $0x4d8] sm:$0xff] %v603
      %689 = vst [vmem:[#allocation3 + $0x520] sm:$0xff] %v606
      %690 = vst [vmem:[#allocation3 + $0x568] sm:$0xff] %v608
      %691 = vst [vmem:[#allocation3 + $0x5b0] sm:$0xff] %v611
      %692 = vst [vmem:[#allocation3 + $0x5f8] sm:$0xff] %v613
      %693 = vst [vmem:[#allocation3 + $0x640] sm:$0xff] %v616
      %694 = vst [vmem:[#allocation3 + $0x688] sm:$0xff] %v618
      %695 = vst [vmem:[#allocation3 + $0x6d0] sm:$0xff] %v621
      %696 = vst [vmem:[#allocation3 + $0x718] sm:$0xff] %v623
      %697 = vst [vmem:[#allocation3 + $0x760] sm:$0xff] %v626
      %698 = vst [vmem:[#allocation3 + $0x7a8] sm:$0xff] %v628
      %699 = vst [vmem:[#allocation3 + $0x7f0] sm:$0xff] %v631
      %700 = vst [vmem:[#allocation3 + $0x838] sm:$0xff] %v633
      %701 = vst [vmem:[#allocation3 + $0x880] sm:$0xff] %v636
      %702 = vst [vmem:[#allocation3 + $0x8c8] sm:$0xff] %v638
      %703 = vst [vmem:[#allocation3 + $0x18] sm:$0xff] %v282
      %704 = vst [vmem:[#allocation3 + $0x60] sm:$0xff] %v283
      %705 = vst [vmem:[#allocation3 + $0xa8] sm:$0xff] %v285
      %706 = vst [vmem:[#allocation3 + $0xf0] sm:$0xff] %v286
      %707 = vst [vmem:[#allocation3 + $0x138] sm:$0xff] %v288
      %708 = vst [vmem:[#allocation3 + $0x180] sm:$0xff] %v289
      %709 = vst [vmem:[#allocation3 + $0x1c8] sm:$0xff] %v291
      %710 = vst [vmem:[#allocation3 + $0x210] sm:$0xff] %v292
      %711 = vst [vmem:[#allocation3 + $0x258] sm:$0xff] %v294
      %712 = vst [vmem:[#allocation3 + $0x2a0] sm:$0xff] %v295
      %713 = vst [vmem:[#allocation3 + $0x2e8] sm:$0xff] %v297
      %714 = vst [vmem:[#allocation3 + $0x330] sm:$0xff] %v298
      %715 = vst [vmem:[#allocation3 + $0x378] sm:$0xff] %v300
      %716 = vst [vmem:[#allocation3 + $0x3c0] sm:$0xff] %v301
      %717 = vst [vmem:[#allocation3 + $0x408] sm:$0xff] %v303
      %718 = vst [vmem:[#allocation3 + $0x450] sm:$0xff] %v304
      %719 = vst [vmem:[#allocation3 + $0x498] sm:$0xff] %v306
      %720 = vst [vmem:[#allocation3 + $0x4e0] sm:$0xff] %v307
      %721 = vst [vmem:[#allocation3 + $0x528] sm:$0xff] %v309
      %722 = vst [vmem:[#allocation3 + $0x570] sm:$0xff] %v310
      %723 = vst [vmem:[#allocation3 + $0x5b8] sm:$0xff] %v312
      %724 = vst [vmem:[#allocation3 + $0x600] sm:$0xff] %v313
      %725 = vst [vmem:[#allocation3 + $0x648] sm:$0xff] %v315
      %726 = vst [vmem:[#allocation3 + $0x690] sm:$0xff] %v316
      %727 = vst [vmem:[#allocation3 + $0x6d8] sm:$0xff] %v318
      %728 = vst [vmem:[#allocation3 + $0x720] sm:$0xff] %v319
      %729 = vst [vmem:[#allocation3 + $0x768] sm:$0xff] %v321
      %730 = vst [vmem:[#allocation3 + $0x7b0] sm:$0xff] %v322
      %731 = vst [vmem:[#allocation3 + $0x7f8] sm:$0xff] %v324
      %732 = vst [vmem:[#allocation3 + $0x840] sm:$0xff] %v325
      %733 = vst [vmem:[#allocation3 + $0x888] sm:$0xff] %v327
      %734 = vst [vmem:[#allocation3 + $0x8d0] sm:$0xff] %v328
      %v738 = vrot.slane %v327, 1
      %v739 = vrot.slane %v328, 1
      %v740 = vsel %vm413, %v738, %v739
      %v741 = vrot.slane %v329, 1
      %v742 = vsel %vm413, %v739, %v741
      %745 = vst [vmem:[#allocation3 + $0x20] sm:$0xff] %v421
      %746 = vst [vmem:[#allocation3 + $0x68] sm:$0xff] %v423
      %747 = vst [vmem:[#allocation3 + $0xb0] sm:$0xff] %v426
      %748 = vst [vmem:[#allocation3 + $0xf8] sm:$0xff] %v428
      %749 = vst [vmem:[#allocation3 + $0x140] sm:$0xff] %v431
      %750 = vst [vmem:[#allocation3 + $0x188] sm:$0xff] %v433
      %751 = vst [vmem:[#allocation3 + $0x1d0] sm:$0xff] %v436
      %752 = vst [vmem:[#allocation3 + $0x218] sm:$0xff] %v438
      %753 = vst [vmem:[#allocation3 + $0x260] sm:$0xff] %v441
      %754 = vst [vmem:[#allocation3 + $0x2a8] sm:$0xff] %v443
      %755 = vst [vmem:[#allocation3 + $0x2f0] sm:$0xff] %v446
      %756 = vst [vmem:[#allocation3 + $0x338] sm:$0xff] %v448
      %757 = vst [vmem:[#allocation3 + $0x380] sm:$0xff] %v451
      %758 = vst [vmem:[#allocation3 + $0x3c8] sm:$0xff] %v453
      %759 = vst [vmem:[#allocation3 + $0x410] sm:$0xff] %v456
      %760 = vst [vmem:[#allocation3 + $0x458] sm:$0xff] %v458
      %761 = vst [vmem:[#allocation3 + $0x4a0] sm:$0xff] %v461
      %762 = vst [vmem:[#allocation3 + $0x4e8] sm:$0xff] %v463
      %763 = vst [vmem:[#allocation3 + $0x530] sm:$0xff] %v466
      %764 = vst [vmem:[#allocation3 + $0x578] sm:$0xff] %v468
      %765 = vst [vmem:[#allocation3 + $0x5c0] sm:$0xff] %v471
      %766 = vst [vmem:[#allocation3 + $0x608] sm:$0xff] %v473
      %767 = vst [vmem:[#allocation3 + $0x650] sm:$0xff] %v476
      %768 = vst [vmem:[#allocation3 + $0x698] sm:$0xff] %v478
      %769 = vst [vmem:[#allocation3 + $0x6e0] sm:$0xff] %v481
      %770 = vst [vmem:[#allocation3 + $0x728] sm:$0xff] %v483
      %771 = vst [vmem:[#allocation3 + $0x770] sm:$0xff] %v486
      %772 = vst [vmem:[#allocation3 + $0x7b8] sm:$0xff] %v488
      %773 = vst [vmem:[#allocation3 + $0x800] sm:$0xff] %v491
      %774 = vst [vmem:[#allocation3 + $0x848] sm:$0xff] %v493
      %775 = vst [vmem:[#allocation3 + $0x890] sm:$0xff] %v740
      %776 = vst [vmem:[#allocation3 + $0x8d8] sm:$0xff] %v742
      %v777 = vrot.slane %v327, 2
      %v778 = vrot.slane %v328, 2
      %v779 = vsel %vm558, %v777, %v778
      %v780 = vrot.slane %v329, 2
      %v781 = vsel %vm558, %v778, %v780
      %784 = vst [vmem:[#allocation3 + $0x28] sm:$0xff] %v566
      %785 = vst [vmem:[#allocation3 + $0x70] sm:$0xff] %v568
      %786 = vst [vmem:[#allocation3 + $0xb8] sm:$0xff] %v571
      %787 = vst [vmem:[#allocation3 + $0x100] sm:$0xff] %v573
      %788 = vst [vmem:[#allocation3 + $0x148] sm:$0xff] %v576
      %789 = vst [vmem:[#allocation3 + $0x190] sm:$0xff] %v578
      %790 = vst [vmem:[#allocation3 + $0x1d8] sm:$0xff] %v581
      %791 = vst [vmem:[#allocation3 + $0x220] sm:$0xff] %v583
      %792 = vst [vmem:[#allocation3 + $0x268] sm:$0xff] %v586
      %793 = vst [vmem:[#allocation3 + $0x2b0] sm:$0xff] %v588
      %794 = vst [vmem:[#allocation3 + $0x2f8] sm:$0xff] %v591
      %795 = vst [vmem:[#allocation3 + $0x340] sm:$0xff] %v593
      %796 = vst [vmem:[#allocation3 + $0x388] sm:$0xff] %v596
      %797 = vst [vmem:[#allocation3 + $0x3d0] sm:$0xff] %v598
      %798 = vst [vmem:[#allocation3 + $0x418] sm:$0xff] %v601
      %799 = vst [vmem:[#allocation3 + $0x460] sm:$0xff] %v603
      %800 = vst [vmem:[#allocation3 + $0x4a8] sm:$0xff] %v606
      %801 = vst [vmem:[#allocation3 + $0x4f0] sm:$0xff] %v608
      %802 = vst [vmem:[#allocation3 + $0x538] sm:$0xff] %v611
      %803 = vst [vmem:[#allocation3 + $0x580] sm:$0xff] %v613
      %804 = vst [vmem:[#allocation3 + $0x5c8] sm:$0xff] %v616
      %805 = vst [vmem:[#allocation3 + $0x610] sm:$0xff] %v618
      %806 = vst [vmem:[#allocation3 + $0x658] sm:$0xff] %v621
      %807 = vst [vmem:[#allocation3 + $0x6a0] sm:$0xff] %v623
      %808 = vst [vmem:[#allocation3 + $0x6e8] sm:$0xff] %v626
      %809 = vst [vmem:[#allocation3 + $0x730] sm:$0xff] %v628
      %810 = vst [vmem:[#allocation3 + $0x778] sm:$0xff] %v631
      %811 = vst [vmem:[#allocation3 + $0x7c0] sm:$0xff] %v633
      %812 = vst [vmem:[#allocation3 + $0x808] sm:$0xff] %v636
      %813 = vst [vmem:[#allocation3 + $0x850] sm:$0xff] %v638
      %814 = vst [vmem:[#allocation3 + $0x898] sm:$0xff] %v779
      %815 = vst [vmem:[#allocation3 + $0x8e0] sm:$0xff] %v781
      %816 = vst [vmem:[#allocation3 + $0x30] sm:$0xff] %v285
      %817 = vst [vmem:[#allocation3 + $0x78] sm:$0xff] %v286
      %818 = vst [vmem:[#allocation3 + $0xc0] sm:$0xff] %v288
      %819 = vst [vmem:[#allocation3 + $0x108] sm:$0xff] %v289
      %820 = vst [vmem:[#allocation3 + $0x150] sm:$0xff] %v291
      %821 = vst [vmem:[#allocation3 + $0x198] sm:$0xff] %v292
      %822 = vst [vmem:[#allocation3 + $0x1e0] sm:$0xff] %v294
      %823 = vst [vmem:[#allocation3 + $0x228] sm:$0xff] %v295
      %824 = vst [vmem:[#allocation3 + $0x270] sm:$0xff] %v297
      %825 = vst [vmem:[#allocation3 + $0x2b8] sm:$0xff] %v298
      %826 = vst [vmem:[#allocation3 + $0x300] sm:$0xff] %v300
      %827 = vst [vmem:[#allocation3 + $0x348] sm:$0xff] %v301
      %828 = vst [vmem:[#allocation3 + $0x390] sm:$0xff] %v303
      %829 = vst [vmem:[#allocation3 + $0x3d8] sm:$0xff] %v304
      %830 = vst [vmem:[#allocation3 + $0x420] sm:$0xff] %v306
      %831 = vst [vmem:[#allocation3 + $0x468] sm:$0xff] %v307
      %832 = vst [vmem:[#allocation3 + $0x4b0] sm:$0xff] %v309
      %833 = vst [vmem:[#allocation3 + $0x4f8] sm:$0xff] %v310
      %834 = vst [vmem:[#allocation3 + $0x540] sm:$0xff] %v312
      %835 = vst [vmem:[#allocation3 + $0x588] sm:$0xff] %v313
      %836 = vst [vmem:[#allocation3 + $0x5d0] sm:$0xff] %v315
      %837 = vst [vmem:[#allocation3 + $0x618] sm:$0xff] %v316
      %838 = vst [vmem:[#allocation3 + $0x660] sm:$0xff] %v318
      %839 = vst [vmem:[#allocation3 + $0x6a8] sm:$0xff] %v319
      %840 = vst [vmem:[#allocation3 + $0x6f0] sm:$0xff] %v321
      %841 = vst [vmem:[#allocation3 + $0x738] sm:$0xff] %v322
      %842 = vst [vmem:[#allocation3 + $0x780] sm:$0xff] %v324
      %843 = vst [vmem:[#allocation3 + $0x7c8] sm:$0xff] %v325
      %844 = vst [vmem:[#allocation3 + $0x810] sm:$0xff] %v327
      %845 = vst [vmem:[#allocation3 + $0x858] sm:$0xff] %v328
      %846 = vst [vmem:[#allocation3 + $0x8a0] sm:$0xff] %v330
      %847 = vst [vmem:[#allocation3 + $0x8e8] sm:$0xff] %v331
      %v851 = vrot.slane %v330, 1
      %v852 = vrot.slane %v331, 1
      %v853 = vsel %vm413, %v851, %v852
      %v854 = vrot.slane %v332, 1
      %v855 = vsel %vm413, %v852, %v854
      %858 = vst [vmem:[#allocation3 + $0x38] sm:$0xff] %v426
      %859 = vst [vmem:[#allocation3 + $0x80] sm:$0xff] %v428
      %860 = vst [vmem:[#allocation3 + $0xc8] sm:$0xff] %v431
      %861 = vst [vmem:[#allocation3 + $0x110] sm:$0xff] %v433
      %862 = vst [vmem:[#allocation3 + $0x158] sm:$0xff] %v436
      %863 = vst [vmem:[#allocation3 + $0x1a0] sm:$0xff] %v438
      %864 = vst [vmem:[#allocation3 + $0x1e8] sm:$0xff] %v441
      %865 = vst [vmem:[#allocation3 + $0x230] sm:$0xff] %v443
      %866 = vst [vmem:[#allocation3 + $0x278] sm:$0xff] %v446
      %867 = vst [vmem:[#allocation3 + $0x2c0] sm:$0xff] %v448
      %868 = vst [vmem:[#allocation3 + $0x308] sm:$0xff] %v451
      %869 = vst [vmem:[#allocation3 + $0x350] sm:$0xff] %v453
      %870 = vst [vmem:[#allocation3 + $0x398] sm:$0xff] %v456
      %871 = vst [vmem:[#allocation3 + $0x3e0] sm:$0xff] %v458
      %872 = vst [vmem:[#allocation3 + $0x428] sm:$0xff] %v461
      %873 = vst [vmem:[#allocation3 + $0x470] sm:$0xff] %v463
      %874 = vst [vmem:[#allocation3 + $0x4b8] sm:$0xff] %v466
      %875 = vst [vmem:[#allocation3 + $0x500] sm:$0xff] %v468
      %876 = vst [vmem:[#allocation3 + $0x548] sm:$0xff] %v471
      %877 = vst [vmem:[#allocation3 + $0x590] sm:$0xff] %v473
      %878 = vst [vmem:[#allocation3 + $0x5d8] sm:$0xff] %v476
      %879 = vst [vmem:[#allocation3 + $0x620] sm:$0xff] %v478
      %880 = vst [vmem:[#allocation3 + $0x668] sm:$0xff] %v481
      %881 = vst [vmem:[#allocation3 + $0x6b0] sm:$0xff] %v483
      %882 = vst [vmem:[#allocation3 + $0x6f8] sm:$0xff] %v486
      %883 = vst [vmem:[#allocation3 + $0x740] sm:$0xff] %v488
      %884 = vst [vmem:[#allocation3 + $0x788] sm:$0xff] %v491
      %885 = vst [vmem:[#allocation3 + $0x7d0] sm:$0xff] %v493
      %886 = vst [vmem:[#allocation3 + $0x818] sm:$0xff] %v740
      %887 = vst [vmem:[#allocation3 + $0x860] sm:$0xff] %v742
      %888 = vst [vmem:[#allocation3 + $0x8a8] sm:$0xff] %v853
      %889 = vst [vmem:[#allocation3 + $0x8f0] sm:$0xff] %v855
      %v890 = vrot.slane %v330, 2
      %v891 = vrot.slane %v331, 2
      %v892 = vsel %vm558, %v890, %v891
      %v893 = vrot.slane %v332, 2
      %v894 = vsel %vm558, %v891, %v893
      %897 = vst [vmem:[#allocation3 + $0x40] sm:$0xff] %v571
      %898 = vst [vmem:[#allocation3 + $0x88] sm:$0xff] %v573
      %899 = vst [vmem:[#allocation3 + $0xd0] sm:$0xff] %v576
      %900 = vst [vmem:[#allocation3 + $0x118] sm:$0xff] %v578
      %901 = vst [vmem:[#allocation3 + $0x160] sm:$0xff] %v581
      %902 = vst [vmem:[#allocation3 + $0x1a8] sm:$0xff] %v583
      %903 = vst [vmem:[#allocation3 + $0x1f0] sm:$0xff] %v586
      %904 = vst [vmem:[#allocation3 + $0x238] sm:$0xff] %v588
      %905 = vst [vmem:[#allocation3 + $0x280] sm:$0xff] %v591
      %906 = vst [vmem:[#allocation3 + $0x2c8] sm:$0xff] %v593
      %907 = vst [vmem:[#allocation3 + $0x310] sm:$0xff] %v596
      %908 = vst [vmem:[#allocation3 + $0x358] sm:$0xff] %v598
      %909 = vst [vmem:[#allocation3 + $0x3a0] sm:$0xff] %v601
      %910 = vst [vmem:[#allocation3 + $0x3e8] sm:$0xff] %v603
      %911 = vst [vmem:[#allocation3 + $0x430] sm:$0xff] %v606
      %912 = vst [vmem:[#allocation3 + $0x478] sm:$0xff] %v608
      %913 = vst [vmem:[#allocation3 + $0x4c0] sm:$0xff] %v611
      %914 = vst [vmem:[#allocation3 + $0x508] sm:$0xff] %v613
      %915 = vst [vmem:[#allocation3 + $0x550] sm:$0xff] %v616
      %916 = vst [vmem:[#allocation3 + $0x598] sm:$0xff] %v618
      %917 = vst [vmem:[#allocation3 + $0x5e0] sm:$0xff] %v621
      %918 = vst [vmem:[#allocation3 + $0x628] sm:$0xff] %v623
      %919 = vst [vmem:[#allocation3 + $0x670] sm:$0xff] %v626
      %920 = vst [vmem:[#allocation3 + $0x6b8] sm:$0xff] %v628
      %921 = vst [vmem:[#allocation3 + $0x700] sm:$0xff] %v631
      %922 = vst [vmem:[#allocation3 + $0x748] sm:$0xff] %v633
      %923 = vst [vmem:[#allocation3 + $0x790] sm:$0xff] %v636
      %924 = vst [vmem:[#allocation3 + $0x7d8] sm:$0xff] %v638
      %925 = vst [vmem:[#allocation3 + $0x820] sm:$0xff] %v779
      %926 = vst [vmem:[#allocation3 + $0x868] sm:$0xff] %v781
      %927 = vst [vmem:[#allocation3 + $0x8b0] sm:$0xff] %v892
      %928 = vst [vmem:[#allocation3 + $0x8f8] sm:$0xff] %v894
      %v929 = vld [vmem:[#allocation3] sm:$0xff]
      %v930 = vld [vmem:[#allocation3 + $0x8] sm:$0xff]
      %v931 = vld [vmem:[#allocation3 + $0x10] sm:$0xff]
      %v932 = vld [vmem:[#allocation3 + $0x18] sm:$0xff]
      %v933 = vld [vmem:[#allocation3 + $0x20] sm:$0xff]
      %v934 = vld [vmem:[#allocation3 + $0x28] sm:$0xff]
      %v935 = vld [vmem:[#allocation3 + $0x30] sm:$0xff]
      %v936 = vld [vmem:[#allocation3 + $0x38] sm:$0xff]
      %v937 = vld [vmem:[#allocation3 + $0x40] sm:$0xff]
      %v938 = vld [vmem:[#allocation3 + $0x48] sm:$0xff]
      %v939 = vld [vmem:[#allocation3 + $0x50] sm:$0xff]
      %v940 = vld [vmem:[#allocation3 + $0x58] sm:$0xff]
      %v941 = vld [vmem:[#allocation3 + $0x60] sm:$0xff]
      %v942 = vld [vmem:[#allocation3 + $0x68] sm:$0xff]
      %v943 = vld [vmem:[#allocation3 + $0x70] sm:$0xff]
      %v944 = vld [vmem:[#allocation3 + $0x78] sm:$0xff]
      %v945 = vld [vmem:[#allocation3 + $0x80] sm:$0xff]
      %v946 = vld [vmem:[#allocation3 + $0x88] sm:$0xff]
      %v947 = vld [vmem:[#allocation3 + $0x90] sm:$0xff]
      %v948 = vld [vmem:[#allocation3 + $0x98] sm:$0xff]
      %v949 = vld [vmem:[#allocation3 + $0xa0] sm:$0xff]
      %v950 = vld [vmem:[#allocation3 + $0xa8] sm:$0xff]
      %v951 = vld [vmem:[#allocation3 + $0xb0] sm:$0xff]
      %v952 = vld [vmem:[#allocation3 + $0xb8] sm:$0xff]
      %v953 = vld [vmem:[#allocation3 + $0xc0] sm:$0xff]
      %v954 = vld [vmem:[#allocation3 + $0xc8] sm:$0xff]
      %v955 = vld [vmem:[#allocation3 + $0xd0] sm:$0xff]
      %v956 = vld [vmem:[#allocation3 + $0xd8] sm:$0xff]
      %v957 = vld [vmem:[#allocation3 + $0xe0] sm:$0xff]
      %v958 = vld [vmem:[#allocation3 + $0xe8] sm:$0xff]
      %v959 = vld [vmem:[#allocation3 + $0xf0] sm:$0xff]
      %v960 = vld [vmem:[#allocation3 + $0xf8] sm:$0xff]
      %v961 = vld [vmem:[#allocation3 + $0x100] sm:$0xff]
      %v962 = vld [vmem:[#allocation3 + $0x108] sm:$0xff]
      %v963 = vld [vmem:[#allocation3 + $0x110] sm:$0xff]
      %v964 = vld [vmem:[#allocation3 + $0x118] sm:$0xff]
      %v965 = vld [vmem:[#allocation3 + $0x120] sm:$0xff]
      %v966 = vld [vmem:[#allocation3 + $0x128] sm:$0xff]
      %v967 = vld [vmem:[#allocation3 + $0x130] sm:$0xff]
      %v968 = vld [vmem:[#allocation3 + $0x138] sm:$0xff]
      %v969 = vld [vmem:[#allocation3 + $0x140] sm:$0xff]
      %v970 = vld [vmem:[#allocation3 + $0x148] sm:$0xff]
      %v971 = vld [vmem:[#allocation3 + $0x150] sm:$0xff]
      %v972 = vld [vmem:[#allocation3 + $0x158] sm:$0xff]
      %v973 = vld [vmem:[#allocation3 + $0x160] sm:$0xff]
      %v974 = vld [vmem:[#allocation3 + $0x168] sm:$0xff]
      %v975 = vld [vmem:[#allocation3 + $0x170] sm:$0xff]
      %v976 = vld [vmem:[#allocation3 + $0x178] sm:$0xff]
      %v977 = vld [vmem:[#allocation3 + $0x180] sm:$0xff]
      %v978 = vld [vmem:[#allocation3 + $0x188] sm:$0xff]
      %v979 = vld [vmem:[#allocation3 + $0x190] sm:$0xff]
      %v980 = vld [vmem:[#allocation3 + $0x198] sm:$0xff]
      %v981 = vld [vmem:[#allocation3 + $0x1a0] sm:$0xff]
      %v982 = vld [vmem:[#allocation3 + $0x1a8] sm:$0xff]
      %v983 = vld [vmem:[#allocation3 + $0x1b0] sm:$0xff]
      %v984 = vld [vmem:[#allocation3 + $0x1b8] sm:$0xff]
      %v985 = vld [vmem:[#allocation3 + $0x1c0] sm:$0xff]
      %v986 = vld [vmem:[#allocation3 + $0x1c8] sm:$0xff]
      %v987 = vld [vmem:[#allocation3 + $0x1d0] sm:$0xff]
      %v988 = vld [vmem:[#allocation3 + $0x1d8] sm:$0xff]
      %v989 = vld [vmem:[#allocation3 + $0x1e0] sm:$0xff]
      %v990 = vld [vmem:[#allocation3 + $0x1e8] sm:$0xff]
      %v991 = vld [vmem:[#allocation3 + $0x1f0] sm:$0xff]
      %v992 = vld [vmem:[#allocation3 + $0x1f8] sm:$0xff]
      %v993 = vld [vmem:[#allocation3 + $0x200] sm:$0xff]
      %v994 = vld [vmem:[#allocation3 + $0x208] sm:$0xff]
      %v995 = vld [vmem:[#allocation3 + $0x210] sm:$0xff]
      %v996 = vld [vmem:[#allocation3 + $0x218] sm:$0xff]
      %v997 = vld [vmem:[#allocation3 + $0x220] sm:$0xff]
      %v998 = vld [vmem:[#allocation3 + $0x228] sm:$0xff]
      %v999 = vld [vmem:[#allocation3 + $0x230] sm:$0xff]
      %v1000 = vld [vmem:[#allocation3 + $0x238] sm:$0xff]
      %v1001 = vld [vmem:[#allocation3 + $0x240] sm:$0xff]
      %v1002 = vld [vmem:[#allocation3 + $0x248] sm:$0xff]
      %v1003 = vld [vmem:[#allocation3 + $0x250] sm:$0xff]
      %v1004 = vld [vmem:[#allocation3 + $0x258] sm:$0xff]
      %v1005 = vld [vmem:[#allocation3 + $0x260] sm:$0xff]
      %v1006 = vld [vmem:[#allocation3 + $0x268] sm:$0xff]
      %v1007 = vld [vmem:[#allocation3 + $0x270] sm:$0xff]
      %v1008 = vld [vmem:[#allocation3 + $0x278] sm:$0xff]
      %v1009 = vld [vmem:[#allocation3 + $0x280] sm:$0xff]
      %v1010 = vld [vmem:[#allocation3 + $0x288] sm:$0xff]
      %v1011 = vld [vmem:[#allocation3 + $0x290] sm:$0xff]
      %v1012 = vld [vmem:[#allocation3 + $0x298] sm:$0xff]
      %v1013 = vld [vmem:[#allocation3 + $0x2a0] sm:$0xff]
      %v1014 = vld [vmem:[#allocation3 + $0x2a8] sm:$0xff]
      %v1015 = vld [vmem:[#allocation3 + $0x2b0] sm:$0xff]
      %v1016 = vld [vmem:[#allocation3 + $0x2b8] sm:$0xff]
      %v1017 = vld [vmem:[#allocation3 + $0x2c0] sm:$0xff]
      %v1018 = vld [vmem:[#allocation3 + $0x2c8] sm:$0xff]
      %v1019 = vld [vmem:[#allocation3 + $0x2d0] sm:$0xff]
      %v1020 = vld [vmem:[#allocation3 + $0x2d8] sm:$0xff]
      %v1021 = vld [vmem:[#allocation3 + $0x2e0] sm:$0xff]
      %v1022 = vld [vmem:[#allocation3 + $0x2e8] sm:$0xff]
      %v1023 = vld [vmem:[#allocation3 + $0x2f0] sm:$0xff]
      %v1024 = vld [vmem:[#allocation3 + $0x2f8] sm:$0xff]
      %v1025 = vld [vmem:[#allocation3 + $0x300] sm:$0xff]
      %v1026 = vld [vmem:[#allocation3 + $0x308] sm:$0xff]
      %v1027 = vld [vmem:[#allocation3 + $0x310] sm:$0xff]
      %v1028 = vld [vmem:[#allocation3 + $0x318] sm:$0xff]
      %v1029 = vld [vmem:[#allocation3 + $0x320] sm:$0xff]
      %v1030 = vld [vmem:[#allocation3 + $0x328] sm:$0xff]
      %v1031 = vld [vmem:[#allocation3 + $0x330] sm:$0xff]
      %v1032 = vld [vmem:[#allocation3 + $0x338] sm:$0xff]
      %v1033 = vld [vmem:[#allocation3 + $0x340] sm:$0xff]
      %v1034 = vld [vmem:[#allocation3 + $0x348] sm:$0xff]
      %v1035 = vld [vmem:[#allocation3 + $0x350] sm:$0xff]
      %v1036 = vld [vmem:[#allocation3 + $0x358] sm:$0xff]
      %v1037 = vld [vmem:[#allocation3 + $0x360] sm:$0xff]
      %v1038 = vld [vmem:[#allocation3 + $0x368] sm:$0xff]
      %v1039 = vld [vmem:[#allocation3 + $0x370] sm:$0xff]
      %v1040 = vld [vmem:[#allocation3 + $0x378] sm:$0xff]
      %v1041 = vld [vmem:[#allocation3 + $0x380] sm:$0xff]
      %v1042 = vld [vmem:[#allocation3 + $0x388] sm:$0xff]
      %v1043 = vld [vmem:[#allocation3 + $0x390] sm:$0xff]
      %v1044 = vld [vmem:[#allocation3 + $0x398] sm:$0xff]
      %v1045 = vld [vmem:[#allocation3 + $0x3a0] sm:$0xff]
      %v1046 = vld [vmem:[#allocation3 + $0x3a8] sm:$0xff]
      %v1047 = vld [vmem:[#allocation3 + $0x3b0] sm:$0xff]
      %v1048 = vld [vmem:[#allocation3 + $0x3b8] sm:$0xff]
      %v1049 = vld [vmem:[#allocation3 + $0x3c0] sm:$0xff]
      %v1050 = vld [vmem:[#allocation3 + $0x3c8] sm:$0xff]
      %v1051 = vld [vmem:[#allocation3 + $0x3d0] sm:$0xff]
      %v1052 = vld [vmem:[#allocation3 + $0x3d8] sm:$0xff]
      %v1053 = vld [vmem:[#allocation3 + $0x3e0] sm:$0xff]
      %v1054 = vld [vmem:[#allocation3 + $0x3e8] sm:$0xff]
      %v1055 = vld [vmem:[#allocation3 + $0x3f0] sm:$0xff]
      %v1056 = vld [vmem:[#allocation3 + $0x3f8] sm:$0xff]
      %v1057 = vld [vmem:[#allocation3 + $0x400] sm:$0xff]
      %v1058 = vld [vmem:[#allocation3 + $0x408] sm:$0xff]
      %v1059 = vld [vmem:[#allocation3 + $0x410] sm:$0xff]
      %v1060 = vld [vmem:[#allocation3 + $0x418] sm:$0xff]
      %v1061 = vld [vmem:[#allocation3 + $0x420] sm:$0xff]
      %v1062 = vld [vmem:[#allocation3 + $0x428] sm:$0xff]
      %v1063 = vld [vmem:[#allocation3 + $0x430] sm:$0xff]
      %v1064 = vld [vmem:[#allocation3 + $0x438] sm:$0xff]
      %v1065 = vld [vmem:[#allocation3 + $0x440] sm:$0xff]
      %v1066 = vld [vmem:[#allocation3 + $0x448] sm:$0xff]
      %v1067 = vld [vmem:[#allocation3 + $0x450] sm:$0xff]
      %v1068 = vld [vmem:[#allocation3 + $0x458] sm:$0xff]
      %v1069 = vld [vmem:[#allocation3 + $0x460] sm:$0xff]
      %v1070 = vld [vmem:[#allocation3 + $0x468] sm:$0xff]
      %v1071 = vld [vmem:[#allocation3 + $0x470] sm:$0xff]
      %v1072 = vld [vmem:[#allocation3 + $0x478] sm:$0xff]
      %v1073 = vld [vmem:[#allocation3 + $0x480] sm:$0xff]
      %v1074 = vld [vmem:[#allocation3 + $0x488] sm:$0xff]
      %v1075 = vld [vmem:[#allocation3 + $0x490] sm:$0xff]
      %v1076 = vld [vmem:[#allocation3 + $0x498] sm:$0xff]
      %v1077 = vld [vmem:[#allocation3 + $0x4a0] sm:$0xff]
      %v1078 = vld [vmem:[#allocation3 + $0x4a8] sm:$0xff]
      %v1079 = vld [vmem:[#allocation3 + $0x4b0] sm:$0xff]
      %v1080 = vld [vmem:[#allocation3 + $0x4b8] sm:$0xff]
      %v1081 = vld [vmem:[#allocation3 + $0x4c0] sm:$0xff]
      %v1082 = vld [vmem:[#allocation3 + $0x4c8] sm:$0xff]
      %v1083 = vld [vmem:[#allocation3 + $0x4d0] sm:$0xff]
      %v1084 = vld [vmem:[#allocation3 + $0x4d8] sm:$0xff]
      %v1085 = vld [vmem:[#allocation3 + $0x4e0] sm:$0xff]
      %v1086 = vld [vmem:[#allocation3 + $0x4e8] sm:$0xff]
      %v1087 = vld [vmem:[#allocation3 + $0x4f0] sm:$0xff]
      %v1088 = vld [vmem:[#allocation3 + $0x4f8] sm:$0xff]
      %v1089 = vld [vmem:[#allocation3 + $0x500] sm:$0xff]
      %v1090 = vld [vmem:[#allocation3 + $0x508] sm:$0xff]
      %v1091 = vld [vmem:[#allocation3 + $0x510] sm:$0xff]
      %v1092 = vld [vmem:[#allocation3 + $0x518] sm:$0xff]
      %v1093 = vld [vmem:[#allocation3 + $0x520] sm:$0xff]
      %v1094 = vld [vmem:[#allocation3 + $0x528] sm:$0xff]
      %v1095 = vld [vmem:[#allocation3 + $0x530] sm:$0xff]
      %v1096 = vld [vmem:[#allocation3 + $0x538] sm:$0xff]
      %v1097 = vld [vmem:[#allocation3 + $0x540] sm:$0xff]
      %v1098 = vld [vmem:[#allocation3 + $0x548] sm:$0xff]
      %v1099 = vld [vmem:[#allocation3 + $0x550] sm:$0xff]
      %v1100 = vld [vmem:[#allocation3 + $0x558] sm:$0xff]
      %v1101 = vld [vmem:[#allocation3 + $0x560] sm:$0xff]
      %v1102 = vld [vmem:[#allocation3 + $0x568] sm:$0xff]
      %v1103 = vld [vmem:[#allocation3 + $0x570] sm:$0xff]
      %v1104 = vld [vmem:[#allocation3 + $0x578] sm:$0xff]
      %v1105 = vld [vmem:[#allocation3 + $0x580] sm:$0xff]
      %v1106 = vld [vmem:[#allocation3 + $0x588] sm:$0xff]
      %v1107 = vld [vmem:[#allocation3 + $0x590] sm:$0xff]
      %v1108 = vld [vmem:[#allocation3 + $0x598] sm:$0xff]
      %v1109 = vld [vmem:[#allocation3 + $0x5a0] sm:$0xff]
      %v1110 = vld [vmem:[#allocation3 + $0x5a8] sm:$0xff]
      %v1111 = vld [vmem:[#allocation3 + $0x5b0] sm:$0xff]
      %v1112 = vld [vmem:[#allocation3 + $0x5b8] sm:$0xff]
      %v1113 = vld [vmem:[#allocation3 + $0x5c0] sm:$0xff]
      %v1114 = vld [vmem:[#allocation3 + $0x5c8] sm:$0xff]
      %v1115 = vld [vmem:[#allocation3 + $0x5d0] sm:$0xff]
      %v1116 = vld [vmem:[#allocation3 + $0x5d8] sm:$0xff]
      %v1117 = vld [vmem:[#allocation3 + $0x5e0] sm:$0xff]
      %v1118 = vld [vmem:[#allocation3 + $0x5e8] sm:$0xff]
      %v1119 = vld [vmem:[#allocation3 + $0x5f0] sm:$0xff]
      %v1120 = vld [vmem:[#allocation3 + $0x5f8] sm:$0xff]
      %v1121 = vld [vmem:[#allocation3 + $0x600] sm:$0xff]
      %v1122 = vld [vmem:[#allocation3 + $0x608] sm:$0xff]
      %v1123 = vld [vmem:[#allocation3 + $0x610] sm:$0xff]
      %v1124 = vld [vmem:[#allocation3 + $0x618] sm:$0xff]
      %v1125 = vld [vmem:[#allocation3 + $0x620] sm:$0xff]
      %v1126 = vld [vmem:[#allocation3 + $0x628] sm:$0xff]
      %v1127 = vld [vmem:[#allocation3 + $0x630] sm:$0xff]
      %v1128 = vld [vmem:[#allocation3 + $0x638] sm:$0xff]
      %v1129 = vld [vmem:[#allocation3 + $0x640] sm:$0xff]
      %v1130 = vld [vmem:[#allocation3 + $0x648] sm:$0xff]
      %v1131 = vld [vmem:[#allocation3 + $0x650] sm:$0xff]
      %v1132 = vld [vmem:[#allocation3 + $0x658] sm:$0xff]
      %v1133 = vld [vmem:[#allocation3 + $0x660] sm:$0xff]
      %v1134 = vld [vmem:[#allocation3 + $0x668] sm:$0xff]
      %v1135 = vld [vmem:[#allocation3 + $0x670] sm:$0xff]
      %v1136 = vld [vmem:[#allocation3 + $0x678] sm:$0xff]
      %v1137 = vld [vmem:[#allocation3 + $0x680] sm:$0xff]
      %v1138 = vld [vmem:[#allocation3 + $0x688] sm:$0xff]
      %v1139 = vld [vmem:[#allocation3 + $0x690] sm:$0xff]
      %v1140 = vld [vmem:[#allocation3 + $0x698] sm:$0xff]
      %v1141 = vld [vmem:[#allocation3 + $0x6a0] sm:$0xff]
      %v1142 = vld [vmem:[#allocation3 + $0x6a8] sm:$0xff]
      %v1143 = vld [vmem:[#allocation3 + $0x6b0] sm:$0xff]
      %v1144 = vld [vmem:[#allocation3 + $0x6b8] sm:$0xff]
      %v1145 = vld [vmem:[#allocation3 + $0x6c0] sm:$0xff]
      %v1146 = vld [vmem:[#allocation3 + $0x6c8] sm:$0xff]
      %v1147 = vld [vmem:[#allocation3 + $0x6d0] sm:$0xff]
      %v1148 = vld [vmem:[#allocation3 + $0x6d8] sm:$0xff]
      %v1149 = vld [vmem:[#allocation3 + $0x6e0] sm:$0xff]
      %v1150 = vld [vmem:[#allocation3 + $0x6e8] sm:$0xff]
      %v1151 = vld [vmem:[#allocation3 + $0x6f0] sm:$0xff]
      %v1152 = vld [vmem:[#allocation3 + $0x6f8] sm:$0xff]
      %v1153 = vld [vmem:[#allocation3 + $0x700] sm:$0xff]
      %v1154 = vld [vmem:[#allocation3 + $0x708] sm:$0xff]
      %v1155 = vld [vmem:[#allocation3 + $0x710] sm:$0xff]
      %v1156 = vld [vmem:[#allocation3 + $0x718] sm:$0xff]
      %v1157 = vld [vmem:[#allocation3 + $0x720] sm:$0xff]
      %v1158 = vld [vmem:[#allocation3 + $0x728] sm:$0xff]
      %v1159 = vld [vmem:[#allocation3 + $0x730] sm:$0xff]
      %v1160 = vld [vmem:[#allocation3 + $0x738] sm:$0xff]
      %v1161 = vld [vmem:[#allocation3 + $0x740] sm:$0xff]
      %v1162 = vld [vmem:[#allocation3 + $0x748] sm:$0xff]
      %v1163 = vld [vmem:[#allocation3 + $0x750] sm:$0xff]
      %v1164 = vld [vmem:[#allocation3 + $0x758] sm:$0xff]
      %v1165 = vld [vmem:[#allocation3 + $0x760] sm:$0xff]
      %v1166 = vld [vmem:[#allocation3 + $0x768] sm:$0xff]
      %v1167 = vld [vmem:[#allocation3 + $0x770] sm:$0xff]
      %v1168 = vld [vmem:[#allocation3 + $0x778] sm:$0xff]
      %v1169 = vld [vmem:[#allocation3 + $0x780] sm:$0xff]
      %v1170 = vld [vmem:[#allocation3 + $0x788] sm:$0xff]
      %v1171 = vld [vmem:[#allocation3 + $0x790] sm:$0xff]
      %v1172 = vld [vmem:[#allocation3 + $0x798] sm:$0xff]
      %v1173 = vld [vmem:[#allocation3 + $0x7a0] sm:$0xff]
      %v1174 = vld [vmem:[#allocation3 + $0x7a8] sm:$0xff]
      %v1175 = vld [vmem:[#allocation3 + $0x7b0] sm:$0xff]
      %v1176 = vld [vmem:[#allocation3 + $0x7b8] sm:$0xff]
      %v1177 = vld [vmem:[#allocation3 + $0x7c0] sm:$0xff]
      %v1178 = vld [vmem:[#allocation3 + $0x7c8] sm:$0xff]
      %v1179 = vld [vmem:[#allocation3 + $0x7d0] sm:$0xff]
      %v1180 = vld [vmem:[#allocation3 + $0x7d8] sm:$0xff]
      %v1181 = vld [vmem:[#allocation3 + $0x7e0] sm:$0xff]
      %v1182 = vld [vmem:[#allocation3 + $0x7e8] sm:$0xff]
      %v1183 = vld [vmem:[#allocation3 + $0x7f0] sm:$0xff]
      %v1184 = vld [vmem:[#allocation3 + $0x7f8] sm:$0xff]
      %v1185 = vld [vmem:[#allocation3 + $0x800] sm:$0xff]
      %v1186 = vld [vmem:[#allocation3 + $0x808] sm:$0xff]
      %v1187 = vld [vmem:[#allocation3 + $0x810] sm:$0xff]
      %v1188 = vld [vmem:[#allocation3 + $0x818] sm:$0xff]
      %v1189 = vld [vmem:[#allocation3 + $0x820] sm:$0xff]
      %v1190 = vld [vmem:[#allocation3 + $0x828] sm:$0xff]
      %v1191 = vld [vmem:[#allocation3 + $0x830] sm:$0xff]
      %v1192 = vld [vmem:[#allocation3 + $0x838] sm:$0xff]
      %v1193 = vld [vmem:[#allocation3 + $0x840] sm:$0xff]
      %v1194 = vld [vmem:[#allocation3 + $0x848] sm:$0xff]
      %v1195 = vld [vmem:[#allocation3 + $0x850] sm:$0xff]
      %v1196 = vld [vmem:[#allocation3 + $0x858] sm:$0xff]
      %v1197 = vld [vmem:[#allocation3 + $0x860] sm:$0xff]
      %v1198 = vld [vmem:[#allocation3 + $0x868] sm:$0xff]
      %v1199 = vld [vmem:[#allocation3 + $0x870] sm:$0xff]
      %v1200 = vld [vmem:[#allocation3 + $0x878] sm:$0xff]
      %v1201 = vld [vmem:[#allocation3 + $0x880] sm:$0xff]
      %v1202 = vld [vmem:[#allocation3 + $0x888] sm:$0xff]
      %v1203 = vld [vmem:[#allocation3 + $0x890] sm:$0xff]
      %v1204 = vld [vmem:[#allocation3 + $0x898] sm:$0xff]
      %v1205 = vld [vmem:[#allocation3 + $0x8a0] sm:$0xff]
      %v1206 = vld [vmem:[#allocation3 + $0x8a8] sm:$0xff]
      %v1207 = vld [vmem:[#allocation3 + $0x8b0] sm:$0xff]
      %v1208 = vld [vmem:[#allocation3 + $0x8b8] sm:$0xff]
      %v1209 = vld [vmem:[#allocation3 + $0x8c0] sm:$0xff]
      %v1210 = vld [vmem:[#allocation3 + $0x8c8] sm:$0xff]
      %v1211 = vld [vmem:[#allocation3 + $0x8d0] sm:$0xff]
      %v1212 = vld [vmem:[#allocation3 + $0x8d8] sm:$0xff]
      %v1213 = vld [vmem:[#allocation3 + $0x8e0] sm:$0xff]
      %v1214 = vld [vmem:[#allocation3 + $0x8e8] sm:$0xff]
      %v1215 = vld [vmem:[#allocation3 + $0x8f0] sm:$0xff]
      %v1216 = vld [vmem:[#allocation3 + $0x8f8] sm:$0xff]
      %v1217 = vld [vmem:[%s1] sm:$0xff]
      %v1218 = vld [vmem:[%s1 + $0x8] sm:$0xff]
      %v1219 = vld [vmem:[%s1 + $0x10] sm:$0xff]
      %v1220 = vld [vmem:[%s1 + $0x18] sm:$0xff]
      %v1221 = vld [vmem:[%s1 + $0x20] sm:$0xff]
      %v1222 = vld [vmem:[%s1 + $0x28] sm:$0xff]
      %v1223 = vld [vmem:[%s1 + $0x30] sm:$0xff]
      %v1224 = vld [vmem:[%s1 + $0x38] sm:$0xff]
      %v1225 = vld [vmem:[%s1 + $0x40] sm:$0xff]
      %v1226 = vld [vmem:[%s1 + $0x48] sm:$0xff]
      %v1227 = vld [vmem:[%s1 + $0x50] sm:$0xff]
      %v1228 = vld [vmem:[%s1 + $0x58] sm:$0xff]
      %v1229 = vld [vmem:[%s1 + $0x60] sm:$0xff]
      %v1230 = vld [vmem:[%s1 + $0x68] sm:$0xff]
      %v1231 = vld [vmem:[%s1 + $0x70] sm:$0xff]
      %v1232 = vld [vmem:[%s1 + $0x78] sm:$0xff]
      %v1233 = vld [vmem:[%s1 + $0x80] sm:$0xff]
      %v1234 = vld [vmem:[%s1 + $0x88] sm:$0xff]
      %v1235 = vld [vmem:[%s1 + $0x90] sm:$0xff]
      %v1236 = vld [vmem:[%s1 + $0x98] sm:$0xff]
      %v1237 = vld [vmem:[%s1 + $0xa0] sm:$0xff]
      %v1238 = vld [vmem:[%s1 + $0xa8] sm:$0xff]
      %v1239 = vld [vmem:[%s1 + $0xb0] sm:$0xff]
      %v1240 = vld [vmem:[%s1 + $0xb8] sm:$0xff]
      %v1241 = vld [vmem:[%s1 + $0xc0] sm:$0xff]
      %v1242 = vld [vmem:[%s1 + $0xc8] sm:$0xff]
      %v1243 = vld [vmem:[%s1 + $0xd0] sm:$0xff]
      %v1244 = vld [vmem:[%s1 + $0xd8] sm:$0xff]
      %v1245 = vld [vmem:[%s1 + $0xe0] sm:$0xff]
      %v1246 = vld [vmem:[%s1 + $0xe8] sm:$0xff]
      %v1247 = vld [vmem:[%s1 + $0xf0] sm:$0xff]
      %v1248 = vld [vmem:[%s1 + $0xf8] sm:$0xff]
      %v1249 = vld [vmem:[%s1 + $0x100] sm:$0xff]
      %v1250 = vld [vmem:[%s1 + $0x108] sm:$0xff]
      %v1251 = vld [vmem:[%s1 + $0x110] sm:$0xff]
      %v1252 = vld [vmem:[%s1 + $0x118] sm:$0xff]
      %v1253 = vld [vmem:[%s1 + $0x120] sm:$0xff]
      %v1254 = vld [vmem:[%s1 + $0x128] sm:$0xff]
      %v1255 = vld [vmem:[%s1 + $0x130] sm:$0xff]
      %v1256 = vld [vmem:[%s1 + $0x138] sm:$0xff]
      %v1257 = vld [vmem:[%s1 + $0x140] sm:$0xff]
      %v1258 = vld [vmem:[%s1 + $0x148] sm:$0xff]
      %v1259 = vld [vmem:[%s1 + $0x150] sm:$0xff]
      %v1260 = vld [vmem:[%s1 + $0x158] sm:$0xff]
      %v1261 = vld [vmem:[%s1 + $0x160] sm:$0xff]
      %v1262 = vld [vmem:[%s1 + $0x168] sm:$0xff]
      %v1263 = vld [vmem:[%s1 + $0x170] sm:$0xff]
      %v1264 = vld [vmem:[%s1 + $0x178] sm:$0xff]
      %v1265 = vld [vmem:[%s1 + $0x180] sm:$0xff]
      %v1266 = vld [vmem:[%s1 + $0x188] sm:$0xff]
      %v1267 = vld [vmem:[%s1 + $0x190] sm:$0xff]
      %v1268 = vld [vmem:[%s1 + $0x198] sm:$0xff]
      %v1269 = vld [vmem:[%s1 + $0x1a0] sm:$0xff]
      %v1270 = vld [vmem:[%s1 + $0x1a8] sm:$0xff]
      %v1271 = vld [vmem:[%s1 + $0x1b0] sm:$0xff]
      %v1272 = vld [vmem:[%s1 + $0x1b8] sm:$0xff]
      %v1273 = vld [vmem:[%s1 + $0x1c0] sm:$0xff]
      %v1274 = vld [vmem:[%s1 + $0x1c8] sm:$0xff]
      %v1275 = vld [vmem:[%s1 + $0x1d0] sm:$0xff]
      %v1276 = vld [vmem:[%s1 + $0x1d8] sm:$0xff]
      %v1277 = vld [vmem:[%s1 + $0x1e0] sm:$0xff]
      %v1278 = vld [vmem:[%s1 + $0x1e8] sm:$0xff]
      %v1279 = vld [vmem:[%s1 + $0x1f0] sm:$0xff]
      %v1280 = vld [vmem:[%s1 + $0x1f8] sm:$0xff]
      %v1281 = vld [vmem:[%s1 + $0x200] sm:$0xff]
      %v1282 = vld [vmem:[%s1 + $0x208] sm:$0xff]
      %v1283 = vld [vmem:[%s1 + $0x210] sm:$0xff]
      %v1284 = vld [vmem:[%s1 + $0x218] sm:$0xff]
      %v1285 = vld [vmem:[%s1 + $0x220] sm:$0xff]
      %v1286 = vld [vmem:[%s1 + $0x228] sm:$0xff]
      %v1287 = vld [vmem:[%s1 + $0x230] sm:$0xff]
      %v1288 = vld [vmem:[%s1 + $0x238] sm:$0xff]
      %v1289 = vld [vmem:[%s1 + $0x240] sm:$0xff]
      %v1290 = vld [vmem:[%s1 + $0x248] sm:$0xff]
      %v1291 = vld [vmem:[%s1 + $0x250] sm:$0xff]
      %v1292 = vld [vmem:[%s1 + $0x258] sm:$0xff]
      %v1293 = vld [vmem:[%s1 + $0x260] sm:$0xff]
      %v1294 = vld [vmem:[%s1 + $0x268] sm:$0xff]
      %v1295 = vld [vmem:[%s1 + $0x270] sm:$0xff]
      %v1296 = vld [vmem:[%s1 + $0x278] sm:$0xff]
      %v1297 = vld [vmem:[%s1 + $0x280] sm:$0xff]
      %v1298 = vld [vmem:[%s1 + $0x288] sm:$0xff]
      %v1299 = vld [vmem:[%s1 + $0x290] sm:$0xff]
      %v1300 = vld [vmem:[%s1 + $0x298] sm:$0xff]
      %v1301 = vld [vmem:[%s1 + $0x2a0] sm:$0xff]
      %v1302 = vld [vmem:[%s1 + $0x2a8] sm:$0xff]
      %v1303 = vld [vmem:[%s1 + $0x2b0] sm:$0xff]
      %v1304 = vld [vmem:[%s1 + $0x2b8] sm:$0xff]
      %v1305 = vld [vmem:[%s1 + $0x2c0] sm:$0xff]
      %v1306 = vld [vmem:[%s1 + $0x2c8] sm:$0xff]
      %v1307 = vld [vmem:[%s1 + $0x2d0] sm:$0xff]
      %v1308 = vld [vmem:[%s1 + $0x2d8] sm:$0xff]
      %v1309 = vld [vmem:[%s1 + $0x2e0] sm:$0xff]
      %v1310 = vld [vmem:[%s1 + $0x2e8] sm:$0xff]
      %v1311 = vld [vmem:[%s1 + $0x2f0] sm:$0xff]
      %v1312 = vld [vmem:[%s1 + $0x2f8] sm:$0xff]
      %v1313 = vld [vmem:[%s1 + $0x300] sm:$0xff]
      %v1314 = vld [vmem:[%s1 + $0x308] sm:$0xff]
      %v1315 = vld [vmem:[%s1 + $0x310] sm:$0xff]
      %v1316 = vld [vmem:[%s1 + $0x318] sm:$0xff]
      %v1317 = vld [vmem:[%s1 + $0x320] sm:$0xff]
      %v1318 = vld [vmem:[%s1 + $0x328] sm:$0xff]
      %v1319 = vld [vmem:[%s1 + $0x330] sm:$0xff]
      %v1320 = vld [vmem:[%s1 + $0x338] sm:$0xff]
      %v1321 = vld [vmem:[%s1 + $0x340] sm:$0xff]
      %v1322 = vld [vmem:[%s1 + $0x348] sm:$0xff]
      %v1323 = vld [vmem:[%s1 + $0x350] sm:$0xff]
      %v1324 = vld [vmem:[%s1 + $0x358] sm:$0xff]
      %v1325 = vld [vmem:[%s1 + $0x360] sm:$0xff]
      %v1326 = vld [vmem:[%s1 + $0x368] sm:$0xff]
      %v1327 = vld [vmem:[%s1 + $0x370] sm:$0xff]
      %v1328 = vld [vmem:[%s1 + $0x378] sm:$0xff]
      %v1329 = vld [vmem:[%s1 + $0x380] sm:$0xff]
      %v1330 = vld [vmem:[%s1 + $0x388] sm:$0xff]
      %v1331 = vld [vmem:[%s1 + $0x390] sm:$0xff]
      %v1332 = vld [vmem:[%s1 + $0x398] sm:$0xff]
      %v1333 = vld [vmem:[%s1 + $0x3a0] sm:$0xff]
      %v1334 = vld [vmem:[%s1 + $0x3a8] sm:$0xff]
      %v1335 = vld [vmem:[%s1 + $0x3b0] sm:$0xff]
      %v1336 = vld [vmem:[%s1 + $0x3b8] sm:$0xff]
      %v1337 = vld [vmem:[%s1 + $0x3c0] sm:$0xff]
      %v1338 = vld [vmem:[%s1 + $0x3c8] sm:$0xff]
      %v1339 = vld [vmem:[%s1 + $0x3d0] sm:$0xff]
      %v1340 = vld [vmem:[%s1 + $0x3d8] sm:$0xff]
      %v1341 = vld [vmem:[%s1 + $0x3e0] sm:$0xff]
      %v1342 = vld [vmem:[%s1 + $0x3e8] sm:$0xff]
      %v1343 = vld [vmem:[%s1 + $0x3f0] sm:$0xff]
      %v1344 = vld [vmem:[%s1 + $0x3f8] sm:$0xff]
      %v1345 = vld [vmem:[%s1 + $0x400] sm:$0xff]
      %v1346 = vld [vmem:[%s1 + $0x408] sm:$0xff]
      %v1347 = vld [vmem:[%s1 + $0x410] sm:$0xff]
      %v1348 = vld [vmem:[%s1 + $0x418] sm:$0xff]
      %v1349 = vld [vmem:[%s1 + $0x420] sm:$0xff]
      %v1350 = vld [vmem:[%s1 + $0x428] sm:$0xff]
      %v1351 = vld [vmem:[%s1 + $0x430] sm:$0xff]
      %v1352 = vld [vmem:[%s1 + $0x438] sm:$0xff]
      %v1353 = vld [vmem:[%s1 + $0x440] sm:$0xff]
      %v1354 = vld [vmem:[%s1 + $0x448] sm:$0xff]
      %v1355 = vld [vmem:[%s1 + $0x450] sm:$0xff]
      %v1356 = vld [vmem:[%s1 + $0x458] sm:$0xff]
      %v1357 = vld [vmem:[%s1 + $0x460] sm:$0xff]
      %v1358 = vld [vmem:[%s1 + $0x468] sm:$0xff]
      %v1359 = vld [vmem:[%s1 + $0x470] sm:$0xff]
      %v1360 = vld [vmem:[%s1 + $0x478] sm:$0xff]
      %1361 = vmatpush.msra.mxu0 %v1232
      %1362 = vmatpush.msra.mxu0 %v1231
      %1363 = vmatpush.msra.mxu0 %v1230
      %1364 = vmatpush.msra.mxu0 %v1229
      %1365 = vmatpush.msra.mxu0 %v1228
      %1366 = vmatpush.msra.mxu0 %v1227
      %1367 = vmatpush.msra.mxu0 %v1226
      %1368 = vmatpush.msra.mxu0 %v1225
      %1369 = vmatpush.msra.mxu0 %v1224
      %1370 = vmatpush.msra.mxu0 %v1223
      %1371 = vmatpush.msra.mxu0 %v1222
      %1372 = vmatpush.msra.mxu0 %v1221
      %1373 = vmatpush.msra.mxu0 %v1220
      %1374 = vmatpush.msra.mxu0 %v1219
      %1375 = vmatpush.msra.mxu0 %v1218
      %1376 = vmatpush.msra.mxu0 %v1217
      %1377 = vmatmul.f32.gmra.mxu0 %v929
      %v1378 = vpop.f32.mrf.mxu0
      %v1379 = vadd.f32 0.0, %v1378
      %1380 = vmatmul.f32.gmra.mxu0 %v938
      %v1381 = vpop.f32.mrf.mxu0
      %v1382 = vadd.f32 0.0, %v1381
      %1383 = vmatmul.f32.gmra.mxu0 %v947
      %v1384 = vpop.f32.mrf.mxu0
      %v1385 = vadd.f32 0.0, %v1384
      %1386 = vmatmul.f32.gmra.mxu0 %v956
      %v1387 = vpop.f32.mrf.mxu0
      %v1388 = vadd.f32 0.0, %v1387
      %1389 = vmatmul.f32.gmra.mxu0 %v965
      %v1390 = vpop.f32.mrf.mxu0
      %v1391 = vadd.f32 0.0, %v1390
      %1392 = vmatmul.f32.gmra.mxu0 %v974
      %v1393 = vpop.f32.mrf.mxu0
      %v1394 = vadd.f32 0.0, %v1393
      %1395 = vmatmul.f32.gmra.mxu0 %v983
      %v1396 = vpop.f32.mrf.mxu0
      %v1397 = vadd.f32 0.0, %v1396
      %1398 = vmatmul.f32.gmra.mxu0 %v992
      %v1399 = vpop.f32.mrf.mxu0
      %v1400 = vadd.f32 0.0, %v1399
      %1401 = vmatmul.f32.gmra.mxu0 %v1001
      %v1402 = vpop.f32.mrf.mxu0
      %v1403 = vadd.f32 0.0, %v1402
      %1404 = vmatmul.f32.gmra.mxu0 %v1010
      %v1405 = vpop.f32.mrf.mxu0
      %v1406 = vadd.f32 0.0, %v1405
      %1407 = vmatmul.f32.gmra.mxu0 %v1019
      %v1408 = vpop.f32.mrf.mxu0
      %v1409 = vadd.f32 0.0, %v1408
      %1410 = vmatmul.f32.gmra.mxu0 %v1028
      %v1411 = vpop.f32.mrf.mxu0
      %v1412 = vadd.f32 0.0, %v1411
      %1413 = vmatmul.f32.gmra.mxu0 %v1037
      %v1414 = vpop.f32.mrf.mxu0
      %v1415 = vadd.f32 0.0, %v1414
      %1416 = vmatmul.f32.gmra.mxu0 %v1046
      %v1417 = vpop.f32.mrf.mxu0
      %v1418 = vadd.f32 0.0, %v1417
      %1419 = vmatmul.f32.gmra.mxu0 %v1055
      %v1420 = vpop.f32.mrf.mxu0
      %v1421 = vadd.f32 0.0, %v1420
      %1422 = vmatmul.f32.gmra.mxu0 %v1064
      %v1423 = vpop.f32.mrf.mxu0
      %v1424 = vadd.f32 0.0, %v1423
      %1425 = vmatmul.f32.gmra.mxu0 %v1073
      %v1426 = vpop.f32.mrf.mxu0
      %v1427 = vadd.f32 0.0, %v1426
      %1428 = vmatmul.f32.gmra.mxu0 %v1082
      %v1429 = vpop.f32.mrf.mxu0
      %v1430 = vadd.f32 0.0, %v1429
      %1431 = vmatmul.f32.gmra.mxu0 %v1091
      %v1432 = vpop.f32.mrf.mxu0
      %v1433 = vadd.f32 0.0, %v1432
      %1434 = vmatmul.f32.gmra.mxu0 %v1100
      %v1435 = vpop.f32.mrf.mxu0
      %v1436 = vadd.f32 0.0, %v1435
      %1437 = vmatmul.f32.gmra.mxu0 %v1109
      %v1438 = vpop.f32.mrf.mxu0
      %v1439 = vadd.f32 0.0, %v1438
      %1440 = vmatmul.f32.gmra.mxu0 %v1118
      %v1441 = vpop.f32.mrf.mxu0
      %v1442 = vadd.f32 0.0, %v1441
      %1443 = vmatmul.f32.gmra.mxu0 %v1127
      %v1444 = vpop.f32.mrf.mxu0
      %v1445 = vadd.f32 0.0, %v1444
      %1446 = vmatmul.f32.gmra.mxu0 %v1136
      %v1447 = vpop.f32.mrf.mxu0
      %v1448 = vadd.f32 0.0, %v1447
      %1449 = vmatmul.f32.gmra.mxu0 %v1145
      %v1450 = vpop.f32.mrf.mxu0
      %v1451 = vadd.f32 0.0, %v1450
      %1452 = vmatmul.f32.gmra.mxu0 %v1154
      %v1453 = vpop.f32.mrf.mxu0
      %v1454 = vadd.f32 0.0, %v1453
      %1455 = vmatmul.f32.gmra.mxu0 %v1163
      %v1456 = vpop.f32.mrf.mxu0
      %v1457 = vadd.f32 0.0, %v1456
      %1458 = vmatmul.f32.gmra.mxu0 %v1172
      %v1459 = vpop.f32.mrf.mxu0
      %v1460 = vadd.f32 0.0, %v1459
      %1461 = vmatmul.f32.gmra.mxu0 %v1181
      %v1462 = vpop.f32.mrf.mxu0
      %v1463 = vadd.f32 0.0, %v1462
      %1464 = vmatmul.f32.gmra.mxu0 %v1190
      %v1465 = vpop.f32.mrf.mxu0
      %v1466 = vadd.f32 0.0, %v1465
      %1467 = vmatmul.f32.gmra.mxu0 %v1199
      %v1468 = vpop.f32.mrf.mxu0
      %v1469 = vadd.f32 0.0, %v1468
      %1470 = vmatmul.f32.gmra.mxu0 %v1208
      %v1471 = vpop.f32.mrf.mxu0
      %v1472 = vadd.f32 0.0, %v1471
      %1473 = vdwg.mxu0
      %1474 = vmatpush.msra.mxu0 %v1248
      %1475 = vmatpush.msra.mxu0 %v1247
      %1476 = vmatpush.msra.mxu0 %v1246
      %1477 = vmatpush.msra.mxu0 %v1245
      %1478 = vmatpush.msra.mxu0 %v1244
      %1479 = vmatpush.msra.mxu0 %v1243
      %1480 = vmatpush.msra.mxu0 %v1242
      %1481 = vmatpush.msra.mxu0 %v1241
      %1482 = vmatpush.msra.mxu0 %v1240
      %1483 = vmatpush.msra.mxu0 %v1239
      %1484 = vmatpush.msra.mxu0 %v1238
      %1485 = vmatpush.msra.mxu0 %v1237
      %1486 = vmatpush.msra.mxu0 %v1236
      %1487 = vmatpush.msra.mxu0 %v1235
      %1488 = vmatpush.msra.mxu0 %v1234
      %1489 = vmatpush.msra.mxu0 %v1233
      %1490 = vmatmul.f32.gmra.mxu0 %v930
      %v1491 = vpop.f32.mrf.mxu0
      %v1492 = vadd.f32 %v1379, %v1491
      %1493 = vmatmul.f32.gmra.mxu0 %v939
      %v1494 = vpop.f32.mrf.mxu0
      %v1495 = vadd.f32 %v1382, %v1494
      %1496 = vmatmul.f32.gmra.mxu0 %v948
      %v1497 = vpop.f32.mrf.mxu0
      %v1498 = vadd.f32 %v1385, %v1497
      %1499 = vmatmul.f32.gmra.mxu0 %v957
      %v1500 = vpop.f32.mrf.mxu0
      %v1501 = vadd.f32 %v1388, %v1500
      %1502 = vmatmul.f32.gmra.mxu0 %v966
      %v1503 = vpop.f32.mrf.mxu0
      %v1504 = vadd.f32 %v1391, %v1503
      %1505 = vmatmul.f32.gmra.mxu0 %v975
      %v1506 = vpop.f32.mrf.mxu0
      %v1507 = vadd.f32 %v1394, %v1506
      %1508 = vmatmul.f32.gmra.mxu0 %v984
      %v1509 = vpop.f32.mrf.mxu0
      %v1510 = vadd.f32 %v1397, %v1509
      %1511 = vmatmul.f32.gmra.mxu0 %v993
      %v1512 = vpop.f32.mrf.mxu0
      %v1513 = vadd.f32 %v1400, %v1512
      %1514 = vmatmul.f32.gmra.mxu0 %v1002
      %v1515 = vpop.f32.mrf.mxu0
      %v1516 = vadd.f32 %v1403, %v1515
      %1517 = vmatmul.f32.gmra.mxu0 %v1011
      %v1518 = vpop.f32.mrf.mxu0
      %v1519 = vadd.f32 %v1406, %v1518
      %1520 = vmatmul.f32.gmra.mxu0 %v1020
      %v1521 = vpop.f32.mrf.mxu0
      %v1522 = vadd.f32 %v1409, %v1521
      %1523 = vmatmul.f32.gmra.mxu0 %v1029
      %v1524 = vpop.f32.mrf.mxu0
      %v1525 = vadd.f32 %v1412, %v1524
      %1526 = vmatmul.f32.gmra.mxu0 %v1038
      %v1527 = vpop.f32.mrf.mxu0
      %v1528 = vadd.f32 %v1415, %v1527
      %1529 = vmatmul.f32.gmra.mxu0 %v1047
      %v1530 = vpop.f32.mrf.mxu0
      %v1531 = vadd.f32 %v1418, %v1530
      %1532 = vmatmul.f32.gmra.mxu0 %v1056
      %v1533 = vpop.f32.mrf.mxu0
      %v1534 = vadd.f32 %v1421, %v1533
      %1535 = vmatmul.f32.gmra.mxu0 %v1065
      %v1536 = vpop.f32.mrf.mxu0
      %v1537 = vadd.f32 %v1424, %v1536
      %1538 = vmatmul.f32.gmra.mxu0 %v1074
      %v1539 = vpop.f32.mrf.mxu0
      %v1540 = vadd.f32 %v1427, %v1539
      %1541 = vmatmul.f32.gmra.mxu0 %v1083
      %v1542 = vpop.f32.mrf.mxu0
      %v1543 = vadd.f32 %v1430, %v1542
      %1544 = vmatmul.f32.gmra.mxu0 %v1092
      %v1545 = vpop.f32.mrf.mxu0
      %v1546 = vadd.f32 %v1433, %v1545
      %1547 = vmatmul.f32.gmra.mxu0 %v1101
      %v1548 = vpop.f32.mrf.mxu0
      %v1549 = vadd.f32 %v1436, %v1548
      %1550 = vmatmul.f32.gmra.mxu0 %v1110
      %v1551 = vpop.f32.mrf.mxu0
      %v1552 = vadd.f32 %v1439, %v1551
      %1553 = vmatmul.f32.gmra.mxu0 %v1119
      %v1554 = vpop.f32.mrf.mxu0
      %v1555 = vadd.f32 %v1442, %v1554
      %1556 = vmatmul.f32.gmra.mxu0 %v1128
      %v1557 = vpop.f32.mrf.mxu0
      %v1558 = vadd.f32 %v1445, %v1557
      %1559 = vmatmul.f32.gmra.mxu0 %v1137
      %v1560 = vpop.f32.mrf.mxu0
      %v1561 = vadd.f32 %v1448, %v1560
      %1562 = vmatmul.f32.gmra.mxu0 %v1146
      %v1563 = vpop.f32.mrf.mxu0
      %v1564 = vadd.f32 %v1451, %v1563
      %1565 = vmatmul.f32.gmra.mxu0 %v1155
      %v1566 = vpop.f32.mrf.mxu0
      %v1567 = vadd.f32 %v1454, %v1566
      %1568 = vmatmul.f32.gmra.mxu0 %v1164
      %v1569 = vpop.f32.mrf.mxu0
      %v1570 = vadd.f32 %v1457, %v1569
      %1571 = vmatmul.f32.gmra.mxu0 %v1173
      %v1572 = vpop.f32.mrf.mxu0
      %v1573 = vadd.f32 %v1460, %v1572
      %1574 = vmatmul.f32.gmra.mxu0 %v1182
      %v1575 = vpop.f32.mrf.mxu0
      %v1576 = vadd.f32 %v1463, %v1575
      %1577 = vmatmul.f32.gmra.mxu0 %v1191
      %v1578 = vpop.f32.mrf.mxu0
      %v1579 = vadd.f32 %v1466, %v1578
      %1580 = vmatmul.f32.gmra.mxu0 %v1200
      %v1581 = vpop.f32.mrf.mxu0
      %v1582 = vadd.f32 %v1469, %v1581
      %1583 = vmatmul.f32.gmra.mxu0 %v1209
      %v1584 = vpop.f32.mrf.mxu0
      %v1585 = vadd.f32 %v1472, %v1584
      %1586 = vdwg.mxu0
      %1587 = vmatpush.msra.mxu0 %v1264
      %1588 = vmatpush.msra.mxu0 %v1263
      %1589 = vmatpush.msra.mxu0 %v1262
      %1590 = vmatpush.msra.mxu0 %v1261
      %1591 = vmatpush.msra.mxu0 %v1260
      %1592 = vmatpush.msra.mxu0 %v1259
      %1593 = vmatpush.msra.mxu0 %v1258
      %1594 = vmatpush.msra.mxu0 %v1257
      %1595 = vmatpush.msra.mxu0 %v1256
      %1596 = vmatpush.msra.mxu0 %v1255
      %1597 = vmatpush.msra.mxu0 %v1254
      %1598 = vmatpush.msra.mxu0 %v1253
      %1599 = vmatpush.msra.mxu0 %v1252
      %1600 = vmatpush.msra.mxu0 %v1251
      %1601 = vmatpush.msra.mxu0 %v1250
      %1602 = vmatpush.msra.mxu0 %v1249
      %1603 = vmatmul.f32.gmra.mxu0 %v931
      %v1604 = vpop.f32.mrf.mxu0
      %v1605 = vadd.f32 %v1492, %v1604
      %1606 = vmatmul.f32.gmra.mxu0 %v940
      %v1607 = vpop.f32.mrf.mxu0
      %v1608 = vadd.f32 %v1495, %v1607
      %1609 = vmatmul.f32.gmra.mxu0 %v949
      %v1610 = vpop.f32.mrf.mxu0
      %v1611 = vadd.f32 %v1498, %v1610
      %1612 = vmatmul.f32.gmra.mxu0 %v958
      %v1613 = vpop.f32.mrf.mxu0
      %v1614 = vadd.f32 %v1501, %v1613
      %1615 = vmatmul.f32.gmra.mxu0 %v967
      %v1616 = vpop.f32.mrf.mxu0
      %v1617 = vadd.f32 %v1504, %v1616
      %1618 = vmatmul.f32.gmra.mxu0 %v976
      %v1619 = vpop.f32.mrf.mxu0
      %v1620 = vadd.f32 %v1507, %v1619
      %1621 = vmatmul.f32.gmra.mxu0 %v985
      %v1622 = vpop.f32.mrf.mxu0
      %v1623 = vadd.f32 %v1510, %v1622
      %1624 = vmatmul.f32.gmra.mxu0 %v994
      %v1625 = vpop.f32.mrf.mxu0
      %v1626 = vadd.f32 %v1513, %v1625
      %1627 = vmatmul.f32.gmra.mxu0 %v1003
      %v1628 = vpop.f32.mrf.mxu0
      %v1629 = vadd.f32 %v1516, %v1628
      %1630 = vmatmul.f32.gmra.mxu0 %v1012
      %v1631 = vpop.f32.mrf.mxu0
      %v1632 = vadd.f32 %v1519, %v1631
      %1633 = vmatmul.f32.gmra.mxu0 %v1021
      %v1634 = vpop.f32.mrf.mxu0
      %v1635 = vadd.f32 %v1522, %v1634
      %1636 = vmatmul.f32.gmra.mxu0 %v1030
      %v1637 = vpop.f32.mrf.mxu0
      %v1638 = vadd.f32 %v1525, %v1637
      %1639 = vmatmul.f32.gmra.mxu0 %v1039
      %v1640 = vpop.f32.mrf.mxu0
      %v1641 = vadd.f32 %v1528, %v1640
      %1642 = vmatmul.f32.gmra.mxu0 %v1048
      %v1643 = vpop.f32.mrf.mxu0
      %v1644 = vadd.f32 %v1531, %v1643
      %1645 = vmatmul.f32.gmra.mxu0 %v1057
      %v1646 = vpop.f32.mrf.mxu0
      %v1647 = vadd.f32 %v1534, %v1646
      %1648 = vmatmul.f32.gmra.mxu0 %v1066
      %v1649 = vpop.f32.mrf.mxu0
      %v1650 = vadd.f32 %v1537, %v1649
      %1651 = vmatmul.f32.gmra.mxu0 %v1075
      %v1652 = vpop.f32.mrf.mxu0
      %v1653 = vadd.f32 %v1540, %v1652
      %1654 = vmatmul.f32.gmra.mxu0 %v1084
      %v1655 = vpop.f32.mrf.mxu0
      %v1656 = vadd.f32 %v1543, %v1655
      %1657 = vmatmul.f32.gmra.mxu0 %v1093
      %v1658 = vpop.f32.mrf.mxu0
      %v1659 = vadd.f32 %v1546, %v1658
      %1660 = vmatmul.f32.gmra.mxu0 %v1102
      %v1661 = vpop.f32.mrf.mxu0
      %v1662 = vadd.f32 %v1549, %v1661
      %1663 = vmatmul.f32.gmra.mxu0 %v1111
      %v1664 = vpop.f32.mrf.mxu0
      %v1665 = vadd.f32 %v1552, %v1664
      %1666 = vmatmul.f32.gmra.mxu0 %v1120
      %v1667 = vpop.f32.mrf.mxu0
      %v1668 = vadd.f32 %v1555, %v1667
      %1669 = vmatmul.f32.gmra.mxu0 %v1129
      %v1670 = vpop.f32.mrf.mxu0
      %v1671 = vadd.f32 %v1558, %v1670
      %1672 = vmatmul.f32.gmra.mxu0 %v1138
      %v1673 = vpop.f32.mrf.mxu0
      %v1674 = vadd.f32 %v1561, %v1673
      %1675 = vmatmul.f32.gmra.mxu0 %v1147
      %v1676 = vpop.f32.mrf.mxu0
      %v1677 = vadd.f32 %v1564, %v1676
      %1678 = vmatmul.f32.gmra.mxu0 %v1156
      %v1679 = vpop.f32.mrf.mxu0
      %v1680 = vadd.f32 %v1567, %v1679
      %1681 = vmatmul.f32.gmra.mxu0 %v1165
      %v1682 = vpop.f32.mrf.mxu0
      %v1683 = vadd.f32 %v1570, %v1682
      %1684 = vmatmul.f32.gmra.mxu0 %v1174
      %v1685 = vpop.f32.mrf.mxu0
      %v1686 = vadd.f32 %v1573, %v1685
      %1687 = vmatmul.f32.gmra.mxu0 %v1183
      %v1688 = vpop.f32.mrf.mxu0
      %v1689 = vadd.f32 %v1576, %v1688
      %1690 = vmatmul.f32.gmra.mxu0 %v1192
      %v1691 = vpop.f32.mrf.mxu0
      %v1692 = vadd.f32 %v1579, %v1691
      %1693 = vmatmul.f32.gmra.mxu0 %v1201
      %v1694 = vpop.f32.mrf.mxu0
      %v1695 = vadd.f32 %v1582, %v1694
      %1696 = vmatmul.f32.gmra.mxu0 %v1210
      %v1697 = vpop.f32.mrf.mxu0
      %v1698 = vadd.f32 %v1585, %v1697
      %1699 = vdwg.mxu0
      %1700 = vmatpush.msra.mxu0 %v1280
      %1701 = vmatpush.msra.mxu0 %v1279
      %1702 = vmatpush.msra.mxu0 %v1278
      %1703 = vmatpush.msra.mxu0 %v1277
      %1704 = vmatpush.msra.mxu0 %v1276
      %1705 = vmatpush.msra.mxu0 %v1275
      %1706 = vmatpush.msra.mxu0 %v1274
      %1707 = vmatpush.msra.mxu0 %v1273
      %1708 = vmatpush.msra.mxu0 %v1272
      %1709 = vmatpush.msra.mxu0 %v1271
      %1710 = vmatpush.msra.mxu0 %v1270
      %1711 = vmatpush.msra.mxu0 %v1269
      %1712 = vmatpush.msra.mxu0 %v1268
      %1713 = vmatpush.msra.mxu0 %v1267
      %1714 = vmatpush.msra.mxu0 %v1266
      %1715 = vmatpush.msra.mxu0 %v1265
      %1716 = vmatmul.f32.gmra.mxu0 %v932
      %v1717 = vpop.f32.mrf.mxu0
      %v1718 = vadd.f32 %v1605, %v1717
      %1719 = vmatmul.f32.gmra.mxu0 %v941
      %v1720 = vpop.f32.mrf.mxu0
      %v1721 = vadd.f32 %v1608, %v1720
      %1722 = vmatmul.f32.gmra.mxu0 %v950
      %v1723 = vpop.f32.mrf.mxu0
      %v1724 = vadd.f32 %v1611, %v1723
      %1725 = vmatmul.f32.gmra.mxu0 %v959
      %v1726 = vpop.f32.mrf.mxu0
      %v1727 = vadd.f32 %v1614, %v1726
      %1728 = vmatmul.f32.gmra.mxu0 %v968
      %v1729 = vpop.f32.mrf.mxu0
      %v1730 = vadd.f32 %v1617, %v1729
      %1731 = vmatmul.f32.gmra.mxu0 %v977
      %v1732 = vpop.f32.mrf.mxu0
      %v1733 = vadd.f32 %v1620, %v1732
      %1734 = vmatmul.f32.gmra.mxu0 %v986
      %v1735 = vpop.f32.mrf.mxu0
      %v1736 = vadd.f32 %v1623, %v1735
      %1737 = vmatmul.f32.gmra.mxu0 %v995
      %v1738 = vpop.f32.mrf.mxu0
      %v1739 = vadd.f32 %v1626, %v1738
      %1740 = vmatmul.f32.gmra.mxu0 %v1004
      %v1741 = vpop.f32.mrf.mxu0
      %v1742 = vadd.f32 %v1629, %v1741
      %1743 = vmatmul.f32.gmra.mxu0 %v1013
      %v1744 = vpop.f32.mrf.mxu0
      %v1745 = vadd.f32 %v1632, %v1744
      %1746 = vmatmul.f32.gmra.mxu0 %v1022
      %v1747 = vpop.f32.mrf.mxu0
      %v1748 = vadd.f32 %v1635, %v1747
      %1749 = vmatmul.f32.gmra.mxu0 %v1031
      %v1750 = vpop.f32.mrf.mxu0
      %v1751 = vadd.f32 %v1638, %v1750
      %1752 = vmatmul.f32.gmra.mxu0 %v1040
      %v1753 = vpop.f32.mrf.mxu0
      %v1754 = vadd.f32 %v1641, %v1753
      %1755 = vmatmul.f32.gmra.mxu0 %v1049
      %v1756 = vpop.f32.mrf.mxu0
      %v1757 = vadd.f32 %v1644, %v1756
      %1758 = vmatmul.f32.gmra.mxu0 %v1058
      %v1759 = vpop.f32.mrf.mxu0
      %v1760 = vadd.f32 %v1647, %v1759
      %1761 = vmatmul.f32.gmra.mxu0 %v1067
      %v1762 = vpop.f32.mrf.mxu0
      %v1763 = vadd.f32 %v1650, %v1762
      %1764 = vmatmul.f32.gmra.mxu0 %v1076
      %v1765 = vpop.f32.mrf.mxu0
      %v1766 = vadd.f32 %v1653, %v1765
      %1767 = vmatmul.f32.gmra.mxu0 %v1085
      %v1768 = vpop.f32.mrf.mxu0
      %v1769 = vadd.f32 %v1656, %v1768
      %1770 = vmatmul.f32.gmra.mxu0 %v1094
      %v1771 = vpop.f32.mrf.mxu0
      %v1772 = vadd.f32 %v1659, %v1771
      %1773 = vmatmul.f32.gmra.mxu0 %v1103
      %v1774 = vpop.f32.mrf.mxu0
      %v1775 = vadd.f32 %v1662, %v1774
      %1776 = vmatmul.f32.gmra.mxu0 %v1112
      %v1777 = vpop.f32.mrf.mxu0
      %v1778 = vadd.f32 %v1665, %v1777
      %1779 = vmatmul.f32.gmra.mxu0 %v1121
      %v1780 = vpop.f32.mrf.mxu0
      %v1781 = vadd.f32 %v1668, %v1780
      %1782 = vmatmul.f32.gmra.mxu0 %v1130
      %v1783 = vpop.f32.mrf.mxu0
      %v1784 = vadd.f32 %v1671, %v1783
      %1785 = vmatmul.f32.gmra.mxu0 %v1139
      %v1786 = vpop.f32.mrf.mxu0
      %v1787 = vadd.f32 %v1674, %v1786
      %1788 = vmatmul.f32.gmra.mxu0 %v1148
      %v1789 = vpop.f32.mrf.mxu0
      %v1790 = vadd.f32 %v1677, %v1789
      %1791 = vmatmul.f32.gmra.mxu0 %v1157
      %v1792 = vpop.f32.mrf.mxu0
      %v1793 = vadd.f32 %v1680, %v1792
      %1794 = vmatmul.f32.gmra.mxu0 %v1166
      %v1795 = vpop.f32.mrf.mxu0
      %v1796 = vadd.f32 %v1683, %v1795
      %1797 = vmatmul.f32.gmra.mxu0 %v1175
      %v1798 = vpop.f32.mrf.mxu0
      %v1799 = vadd.f32 %v1686, %v1798
      %1800 = vmatmul.f32.gmra.mxu0 %v1184
      %v1801 = vpop.f32.mrf.mxu0
      %v1802 = vadd.f32 %v1689, %v1801
      %1803 = vmatmul.f32.gmra.mxu0 %v1193
      %v1804 = vpop.f32.mrf.mxu0
      %v1805 = vadd.f32 %v1692, %v1804
      %1806 = vmatmul.f32.gmra.mxu0 %v1202
      %v1807 = vpop.f32.mrf.mxu0
      %v1808 = vadd.f32 %v1695, %v1807
      %1809 = vmatmul.f32.gmra.mxu0 %v1211
      %v1810 = vpop.f32.mrf.mxu0
      %v1811 = vadd.f32 %v1698, %v1810
      %1812 = vdwg.mxu0
      %1813 = vmatpush.msra.mxu0 %v1296
      %1814 = vmatpush.msra.mxu0 %v1295
      %1815 = vmatpush.msra.mxu0 %v1294
      %1816 = vmatpush.msra.mxu0 %v1293
      %1817 = vmatpush.msra.mxu0 %v1292
      %1818 = vmatpush.msra.mxu0 %v1291
      %1819 = vmatpush.msra.mxu0 %v1290
      %1820 = vmatpush.msra.mxu0 %v1289
      %1821 = vmatpush.msra.mxu0 %v1288
      %1822 = vmatpush.msra.mxu0 %v1287
      %1823 = vmatpush.msra.mxu0 %v1286
      %1824 = vmatpush.msra.mxu0 %v1285
      %1825 = vmatpush.msra.mxu0 %v1284
      %1826 = vmatpush.msra.mxu0 %v1283
      %1827 = vmatpush.msra.mxu0 %v1282
      %1828 = vmatpush.msra.mxu0 %v1281
      %1829 = vmatmul.f32.gmra.mxu0 %v933
      %v1830 = vpop.f32.mrf.mxu0
      %v1831 = vadd.f32 %v1718, %v1830
      %1832 = vmatmul.f32.gmra.mxu0 %v942
      %v1833 = vpop.f32.mrf.mxu0
      %v1834 = vadd.f32 %v1721, %v1833
      %1835 = vmatmul.f32.gmra.mxu0 %v951
      %v1836 = vpop.f32.mrf.mxu0
      %v1837 = vadd.f32 %v1724, %v1836
      %1838 = vmatmul.f32.gmra.mxu0 %v960
      %v1839 = vpop.f32.mrf.mxu0
      %v1840 = vadd.f32 %v1727, %v1839
      %1841 = vmatmul.f32.gmra.mxu0 %v969
      %v1842 = vpop.f32.mrf.mxu0
      %v1843 = vadd.f32 %v1730, %v1842
      %1844 = vmatmul.f32.gmra.mxu0 %v978
      %v1845 = vpop.f32.mrf.mxu0
      %v1846 = vadd.f32 %v1733, %v1845
      %1847 = vmatmul.f32.gmra.mxu0 %v987
      %v1848 = vpop.f32.mrf.mxu0
      %v1849 = vadd.f32 %v1736, %v1848
      %1850 = vmatmul.f32.gmra.mxu0 %v996
      %v1851 = vpop.f32.mrf.mxu0
      %v1852 = vadd.f32 %v1739, %v1851
      %1853 = vmatmul.f32.gmra.mxu0 %v1005
      %v1854 = vpop.f32.mrf.mxu0
      %v1855 = vadd.f32 %v1742, %v1854
      %1856 = vmatmul.f32.gmra.mxu0 %v1014
      %v1857 = vpop.f32.mrf.mxu0
      %v1858 = vadd.f32 %v1745, %v1857
      %1859 = vmatmul.f32.gmra.mxu0 %v1023
      %v1860 = vpop.f32.mrf.mxu0
      %v1861 = vadd.f32 %v1748, %v1860
      %1862 = vmatmul.f32.gmra.mxu0 %v1032
      %v1863 = vpop.f32.mrf.mxu0
      %v1864 = vadd.f32 %v1751, %v1863
      %1865 = vmatmul.f32.gmra.mxu0 %v1041
      %v1866 = vpop.f32.mrf.mxu0
      %v1867 = vadd.f32 %v1754, %v1866
      %1868 = vmatmul.f32.gmra.mxu0 %v1050
      %v1869 = vpop.f32.mrf.mxu0
      %v1870 = vadd.f32 %v1757, %v1869
      %1871 = vmatmul.f32.gmra.mxu0 %v1059
      %v1872 = vpop.f32.mrf.mxu0
      %v1873 = vadd.f32 %v1760, %v1872
      %1874 = vmatmul.f32.gmra.mxu0 %v1068
      %v1875 = vpop.f32.mrf.mxu0
      %v1876 = vadd.f32 %v1763, %v1875
      %1877 = vmatmul.f32.gmra.mxu0 %v1077
      %v1878 = vpop.f32.mrf.mxu0
      %v1879 = vadd.f32 %v1766, %v1878
      %1880 = vmatmul.f32.gmra.mxu0 %v1086
      %v1881 = vpop.f32.mrf.mxu0
      %v1882 = vadd.f32 %v1769, %v1881
      %1883 = vmatmul.f32.gmra.mxu0 %v1095
      %v1884 = vpop.f32.mrf.mxu0
      %v1885 = vadd.f32 %v1772, %v1884
      %1886 = vmatmul.f32.gmra.mxu0 %v1104
      %v1887 = vpop.f32.mrf.mxu0
      %v1888 = vadd.f32 %v1775, %v1887
      %1889 = vmatmul.f32.gmra.mxu0 %v1113
      %v1890 = vpop.f32.mrf.mxu0
      %v1891 = vadd.f32 %v1778, %v1890
      %1892 = vmatmul.f32.gmra.mxu0 %v1122
      %v1893 = vpop.f32.mrf.mxu0
      %v1894 = vadd.f32 %v1781, %v1893
      %1895 = vmatmul.f32.gmra.mxu0 %v1131
      %v1896 = vpop.f32.mrf.mxu0
      %v1897 = vadd.f32 %v1784, %v1896
      %1898 = vmatmul.f32.gmra.mxu0 %v1140
      %v1899 = vpop.f32.mrf.mxu0
      %v1900 = vadd.f32 %v1787, %v1899
      %1901 = vmatmul.f32.gmra.mxu0 %v1149
      %v1902 = vpop.f32.mrf.mxu0
      %v1903 = vadd.f32 %v1790, %v1902
      %1904 = vmatmul.f32.gmra.mxu0 %v1158
      %v1905 = vpop.f32.mrf.mxu0
      %v1906 = vadd.f32 %v1793, %v1905
      %1907 = vmatmul.f32.gmra.mxu0 %v1167
      %v1908 = vpop.f32.mrf.mxu0
      %v1909 = vadd.f32 %v1796, %v1908
      %1910 = vmatmul.f32.gmra.mxu0 %v1176
      %v1911 = vpop.f32.mrf.mxu0
      %v1912 = vadd.f32 %v1799, %v1911
      %1913 = vmatmul.f32.gmra.mxu0 %v1185
      %v1914 = vpop.f32.mrf.mxu0
      %v1915 = vadd.f32 %v1802, %v1914
      %1916 = vmatmul.f32.gmra.mxu0 %v1194
      %v1917 = vpop.f32.mrf.mxu0
      %v1918 = vadd.f32 %v1805, %v1917
      %1919 = vmatmul.f32.gmra.mxu0 %v1203
      %v1920 = vpop.f32.mrf.mxu0
      %v1921 = vadd.f32 %v1808, %v1920
      %1922 = vmatmul.f32.gmra.mxu0 %v1212
      %v1923 = vpop.f32.mrf.mxu0
      %v1924 = vadd.f32 %v1811, %v1923
      %1925 = vdwg.mxu0
      %1926 = vmatpush.msra.mxu0 %v1312
      %1927 = vmatpush.msra.mxu0 %v1311
      %1928 = vmatpush.msra.mxu0 %v1310
      %1929 = vmatpush.msra.mxu0 %v1309
      %1930 = vmatpush.msra.mxu0 %v1308
      %1931 = vmatpush.msra.mxu0 %v1307
      %1932 = vmatpush.msra.mxu0 %v1306
      %1933 = vmatpush.msra.mxu0 %v1305
      %1934 = vmatpush.msra.mxu0 %v1304
      %1935 = vmatpush.msra.mxu0 %v1303
      %1936 = vmatpush.msra.mxu0 %v1302
      %1937 = vmatpush.msra.mxu0 %v1301
      %1938 = vmatpush.msra.mxu0 %v1300
      %1939 = vmatpush.msra.mxu0 %v1299
      %1940 = vmatpush.msra.mxu0 %v1298
      %1941 = vmatpush.msra.mxu0 %v1297
      %1942 = vmatmul.f32.gmra.mxu0 %v934
      %v1943 = vpop.f32.mrf.mxu0
      %v1944 = vadd.f32 %v1831, %v1943
      %1945 = vmatmul.f32.gmra.mxu0 %v943
      %v1946 = vpop.f32.mrf.mxu0
      %v1947 = vadd.f32 %v1834, %v1946
      %1948 = vmatmul.f32.gmra.mxu0 %v952
      %v1949 = vpop.f32.mrf.mxu0
      %v1950 = vadd.f32 %v1837, %v1949
      %1951 = vmatmul.f32.gmra.mxu0 %v961
      %v1952 = vpop.f32.mrf.mxu0
      %v1953 = vadd.f32 %v1840, %v1952
      %1954 = vmatmul.f32.gmra.mxu0 %v970
      %v1955 = vpop.f32.mrf.mxu0
      %v1956 = vadd.f32 %v1843, %v1955
      %1957 = vmatmul.f32.gmra.mxu0 %v979
      %v1958 = vpop.f32.mrf.mxu0
      %v1959 = vadd.f32 %v1846, %v1958
      %1960 = vmatmul.f32.gmra.mxu0 %v988
      %v1961 = vpop.f32.mrf.mxu0
      %v1962 = vadd.f32 %v1849, %v1961
      %1963 = vmatmul.f32.gmra.mxu0 %v997
      %v1964 = vpop.f32.mrf.mxu0
      %v1965 = vadd.f32 %v1852, %v1964
      %1966 = vmatmul.f32.gmra.mxu0 %v1006
      %v1967 = vpop.f32.mrf.mxu0
      %v1968 = vadd.f32 %v1855, %v1967
      %1969 = vmatmul.f32.gmra.mxu0 %v1015
      %v1970 = vpop.f32.mrf.mxu0
      %v1971 = vadd.f32 %v1858, %v1970
      %1972 = vmatmul.f32.gmra.mxu0 %v1024
      %v1973 = vpop.f32.mrf.mxu0
      %v1974 = vadd.f32 %v1861, %v1973
      %1975 = vmatmul.f32.gmra.mxu0 %v1033
      %v1976 = vpop.f32.mrf.mxu0
      %v1977 = vadd.f32 %v1864, %v1976
      %1978 = vmatmul.f32.gmra.mxu0 %v1042
      %v1979 = vpop.f32.mrf.mxu0
      %v1980 = vadd.f32 %v1867, %v1979
      %1981 = vmatmul.f32.gmra.mxu0 %v1051
      %v1982 = vpop.f32.mrf.mxu0
      %v1983 = vadd.f32 %v1870, %v1982
      %1984 = vmatmul.f32.gmra.mxu0 %v1060
      %v1985 = vpop.f32.mrf.mxu0
      %v1986 = vadd.f32 %v1873, %v1985
      %1987 = vmatmul.f32.gmra.mxu0 %v1069
      %v1988 = vpop.f32.mrf.mxu0
      %v1989 = vadd.f32 %v1876, %v1988
      %1990 = vmatmul.f32.gmra.mxu0 %v1078
      %v1991 = vpop.f32.mrf.mxu0
      %v1992 = vadd.f32 %v1879, %v1991
      %1993 = vmatmul.f32.gmra.mxu0 %v1087
      %v1994 = vpop.f32.mrf.mxu0
      %v1995 = vadd.f32 %v1882, %v1994
      %1996 = vmatmul.f32.gmra.mxu0 %v1096
      %v1997 = vpop.f32.mrf.mxu0
      %v1998 = vadd.f32 %v1885, %v1997
      %1999 = vmatmul.f32.gmra.mxu0 %v1105
      %v2000 = vpop.f32.mrf.mxu0
      %v2001 = vadd.f32 %v1888, %v2000
      %2002 = vmatmul.f32.gmra.mxu0 %v1114
      %v2003 = vpop.f32.mrf.mxu0
      %v2004 = vadd.f32 %v1891, %v2003
      %2005 = vmatmul.f32.gmra.mxu0 %v1123
      %v2006 = vpop.f32.mrf.mxu0
      %v2007 = vadd.f32 %v1894, %v2006
      %2008 = vmatmul.f32.gmra.mxu0 %v1132
      %v2009 = vpop.f32.mrf.mxu0
      %v2010 = vadd.f32 %v1897, %v2009
      %2011 = vmatmul.f32.gmra.mxu0 %v1141
      %v2012 = vpop.f32.mrf.mxu0
      %v2013 = vadd.f32 %v1900, %v2012
      %2014 = vmatmul.f32.gmra.mxu0 %v1150
      %v2015 = vpop.f32.mrf.mxu0
      %v2016 = vadd.f32 %v1903, %v2015
      %2017 = vmatmul.f32.gmra.mxu0 %v1159
      %v2018 = vpop.f32.mrf.mxu0
      %v2019 = vadd.f32 %v1906, %v2018
      %2020 = vmatmul.f32.gmra.mxu0 %v1168
      %v2021 = vpop.f32.mrf.mxu0
      %v2022 = vadd.f32 %v1909, %v2021
      %2023 = vmatmul.f32.gmra.mxu0 %v1177
      %v2024 = vpop.f32.mrf.mxu0
      %v2025 = vadd.f32 %v1912, %v2024
      %2026 = vmatmul.f32.gmra.mxu0 %v1186
      %v2027 = vpop.f32.mrf.mxu0
      %v2028 = vadd.f32 %v1915, %v2027
      %2029 = vmatmul.f32.gmra.mxu0 %v1195
      %v2030 = vpop.f32.mrf.mxu0
      %v2031 = vadd.f32 %v1918, %v2030
      %2032 = vmatmul.f32.gmra.mxu0 %v1204
      %v2033 = vpop.f32.mrf.mxu0
      %v2034 = vadd.f32 %v1921, %v2033
      %2035 = vmatmul.f32.gmra.mxu0 %v1213
      %v2036 = vpop.f32.mrf.mxu0
      %v2037 = vadd.f32 %v1924, %v2036
      %2038 = vdwg.mxu0
      %2039 = vmatpush.msra.mxu0 %v1328
      %2040 = vmatpush.msra.mxu0 %v1327
      %2041 = vmatpush.msra.mxu0 %v1326
      %2042 = vmatpush.msra.mxu0 %v1325
      %2043 = vmatpush.msra.mxu0 %v1324
      %2044 = vmatpush.msra.mxu0 %v1323
      %2045 = vmatpush.msra.mxu0 %v1322
      %2046 = vmatpush.msra.mxu0 %v1321
      %2047 = vmatpush.msra.mxu0 %v1320
      %2048 = vmatpush.msra.mxu0 %v1319
      %2049 = vmatpush.msra.mxu0 %v1318
      %2050 = vmatpush.msra.mxu0 %v1317
      %2051 = vmatpush.msra.mxu0 %v1316
      %2052 = vmatpush.msra.mxu0 %v1315
      %2053 = vmatpush.msra.mxu0 %v1314
      %2054 = vmatpush.msra.mxu0 %v1313
      %2055 = vmatmul.f32.gmra.mxu0 %v935
      %v2056 = vpop.f32.mrf.mxu0
      %v2057 = vadd.f32 %v1944, %v2056
      %2058 = vmatmul.f32.gmra.mxu0 %v944
      %v2059 = vpop.f32.mrf.mxu0
      %v2060 = vadd.f32 %v1947, %v2059
      %2061 = vmatmul.f32.gmra.mxu0 %v953
      %v2062 = vpop.f32.mrf.mxu0
      %v2063 = vadd.f32 %v1950, %v2062
      %2064 = vmatmul.f32.gmra.mxu0 %v962
      %v2065 = vpop.f32.mrf.mxu0
      %v2066 = vadd.f32 %v1953, %v2065
      %2067 = vmatmul.f32.gmra.mxu0 %v971
      %v2068 = vpop.f32.mrf.mxu0
      %v2069 = vadd.f32 %v1956, %v2068
      %2070 = vmatmul.f32.gmra.mxu0 %v980
      %v2071 = vpop.f32.mrf.mxu0
      %v2072 = vadd.f32 %v1959, %v2071
      %2073 = vmatmul.f32.gmra.mxu0 %v989
      %v2074 = vpop.f32.mrf.mxu0
      %v2075 = vadd.f32 %v1962, %v2074
      %2076 = vmatmul.f32.gmra.mxu0 %v998
      %v2077 = vpop.f32.mrf.mxu0
      %v2078 = vadd.f32 %v1965, %v2077
      %2079 = vmatmul.f32.gmra.mxu0 %v1007
      %v2080 = vpop.f32.mrf.mxu0
      %v2081 = vadd.f32 %v1968, %v2080
      %2082 = vmatmul.f32.gmra.mxu0 %v1016
      %v2083 = vpop.f32.mrf.mxu0
      %v2084 = vadd.f32 %v1971, %v2083
      %2085 = vmatmul.f32.gmra.mxu0 %v1025
      %v2086 = vpop.f32.mrf.mxu0
      %v2087 = vadd.f32 %v1974, %v2086
      %2088 = vmatmul.f32.gmra.mxu0 %v1034
      %v2089 = vpop.f32.mrf.mxu0
      %v2090 = vadd.f32 %v1977, %v2089
      %2091 = vmatmul.f32.gmra.mxu0 %v1043
      %v2092 = vpop.f32.mrf.mxu0
      %v2093 = vadd.f32 %v1980, %v2092
      %2094 = vmatmul.f32.gmra.mxu0 %v1052
      %v2095 = vpop.f32.mrf.mxu0
      %v2096 = vadd.f32 %v1983, %v2095
      %2097 = vmatmul.f32.gmra.mxu0 %v1061
      %v2098 = vpop.f32.mrf.mxu0
      %v2099 = vadd.f32 %v1986, %v2098
      %2100 = vmatmul.f32.gmra.mxu0 %v1070
      %v2101 = vpop.f32.mrf.mxu0
      %v2102 = vadd.f32 %v1989, %v2101
      %2103 = vmatmul.f32.gmra.mxu0 %v1079
      %v2104 = vpop.f32.mrf.mxu0
      %v2105 = vadd.f32 %v1992, %v2104
      %2106 = vmatmul.f32.gmra.mxu0 %v1088
      %v2107 = vpop.f32.mrf.mxu0
      %v2108 = vadd.f32 %v1995, %v2107
      %2109 = vmatmul.f32.gmra.mxu0 %v1097
      %v2110 = vpop.f32.mrf.mxu0
      %v2111 = vadd.f32 %v1998, %v2110
      %2112 = vmatmul.f32.gmra.mxu0 %v1106
      %v2113 = vpop.f32.mrf.mxu0
      %v2114 = vadd.f32 %v2001, %v2113
      %2115 = vmatmul.f32.gmra.mxu0 %v1115
      %v2116 = vpop.f32.mrf.mxu0
      %v2117 = vadd.f32 %v2004, %v2116
      %2118 = vmatmul.f32.gmra.mxu0 %v1124
      %v2119 = vpop.f32.mrf.mxu0
      %v2120 = vadd.f32 %v2007, %v2119
      %2121 = vmatmul.f32.gmra.mxu0 %v1133
      %v2122 = vpop.f32.mrf.mxu0
      %v2123 = vadd.f32 %v2010, %v2122
      %2124 = vmatmul.f32.gmra.mxu0 %v1142
      %v2125 = vpop.f32.mrf.mxu0
      %v2126 = vadd.f32 %v2013, %v2125
      %2127 = vmatmul.f32.gmra.mxu0 %v1151
      %v2128 = vpop.f32.mrf.mxu0
      %v2129 = vadd.f32 %v2016, %v2128
      %2130 = vmatmul.f32.gmra.mxu0 %v1160
      %v2131 = vpop.f32.mrf.mxu0
      %v2132 = vadd.f32 %v2019, %v2131
      %2133 = vmatmul.f32.gmra.mxu0 %v1169
      %v2134 = vpop.f32.mrf.mxu0
      %v2135 = vadd.f32 %v2022, %v2134
      %2136 = vmatmul.f32.gmra.mxu0 %v1178
      %v2137 = vpop.f32.mrf.mxu0
      %v2138 = vadd.f32 %v2025, %v2137
      %2139 = vmatmul.f32.gmra.mxu0 %v1187
      %v2140 = vpop.f32.mrf.mxu0
      %v2141 = vadd.f32 %v2028, %v2140
      %2142 = vmatmul.f32.gmra.mxu0 %v1196
      %v2143 = vpop.f32.mrf.mxu0
      %v2144 = vadd.f32 %v2031, %v2143
      %2145 = vmatmul.f32.gmra.mxu0 %v1205
      %v2146 = vpop.f32.mrf.mxu0
      %v2147 = vadd.f32 %v2034, %v2146
      %2148 = vmatmul.f32.gmra.mxu0 %v1214
      %v2149 = vpop.f32.mrf.mxu0
      %v2150 = vadd.f32 %v2037, %v2149
      %2151 = vdwg.mxu0
      %2152 = vmatpush.msra.mxu0 %v1344
      %2153 = vmatpush.msra.mxu0 %v1343
      %2154 = vmatpush.msra.mxu0 %v1342
      %2155 = vmatpush.msra.mxu0 %v1341
      %2156 = vmatpush.msra.mxu0 %v1340
      %2157 = vmatpush.msra.mxu0 %v1339
      %2158 = vmatpush.msra.mxu0 %v1338
      %2159 = vmatpush.msra.mxu0 %v1337
      %2160 = vmatpush.msra.mxu0 %v1336
      %2161 = vmatpush.msra.mxu0 %v1335
      %2162 = vmatpush.msra.mxu0 %v1334
      %2163 = vmatpush.msra.mxu0 %v1333
      %2164 = vmatpush.msra.mxu0 %v1332
      %2165 = vmatpush.msra.mxu0 %v1331
      %2166 = vmatpush.msra.mxu0 %v1330
      %2167 = vmatpush.msra.mxu0 %v1329
      %2168 = vmatmul.f32.gmra.mxu0 %v936
      %v2169 = vpop.f32.mrf.mxu0
      %v2170 = vadd.f32 %v2057, %v2169
      %2171 = vmatmul.f32.gmra.mxu0 %v945
      %v2172 = vpop.f32.mrf.mxu0
      %v2173 = vadd.f32 %v2060, %v2172
      %2174 = vmatmul.f32.gmra.mxu0 %v954
      %v2175 = vpop.f32.mrf.mxu0
      %v2176 = vadd.f32 %v2063, %v2175
      %2177 = vmatmul.f32.gmra.mxu0 %v963
      %v2178 = vpop.f32.mrf.mxu0
      %v2179 = vadd.f32 %v2066, %v2178
      %2180 = vmatmul.f32.gmra.mxu0 %v972
      %v2181 = vpop.f32.mrf.mxu0
      %v2182 = vadd.f32 %v2069, %v2181
      %2183 = vmatmul.f32.gmra.mxu0 %v981
      %v2184 = vpop.f32.mrf.mxu0
      %v2185 = vadd.f32 %v2072, %v2184
      %2186 = vmatmul.f32.gmra.mxu0 %v990
      %v2187 = vpop.f32.mrf.mxu0
      %v2188 = vadd.f32 %v2075, %v2187
      %2189 = vmatmul.f32.gmra.mxu0 %v999
      %v2190 = vpop.f32.mrf.mxu0
      %v2191 = vadd.f32 %v2078, %v2190
      %2192 = vmatmul.f32.gmra.mxu0 %v1008
      %v2193 = vpop.f32.mrf.mxu0
      %v2194 = vadd.f32 %v2081, %v2193
      %2195 = vmatmul.f32.gmra.mxu0 %v1017
      %v2196 = vpop.f32.mrf.mxu0
      %v2197 = vadd.f32 %v2084, %v2196
      %2198 = vmatmul.f32.gmra.mxu0 %v1026
      %v2199 = vpop.f32.mrf.mxu0
      %v2200 = vadd.f32 %v2087, %v2199
      %2201 = vmatmul.f32.gmra.mxu0 %v1035
      %v2202 = vpop.f32.mrf.mxu0
      %v2203 = vadd.f32 %v2090, %v2202
      %2204 = vmatmul.f32.gmra.mxu0 %v1044
      %v2205 = vpop.f32.mrf.mxu0
      %v2206 = vadd.f32 %v2093, %v2205
      %2207 = vmatmul.f32.gmra.mxu0 %v1053
      %v2208 = vpop.f32.mrf.mxu0
      %v2209 = vadd.f32 %v2096, %v2208
      %2210 = vmatmul.f32.gmra.mxu0 %v1062
      %v2211 = vpop.f32.mrf.mxu0
      %v2212 = vadd.f32 %v2099, %v2211
      %2213 = vmatmul.f32.gmra.mxu0 %v1071
      %v2214 = vpop.f32.mrf.mxu0
      %v2215 = vadd.f32 %v2102, %v2214
      %2216 = vmatmul.f32.gmra.mxu0 %v1080
      %v2217 = vpop.f32.mrf.mxu0
      %v2218 = vadd.f32 %v2105, %v2217
      %2219 = vmatmul.f32.gmra.mxu0 %v1089
      %v2220 = vpop.f32.mrf.mxu0
      %v2221 = vadd.f32 %v2108, %v2220
      %2222 = vmatmul.f32.gmra.mxu0 %v1098
      %v2223 = vpop.f32.mrf.mxu0
      %v2224 = vadd.f32 %v2111, %v2223
      %2225 = vmatmul.f32.gmra.mxu0 %v1107
      %v2226 = vpop.f32.mrf.mxu0
      %v2227 = vadd.f32 %v2114, %v2226
      %2228 = vmatmul.f32.gmra.mxu0 %v1116
      %v2229 = vpop.f32.mrf.mxu0
      %v2230 = vadd.f32 %v2117, %v2229
      %2231 = vmatmul.f32.gmra.mxu0 %v1125
      %v2232 = vpop.f32.mrf.mxu0
      %v2233 = vadd.f32 %v2120, %v2232
      %2234 = vmatmul.f32.gmra.mxu0 %v1134
      %v2235 = vpop.f32.mrf.mxu0
      %v2236 = vadd.f32 %v2123, %v2235
      %2237 = vmatmul.f32.gmra.mxu0 %v1143
      %v2238 = vpop.f32.mrf.mxu0
      %v2239 = vadd.f32 %v2126, %v2238
      %2240 = vmatmul.f32.gmra.mxu0 %v1152
      %v2241 = vpop.f32.mrf.mxu0
      %v2242 = vadd.f32 %v2129, %v2241
      %2243 = vmatmul.f32.gmra.mxu0 %v1161
      %v2244 = vpop.f32.mrf.mxu0
      %v2245 = vadd.f32 %v2132, %v2244
      %2246 = vmatmul.f32.gmra.mxu0 %v1170
      %v2247 = vpop.f32.mrf.mxu0
      %v2248 = vadd.f32 %v2135, %v2247
      %2249 = vmatmul.f32.gmra.mxu0 %v1179
      %v2250 = vpop.f32.mrf.mxu0
      %v2251 = vadd.f32 %v2138, %v2250
      %2252 = vmatmul.f32.gmra.mxu0 %v1188
      %v2253 = vpop.f32.mrf.mxu0
      %v2254 = vadd.f32 %v2141, %v2253
      %2255 = vmatmul.f32.gmra.mxu0 %v1197
      %v2256 = vpop.f32.mrf.mxu0
      %v2257 = vadd.f32 %v2144, %v2256
      %2258 = vmatmul.f32.gmra.mxu0 %v1206
      %v2259 = vpop.f32.mrf.mxu0
      %v2260 = vadd.f32 %v2147, %v2259
      %2261 = vmatmul.f32.gmra.mxu0 %v1215
      %v2262 = vpop.f32.mrf.mxu0
      %v2263 = vadd.f32 %v2150, %v2262
      %2264 = vdwg.mxu0
      %2265 = vmatpush.msra.mxu0 %v1360
      %2266 = vmatpush.msra.mxu0 %v1359
      %2267 = vmatpush.msra.mxu0 %v1358
      %2268 = vmatpush.msra.mxu0 %v1357
      %2269 = vmatpush.msra.mxu0 %v1356
      %2270 = vmatpush.msra.mxu0 %v1355
      %2271 = vmatpush.msra.mxu0 %v1354
      %2272 = vmatpush.msra.mxu0 %v1353
      %2273 = vmatpush.msra.mxu0 %v1352
      %2274 = vmatpush.msra.mxu0 %v1351
      %2275 = vmatpush.msra.mxu0 %v1350
      %2276 = vmatpush.msra.mxu0 %v1349
      %2277 = vmatpush.msra.mxu0 %v1348
      %2278 = vmatpush.msra.mxu0 %v1347
      %2279 = vmatpush.msra.mxu0 %v1346
      %2280 = vmatpush.msra.mxu0 %v1345
      %2281 = vmatmul.f32.gmra.mxu0 %v937
      %v2282 = vpop.f32.mrf.mxu0
      %v2283 = vadd.f32 %v2170, %v2282
      %2284 = vmatmul.f32.gmra.mxu0 %v946
      %v2285 = vpop.f32.mrf.mxu0
      %v2286 = vadd.f32 %v2173, %v2285
      %2287 = vmatmul.f32.gmra.mxu0 %v955
      %v2288 = vpop.f32.mrf.mxu0
      %v2289 = vadd.f32 %v2176, %v2288
      %2290 = vmatmul.f32.gmra.mxu0 %v964
      %v2291 = vpop.f32.mrf.mxu0
      %v2292 = vadd.f32 %v2179, %v2291
      %2293 = vmatmul.f32.gmra.mxu0 %v973
      %v2294 = vpop.f32.mrf.mxu0
      %v2295 = vadd.f32 %v2182, %v2294
      %2296 = vmatmul.f32.gmra.mxu0 %v982
      %v2297 = vpop.f32.mrf.mxu0
      %v2298 = vadd.f32 %v2185, %v2297
      %2299 = vmatmul.f32.gmra.mxu0 %v991
      %v2300 = vpop.f32.mrf.mxu0
      %v2301 = vadd.f32 %v2188, %v2300
      %2302 = vmatmul.f32.gmra.mxu0 %v1000
      %v2303 = vpop.f32.mrf.mxu0
      %v2304 = vadd.f32 %v2191, %v2303
      %2305 = vmatmul.f32.gmra.mxu0 %v1009
      %v2306 = vpop.f32.mrf.mxu0
      %v2307 = vadd.f32 %v2194, %v2306
      %2308 = vmatmul.f32.gmra.mxu0 %v1018
      %v2309 = vpop.f32.mrf.mxu0
      %v2310 = vadd.f32 %v2197, %v2309
      %2311 = vmatmul.f32.gmra.mxu0 %v1027
      %v2312 = vpop.f32.mrf.mxu0
      %v2313 = vadd.f32 %v2200, %v2312
      %2314 = vmatmul.f32.gmra.mxu0 %v1036
      %v2315 = vpop.f32.mrf.mxu0
      %v2316 = vadd.f32 %v2203, %v2315
      %2317 = vmatmul.f32.gmra.mxu0 %v1045
      %v2318 = vpop.f32.mrf.mxu0
      %v2319 = vadd.f32 %v2206, %v2318
      %2320 = vmatmul.f32.gmra.mxu0 %v1054
      %v2321 = vpop.f32.mrf.mxu0
      %v2322 = vadd.f32 %v2209, %v2321
      %2323 = vmatmul.f32.gmra.mxu0 %v1063
      %v2324 = vpop.f32.mrf.mxu0
      %v2325 = vadd.f32 %v2212, %v2324
      %2326 = vmatmul.f32.gmra.mxu0 %v1072
      %v2327 = vpop.f32.mrf.mxu0
      %v2328 = vadd.f32 %v2215, %v2327
      %2329 = vmatmul.f32.gmra.mxu0 %v1081
      %v2330 = vpop.f32.mrf.mxu0
      %v2331 = vadd.f32 %v2218, %v2330
      %2332 = vmatmul.f32.gmra.mxu0 %v1090
      %v2333 = vpop.f32.mrf.mxu0
      %v2334 = vadd.f32 %v2221, %v2333
      %2335 = vmatmul.f32.gmra.mxu0 %v1099
      %v2336 = vpop.f32.mrf.mxu0
      %v2337 = vadd.f32 %v2224, %v2336
      %2338 = vmatmul.f32.gmra.mxu0 %v1108
      %v2339 = vpop.f32.mrf.mxu0
      %v2340 = vadd.f32 %v2227, %v2339
      %2341 = vmatmul.f32.gmra.mxu0 %v1117
      %v2342 = vpop.f32.mrf.mxu0
      %v2343 = vadd.f32 %v2230, %v2342
      %2344 = vmatmul.f32.gmra.mxu0 %v1126
      %v2345 = vpop.f32.mrf.mxu0
      %v2346 = vadd.f32 %v2233, %v2345
      %2347 = vmatmul.f32.gmra.mxu0 %v1135
      %v2348 = vpop.f32.mrf.mxu0
      %v2349 = vadd.f32 %v2236, %v2348
      %2350 = vmatmul.f32.gmra.mxu0 %v1144
      %v2351 = vpop.f32.mrf.mxu0
      %v2352 = vadd.f32 %v2239, %v2351
      %2353 = vmatmul.f32.gmra.mxu0 %v1153
      %v2354 = vpop.f32.mrf.mxu0
      %v2355 = vadd.f32 %v2242, %v2354
      %2356 = vmatmul.f32.gmra.mxu0 %v1162
      %v2357 = vpop.f32.mrf.mxu0
      %v2358 = vadd.f32 %v2245, %v2357
      %2359 = vmatmul.f32.gmra.mxu0 %v1171
      %v2360 = vpop.f32.mrf.mxu0
      %v2361 = vadd.f32 %v2248, %v2360
      %2362 = vmatmul.f32.gmra.mxu0 %v1180
      %v2363 = vpop.f32.mrf.mxu0
      %v2364 = vadd.f32 %v2251, %v2363
      %2365 = vmatmul.f32.gmra.mxu0 %v1189
      %v2366 = vpop.f32.mrf.mxu0
      %v2367 = vadd.f32 %v2254, %v2366
      %2368 = vmatmul.f32.gmra.mxu0 %v1198
      %v2369 = vpop.f32.mrf.mxu0
      %v2370 = vadd.f32 %v2257, %v2369
      %2371 = vmatmul.f32.gmra.mxu0 %v1207
      %v2372 = vpop.f32.mrf.mxu0
      %v2373 = vadd.f32 %v2260, %v2372
      %2374 = vmatmul.f32.gmra.mxu0 %v1216
      %v2375 = vpop.f32.mrf.mxu0
      %v2376 = vadd.f32 %v2263, %v2375
      %2377 = vdwg.mxu0
      %v2378 = vld [vmem:[%s2] sm:$0x1]
      %v2380 = vperm.slane %v2378, 0
      %v2382 = vmul.f32 %v2283, %v2380
      %v2383 = vmul.f32 %v2286, %v2380
      %v2384 = vmul.f32 %v2289, %v2380
      %v2385 = vmul.f32 %v2292, %v2380
      %v2386 = vmul.f32 %v2295, %v2380
      %v2387 = vmul.f32 %v2298, %v2380
      %v2388 = vmul.f32 %v2301, %v2380
      %v2389 = vmul.f32 %v2304, %v2380
      %v2390 = vmul.f32 %v2307, %v2380
      %v2391 = vmul.f32 %v2310, %v2380
      %v2392 = vmul.f32 %v2313, %v2380
      %v2393 = vmul.f32 %v2316, %v2380
      %v2394 = vmul.f32 %v2319, %v2380
      %v2395 = vmul.f32 %v2322, %v2380
      %v2396 = vmul.f32 %v2325, %v2380
      %v2397 = vmul.f32 %v2328, %v2380
      %v2398 = vmul.f32 %v2331, %v2380
      %v2399 = vmul.f32 %v2334, %v2380
      %v2400 = vmul.f32 %v2337, %v2380
      %v2401 = vmul.f32 %v2340, %v2380
      %v2402 = vmul.f32 %v2343, %v2380
      %v2403 = vmul.f32 %v2346, %v2380
      %v2404 = vmul.f32 %v2349, %v2380
      %v2405 = vmul.f32 %v2352, %v2380
      %v2406 = vmul.f32 %v2355, %v2380
      %v2407 = vmul.f32 %v2358, %v2380
      %v2408 = vmul.f32 %v2361, %v2380
      %v2409 = vmul.f32 %v2364, %v2380
      %v2410 = vmul.f32 %v2367, %v2380
      %v2411 = vmul.f32 %v2370, %v2380
      %v2412 = vmul.f32 %v2373, %v2380
      %v2413 = vmul.f32 %v2376, %v2380
      %v2414 = vld [vmem:[%s3] sm:$0x1]
      %v2416 = vperm.slane %v2414, 0
      %v2418 = vadd.f32 %v2382, %v2416
      %v2419 = vadd.f32 %v2383, %v2416
      %v2420 = vadd.f32 %v2384, %v2416
      %v2421 = vadd.f32 %v2385, %v2416
      %v2422 = vadd.f32 %v2386, %v2416
      %v2423 = vadd.f32 %v2387, %v2416
      %v2424 = vadd.f32 %v2388, %v2416
      %v2425 = vadd.f32 %v2389, %v2416
      %v2426 = vadd.f32 %v2390, %v2416
      %v2427 = vadd.f32 %v2391, %v2416
      %v2428 = vadd.f32 %v2392, %v2416
      %v2429 = vadd.f32 %v2393, %v2416
      %v2430 = vadd.f32 %v2394, %v2416
      %v2431 = vadd.f32 %v2395, %v2416
      %v2432 = vadd.f32 %v2396, %v2416
      %v2433 = vadd.f32 %v2397, %v2416
      %v2434 = vadd.f32 %v2398, %v2416
      %v2435 = vadd.f32 %v2399, %v2416
      %v2436 = vadd.f32 %v2400, %v2416
      %v2437 = vadd.f32 %v2401, %v2416
      %v2438 = vadd.f32 %v2402, %v2416
      %v2439 = vadd.f32 %v2403, %v2416
      %v2440 = vadd.f32 %v2404, %v2416
      %v2441 = vadd.f32 %v2405, %v2416
      %v2442 = vadd.f32 %v2406, %v2416
      %v2443 = vadd.f32 %v2407, %v2416
      %v2444 = vadd.f32 %v2408, %v2416
      %v2445 = vadd.f32 %v2409, %v2416
      %v2446 = vadd.f32 %v2410, %v2416
      %v2447 = vadd.f32 %v2411, %v2416
      %v2448 = vadd.f32 %v2412, %v2416
      %v2449 = vadd.f32 %v2413, %v2416
      %v2450 = vmax.f32 %v2418, 0.0
      %v2451 = vmax.f32 %v2419, 0.0
      %v2452 = vmax.f32 %v2420, 0.0
      %v2453 = vmax.f32 %v2421, 0.0
      %v2454 = vmax.f32 %v2422, 0.0
      %v2455 = vmax.f32 %v2423, 0.0
      %v2456 = vmax.f32 %v2424, 0.0
      %v2457 = vmax.f32 %v2425, 0.0
      %v2458 = vmax.f32 %v2426, 0.0
      %v2459 = vmax.f32 %v2427, 0.0
      %v2460 = vmax.f32 %v2428, 0.0
      %v2461 = vmax.f32 %v2429, 0.0
      %v2462 = vmax.f32 %v2430, 0.0
      %v2463 = vmax.f32 %v2431, 0.0
      %v2464 = vmax.f32 %v2432, 0.0
      %v2465 = vmax.f32 %v2433, 0.0
      %v2466 = vmax.f32 %v2434, 0.0
      %v2467 = vmax.f32 %v2435, 0.0
      %v2468 = vmax.f32 %v2436, 0.0
      %v2469 = vmax.f32 %v2437, 0.0
      %v2470 = vmax.f32 %v2438, 0.0
      %v2471 = vmax.f32 %v2439, 0.0
      %v2472 = vmax.f32 %v2440, 0.0
      %v2473 = vmax.f32 %v2441, 0.0
      %v2474 = vmax.f32 %v2442, 0.0
      %v2475 = vmax.f32 %v2443, 0.0
      %v2476 = vmax.f32 %v2444, 0.0
      %v2477 = vmax.f32 %v2445, 0.0
      %v2478 = vmax.f32 %v2446, 0.0
      %v2479 = vmax.f32 %v2447, 0.0
      %v2480 = vmax.f32 %v2448, 0.0
      %v2481 = vmax.f32 %v2449, 0.0
      %2482 = vst [vmem:[#allocation2] sm:$0xff] 0.0
      %2483 = vst [vmem:[#allocation2 + $0x8] sm:$0xff] 0.0
      %2484 = vst [vmem:[#allocation2 + $0x10] sm:$0x3] 0.0
      %2485 = vst [vmem:[#allocation2 + $0x18] sm:$0xff] 0.0
      %2486 = vst [vmem:[#allocation2 + $0x20] sm:$0xff] 0.0
      %2487 = vst [vmem:[#allocation2 + $0x28] sm:$0x3] 0.0
      %2488 = vst [vmem:[#allocation2 + $0x30] sm:$0xff] 0.0
      %2489 = vst [vmem:[#allocation2 + $0x38] sm:$0xff] 0.0
      %2490 = vst [vmem:[#allocation2 + $0x40] sm:$0x3] 0.0
      %2491 = vst [vmem:[#allocation2 + $0x48] sm:$0xff] 0.0
      %2492 = vst [vmem:[#allocation2 + $0x50] sm:$0xff] 0.0
      %2493 = vst [vmem:[#allocation2 + $0x58] sm:$0x3] 0.0
      %2494 = vst [vmem:[#allocation2 + $0x60] sm:$0xff] 0.0
      %2495 = vst [vmem:[#allocation2 + $0x68] sm:$0xff] 0.0
      %2496 = vst [vmem:[#allocation2 + $0x70] sm:$0x3] 0.0
      %2497 = vst [vmem:[#allocation2 + $0x78] sm:$0xff] 0.0
      %2498 = vst [vmem:[#allocation2 + $0x80] sm:$0xff] 0.0
      %2499 = vst [vmem:[#allocation2 + $0x88] sm:$0x3] 0.0
      %2500 = vst [vmem:[#allocation2 + $0x90] sm:$0xff] 0.0
      %2501 = vst [vmem:[#allocation2 + $0x98] sm:$0xff] 0.0
      %2502 = vst [vmem:[#allocation2 + $0xa0] sm:$0x3] 0.0
      %2503 = vst [vmem:[#allocation2 + $0xa8] sm:$0xff] 0.0
      %2504 = vst [vmem:[#allocation2 + $0xb0] sm:$0xff] 0.0
      %2505 = vst [vmem:[#allocation2 + $0xb8] sm:$0x3] 0.0
      %2506 = vst [vmem:[#allocation2 + $0xc0] sm:$0xff] 0.0
      %2507 = vst [vmem:[#allocation2 + $0xc8] sm:$0xff] 0.0
      %2508 = vst [vmem:[#allocation2 + $0xd0] sm:$0x3] 0.0
      %2509 = vst [vmem:[#allocation2 + $0xd8] sm:$0xff] 0.0
      %2510 = vst [vmem:[#allocation2 + $0xe0] sm:$0xff] 0.0
      %2511 = vst [vmem:[#allocation2 + $0xe8] sm:$0x3] 0.0
      %2512 = vst [vmem:[#allocation2 + $0xf0] sm:$0xff] 0.0
      %2513 = vst [vmem:[#allocation2 + $0xf8] sm:$0xff] 0.0
      %2514 = vst [vmem:[#allocation2 + $0x100] sm:$0x3] 0.0
      %2515 = vst [vmem:[#allocation2 + $0x108] sm:$0xff] 0.0
      %2516 = vst [vmem:[#allocation2 + $0x110] sm:$0xff] 0.0
      %2517 = vst [vmem:[#allocation2 + $0x118] sm:$0x3] 0.0
      %2518 = vst [vmem:[#allocation2 + $0x120] sm:$0xff] 0.0
      %2519 = vst [vmem:[#allocation2 + $0x128] sm:$0xff] 0.0
      %2520 = vst [vmem:[#allocation2 + $0x130] sm:$0x3] 0.0
      %2521 = vst [vmem:[#allocation2 + $0x138] sm:$0xff] 0.0
      %2522 = vst [vmem:[#allocation2 + $0x140] sm:$0xff] 0.0
      %2523 = vst [vmem:[#allocation2 + $0x148] sm:$0x3] 0.0
      %2524 = vst [vmem:[#allocation2 + $0x150] sm:$0xff] 0.0
      %2525 = vst [vmem:[#allocation2 + $0x158] sm:$0xff] 0.0
      %2526 = vst [vmem:[#allocation2 + $0x160] sm:$0x3] 0.0
      %2527 = vst [vmem:[#allocation2 + $0x168] sm:$0xff] 0.0
      %2528 = vst [vmem:[#allocation2 + $0x170] sm:$0xff] 0.0
      %2529 = vst [vmem:[#allocation2 + $0x178] sm:$0x3] 0.0
      %2530 = vst [vmem:[#allocation2 + $0x180] sm:$0xff] 0.0
      %2531 = vst [vmem:[#allocation2 + $0x188] sm:$0xff] 0.0
      %2532 = vst [vmem:[#allocation2 + $0x190] sm:$0x3] 0.0
      %2533 = vst [vmem:[#allocation2 + $0x198] sm:$0xff] 0.0
      %2534 = vst [vmem:[#allocation2 + $0x1a0] sm:$0xff] 0.0
      %2535 = vst [vmem:[#allocation2 + $0x1a8] sm:$0x3] 0.0
      %s2536 = scalar_lea.vmem [#allocation2], 24
      %2537 = vst [vmem:[%s2536 + $0x1] sm:$0xff] %v2450
      %2538 = vst [vmem:[%s2536 + $0x9] sm:$0xff] %v2451
      %2539 = vst [vmem:[%s2536 + $0x19] sm:$0xff] %v2452
      %2540 = vst [vmem:[%s2536 + $0x21] sm:$0xff] %v2453
      %2541 = vst [vmem:[%s2536 + $0x31] sm:$0xff] %v2454
      %2542 = vst [vmem:[%s2536 + $0x39] sm:$0xff] %v2455
      %2543 = vst [vmem:[%s2536 + $0x49] sm:$0xff] %v2456
      %2544 = vst [vmem:[%s2536 + $0x51] sm:$0xff] %v2457
      %2545 = vst [vmem:[%s2536 + $0x61] sm:$0xff] %v2458
      %2546 = vst [vmem:[%s2536 + $0x69] sm:$0xff] %v2459
      %2547 = vst [vmem:[%s2536 + $0x79] sm:$0xff] %v2460
      %2548 = vst [vmem:[%s2536 + $0x81] sm:$0xff] %v2461
      %2549 = vst [vmem:[%s2536 + $0x91] sm:$0xff] %v2462
      %2550 = vst [vmem:[%s2536 + $0x99] sm:$0xff] %v2463
      %2551 = vst [vmem:[%s2536 + $0xa9] sm:$0xff] %v2464
      %2552 = vst [vmem:[%s2536 + $0xb1] sm:$0xff] %v2465
      %2553 = vst [vmem:[%s2536 + $0xc1] sm:$0xff] %v2466
      %2554 = vst [vmem:[%s2536 + $0xc9] sm:$0xff] %v2467
      %2555 = vst [vmem:[%s2536 + $0xd9] sm:$0xff] %v2468
      %2556 = vst [vmem:[%s2536 + $0xe1] sm:$0xff] %v2469
      %2557 = vst [vmem:[%s2536 + $0xf1] sm:$0xff] %v2470
      %2558 = vst [vmem:[%s2536 + $0xf9] sm:$0xff] %v2471
      %2559 = vst [vmem:[%s2536 + $0x109] sm:$0xff] %v2472
      %2560 = vst [vmem:[%s2536 + $0x111] sm:$0xff] %v2473
      %2561 = vst [vmem:[%s2536 + $0x121] sm:$0xff] %v2474
      %2562 = vst [vmem:[%s2536 + $0x129] sm:$0xff] %v2475
      %2563 = vst [vmem:[%s2536 + $0x139] sm:$0xff] %v2476
      %2564 = vst [vmem:[%s2536 + $0x141] sm:$0xff] %v2477
      %2565 = vst [vmem:[%s2536 + $0x151] sm:$0xff] %v2478
      %2566 = vst [vmem:[%s2536 + $0x159] sm:$0xff] %v2479
      %2567 = vst [vmem:[%s2536 + $0x169] sm:$0xff] %v2480
      %2568 = vst [vmem:[%s2536 + $0x171] sm:$0xff] %v2481
      %v2569 = vld [vmem:[#allocation2] sm:$0xff]
      %v2570 = vld [vmem:[#allocation2 + $0x8] sm:$0xff]
      %v2571 = vld [vmem:[#allocation2 + $0x10] sm:$0x3]
      %v2572 = vld [vmem:[#allocation2 + $0x18] sm:$0xff]
      %v2573 = vld [vmem:[#allocation2 + $0x20] sm:$0xff]
      %v2574 = vld [vmem:[#allocation2 + $0x28] sm:$0x3]
      %v2575 = vld [vmem:[#allocation2 + $0x30] sm:$0xff]
      %v2576 = vld [vmem:[#allocation2 + $0x38] sm:$0xff]
      %v2577 = vld [vmem:[#allocation2 + $0x40] sm:$0x3]
      %v2578 = vld [vmem:[#allocation2 + $0x48] sm:$0xff]
      %v2579 = vld [vmem:[#allocation2 + $0x50] sm:$0xff]
      %v2580 = vld [vmem:[#allocation2 + $0x58] sm:$0x3]
      %v2581 = vld [vmem:[#allocation2 + $0x60] sm:$0xff]
      %v2582 = vld [vmem:[#allocation2 + $0x68] sm:$0xff]
      %v2583 = vld [vmem:[#allocation2 + $0x70] sm:$0x3]
      %v2584 = vld [vmem:[#allocation2 + $0x78] sm:$0xff]
      %v2585 = vld [vmem:[#allocation2 + $0x80] sm:$0xff]
      %v2586 = vld [vmem:[#allocation2 + $0x88] sm:$0x3]
      %v2587 = vld [vmem:[#allocation2 + $0x90] sm:$0xff]
      %v2588 = vld [vmem:[#allocation2 + $0x98] sm:$0xff]
      %v2589 = vld [vmem:[#allocation2 + $0xa0] sm:$0x3]
      %v2590 = vld [vmem:[#allocation2 + $0xa8] sm:$0xff]
      %v2591 = vld [vmem:[#allocation2 + $0xb0] sm:$0xff]
      %v2592 = vld [vmem:[#allocation2 + $0xb8] sm:$0x3]
      %v2593 = vld [vmem:[#allocation2 + $0xc0] sm:$0xff]
      %v2594 = vld [vmem:[#allocation2 + $0xc8] sm:$0xff]
      %v2595 = vld [vmem:[#allocation2 + $0xd0] sm:$0x3]
      %v2596 = vld [vmem:[#allocation2 + $0xd8] sm:$0xff]
      %v2597 = vld [vmem:[#allocation2 + $0xe0] sm:$0xff]
      %v2598 = vld [vmem:[#allocation2 + $0xe8] sm:$0x3]
      %v2599 = vld [vmem:[#allocation2 + $0xf0] sm:$0xff]
      %v2600 = vld [vmem:[#allocation2 + $0xf8] sm:$0xff]
      %v2601 = vld [vmem:[#allocation2 + $0x100] sm:$0x3]
      %v2602 = vld [vmem:[#allocation2 + $0x108] sm:$0xff]
      %v2603 = vld [vmem:[#allocation2 + $0x110] sm:$0xff]
      %v2604 = vld [vmem:[#allocation2 + $0x118] sm:$0x3]
      %v2605 = vld [vmem:[#allocation2 + $0x120] sm:$0xff]
      %v2606 = vld [vmem:[#allocation2 + $0x128] sm:$0xff]
      %v2607 = vld [vmem:[#allocation2 + $0x130] sm:$0x3]
      %v2608 = vld [vmem:[#allocation2 + $0x138] sm:$0xff]
      %v2609 = vld [vmem:[#allocation2 + $0x140] sm:$0xff]
      %v2610 = vld [vmem:[#allocation2 + $0x148] sm:$0x3]
      %v2611 = vld [vmem:[#allocation2 + $0x150] sm:$0xff]
      %v2612 = vld [vmem:[#allocation2 + $0x158] sm:$0xff]
      %v2613 = vld [vmem:[#allocation2 + $0x160] sm:$0x3]
      %v2614 = vld [vmem:[#allocation2 + $0x168] sm:$0xff]
      %v2615 = vld [vmem:[#allocation2 + $0x170] sm:$0xff]
      %v2616 = vld [vmem:[#allocation2 + $0x178] sm:$0x3]
      %v2617 = vld [vmem:[#allocation2 + $0x180] sm:$0xff]
      %v2618 = vld [vmem:[#allocation2 + $0x188] sm:$0xff]
      %v2619 = vld [vmem:[#allocation2 + $0x190] sm:$0x3]
      %v2620 = vld [vmem:[#allocation2 + $0x198] sm:$0xff]
      %v2621 = vld [vmem:[#allocation2 + $0x1a0] sm:$0xff]
      %v2622 = vld [vmem:[#allocation2 + $0x1a8] sm:$0x3]
      %2623 = vst [vmem:[#allocation4] sm:$0xff] %v2569
      %2624 = vst [vmem:[#allocation4 + $0x48] sm:$0xff] %v2570
      %2625 = vst [vmem:[#allocation4 + $0x90] sm:$0xff] %v2572
      %2626 = vst [vmem:[#allocation4 + $0xd8] sm:$0xff] %v2573
      %2627 = vst [vmem:[#allocation4 + $0x120] sm:$0xff] %v2575
      %2628 = vst [vmem:[#allocation4 + $0x168] sm:$0xff] %v2576
      %2629 = vst [vmem:[#allocation4 + $0x1b0] sm:$0xff] %v2578
      %2630 = vst [vmem:[#allocation4 + $0x1f8] sm:$0xff] %v2579
      %2631 = vst [vmem:[#allocation4 + $0x240] sm:$0xff] %v2581
      %2632 = vst [vmem:[#allocation4 + $0x288] sm:$0xff] %v2582
      %2633 = vst [vmem:[#allocation4 + $0x2d0] sm:$0xff] %v2584
      %2634 = vst [vmem:[#allocation4 + $0x318] sm:$0xff] %v2585
      %2635 = vst [vmem:[#allocation4 + $0x360] sm:$0xff] %v2587
      %2636 = vst [vmem:[#allocation4 + $0x3a8] sm:$0xff] %v2588
      %2637 = vst [vmem:[#allocation4 + $0x3f0] sm:$0xff] %v2590
      %2638 = vst [vmem:[#allocation4 + $0x438] sm:$0xff] %v2591
      %2639 = vst [vmem:[#allocation4 + $0x480] sm:$0xff] %v2593
      %2640 = vst [vmem:[#allocation4 + $0x4c8] sm:$0xff] %v2594
      %2641 = vst [vmem:[#allocation4 + $0x510] sm:$0xff] %v2596
      %2642 = vst [vmem:[#allocation4 + $0x558] sm:$0xff] %v2597
      %2643 = vst [vmem:[#allocation4 + $0x5a0] sm:$0xff] %v2599
      %2644 = vst [vmem:[#allocation4 + $0x5e8] sm:$0xff] %v2600
      %2645 = vst [vmem:[#allocation4 + $0x630] sm:$0xff] %v2602
      %2646 = vst [vmem:[#allocation4 + $0x678] sm:$0xff] %v2603
      %2647 = vst [vmem:[#allocation4 + $0x6c0] sm:$0xff] %v2605
      %2648 = vst [vmem:[#allocation4 + $0x708] sm:$0xff] %v2606
      %2649 = vst [vmem:[#allocation4 + $0x750] sm:$0xff] %v2608
      %2650 = vst [vmem:[#allocation4 + $0x798] sm:$0xff] %v2609
      %2651 = vst [vmem:[#allocation4 + $0x7e0] sm:$0xff] %v2611
      %2652 = vst [vmem:[#allocation4 + $0x828] sm:$0xff] %v2612
      %2653 = vst [vmem:[#allocation4 + $0x870] sm:$0xff] %v2614
      %2654 = vst [vmem:[#allocation4 + $0x8b8] sm:$0xff] %v2615
      %v2703 = vrot.slane %v2569, 1
      %v2704 = vrot.slane %v2570, 1
      %v2705 = vsel %vm413, %v2703, %v2704
      %v2706 = vrot.slane %v2571, 1
      %v2707 = vsel %vm413, %v2704, %v2706
      %v2708 = vrot.slane %v2572, 1
      %v2709 = vrot.slane %v2573, 1
      %v2710 = vsel %vm413, %v2708, %v2709
      %v2711 = vrot.slane %v2574, 1
      %v2712 = vsel %vm413, %v2709, %v2711
      %v2713 = vrot.slane %v2575, 1
      %v2714 = vrot.slane %v2576, 1
      %v2715 = vsel %vm413, %v2713, %v2714
      %v2716 = vrot.slane %v2577, 1
      %v2717 = vsel %vm413, %v2714, %v2716
      %v2718 = vrot.slane %v2578, 1
      %v2719 = vrot.slane %v2579, 1
      %v2720 = vsel %vm413, %v2718, %v2719
      %v2721 = vrot.slane %v2580, 1
      %v2722 = vsel %vm413, %v2719, %v2721
      %v2723 = vrot.slane %v2581, 1
      %v2724 = vrot.slane %v2582, 1
      %v2725 = vsel %vm413, %v2723, %v2724
      %v2726 = vrot.slane %v2583, 1
      %v2727 = vsel %vm413, %v2724, %v2726
      %v2728 = vrot.slane %v2584, 1
      %v2729 = vrot.slane %v2585, 1
      %v2730 = vsel %vm413, %v2728, %v2729
      %v2731 = vrot.slane %v2586, 1
      %v2732 = vsel %vm413, %v2729, %v2731
      %v2733 = vrot.slane %v2587, 1
      %v2734 = vrot.slane %v2588, 1
      %v2735 = vsel %vm413, %v2733, %v2734
      %v2736 = vrot.slane %v2589, 1
      %v2737 = vsel %vm413, %v2734, %v2736
      %v2738 = vrot.slane %v2590, 1
      %v2739 = vrot.slane %v2591, 1
      %v2740 = vsel %vm413, %v2738, %v2739
      %v2741 = vrot.slane %v2592, 1
      %v2742 = vsel %vm413, %v2739, %v2741
      %v2743 = vrot.slane %v2593, 1
      %v2744 = vrot.slane %v2594, 1
      %v2745 = vsel %vm413, %v2743, %v2744
      %v2746 = vrot.slane %v2595, 1
      %v2747 = vsel %vm413, %v2744, %v2746
      %v2748 = vrot.slane %v2596, 1
      %v2749 = vrot.slane %v2597, 1
      %v2750 = vsel %vm413, %v2748, %v2749
      %v2751 = vrot.slane %v2598, 1
      %v2752 = vsel %vm413, %v2749, %v2751
      %v2753 = vrot.slane %v2599, 1
      %v2754 = vrot.slane %v2600, 1
      %v2755 = vsel %vm413, %v2753, %v2754
      %v2756 = vrot.slane %v2601, 1
      %v2757 = vsel %vm413, %v2754, %v2756
      %v2758 = vrot.slane %v2602, 1
      %v2759 = vrot.slane %v2603, 1
      %v2760 = vsel %vm413, %v2758, %v2759
      %v2761 = vrot.slane %v2604, 1
      %v2762 = vsel %vm413, %v2759, %v2761
      %v2763 = vrot.slane %v2605, 1
      %v2764 = vrot.slane %v2606, 1
      %v2765 = vsel %vm413, %v2763, %v2764
      %v2766 = vrot.slane %v2607, 1
      %v2767 = vsel %vm413, %v2764, %v2766
      %v2768 = vrot.slane %v2608, 1
      %v2769 = vrot.slane %v2609, 1
      %v2770 = vsel %vm413, %v2768, %v2769
      %v2771 = vrot.slane %v2610, 1
      %v2772 = vsel %vm413, %v2769, %v2771
      %v2773 = vrot.slane %v2611, 1
      %v2774 = vrot.slane %v2612, 1
      %v2775 = vsel %vm413, %v2773, %v2774
      %v2776 = vrot.slane %v2613, 1
      %v2777 = vsel %vm413, %v2774, %v2776
      %v2778 = vrot.slane %v2614, 1
      %v2779 = vrot.slane %v2615, 1
      %v2780 = vsel %vm413, %v2778, %v2779
      %v2781 = vrot.slane %v2616, 1
      %v2782 = vsel %vm413, %v2779, %v2781
      %2815 = vst [vmem:[#allocation4 + $0x8] sm:$0xff] %v2705
      %2816 = vst [vmem:[#allocation4 + $0x50] sm:$0xff] %v2707
      %2817 = vst [vmem:[#allocation4 + $0x98] sm:$0xff] %v2710
      %2818 = vst [vmem:[#allocation4 + $0xe0] sm:$0xff] %v2712
      %2819 = vst [vmem:[#allocation4 + $0x128] sm:$0xff] %v2715
      %2820 = vst [vmem:[#allocation4 + $0x170] sm:$0xff] %v2717
      %2821 = vst [vmem:[#allocation4 + $0x1b8] sm:$0xff] %v2720
      %2822 = vst [vmem:[#allocation4 + $0x200] sm:$0xff] %v2722
      %2823 = vst [vmem:[#allocation4 + $0x248] sm:$0xff] %v2725
      %2824 = vst [vmem:[#allocation4 + $0x290] sm:$0xff] %v2727
      %2825 = vst [vmem:[#allocation4 + $0x2d8] sm:$0xff] %v2730
      %2826 = vst [vmem:[#allocation4 + $0x320] sm:$0xff] %v2732
      %2827 = vst [vmem:[#allocation4 + $0x368] sm:$0xff] %v2735
      %2828 = vst [vmem:[#allocation4 + $0x3b0] sm:$0xff] %v2737
      %2829 = vst [vmem:[#allocation4 + $0x3f8] sm:$0xff] %v2740
      %2830 = vst [vmem:[#allocation4 + $0x440] sm:$0xff] %v2742
      %2831 = vst [vmem:[#allocation4 + $0x488] sm:$0xff] %v2745
      %2832 = vst [vmem:[#allocation4 + $0x4d0] sm:$0xff] %v2747
      %2833 = vst [vmem:[#allocation4 + $0x518] sm:$0xff] %v2750
      %2834 = vst [vmem:[#allocation4 + $0x560] sm:$0xff] %v2752
      %2835 = vst [vmem:[#allocation4 + $0x5a8] sm:$0xff] %v2755
      %2836 = vst [vmem:[#allocation4 + $0x5f0] sm:$0xff] %v2757
      %2837 = vst [vmem:[#allocation4 + $0x638] sm:$0xff] %v2760
      %2838 = vst [vmem:[#allocation4 + $0x680] sm:$0xff] %v2762
      %2839 = vst [vmem:[#allocation4 + $0x6c8] sm:$0xff] %v2765
      %2840 = vst [vmem:[#allocation4 + $0x710] sm:$0xff] %v2767
      %2841 = vst [vmem:[#allocation4 + $0x758] sm:$0xff] %v2770
      %2842 = vst [vmem:[#allocation4 + $0x7a0] sm:$0xff] %v2772
      %2843 = vst [vmem:[#allocation4 + $0x7e8] sm:$0xff] %v2775
      %2844 = vst [vmem:[#allocation4 + $0x830] sm:$0xff] %v2777
      %2845 = vst [vmem:[#allocation4 + $0x878] sm:$0xff] %v2780
      %2846 = vst [vmem:[#allocation4 + $0x8c0] sm:$0xff] %v2782
      %v2847 = vrot.slane %v2569, 2
      %v2848 = vrot.slane %v2570, 2
      %v2849 = vsel %vm558, %v2847, %v2848
      %v2850 = vrot.slane %v2571, 2
      %v2851 = vsel %vm558, %v2848, %v2850
      %v2852 = vrot.slane %v2572, 2
      %v2853 = vrot.slane %v2573, 2
      %v2854 = vsel %vm558, %v2852, %v2853
      %v2855 = vrot.slane %v2574, 2
      %v2856 = vsel %vm558, %v2853, %v2855
      %v2857 = vrot.slane %v2575, 2
      %v2858 = vrot.slane %v2576, 2
      %v2859 = vsel %vm558, %v2857, %v2858
      %v2860 = vrot.slane %v2577, 2
      %v2861 = vsel %vm558, %v2858, %v2860
      %v2862 = vrot.slane %v2578, 2
      %v2863 = vrot.slane %v2579, 2
      %v2864 = vsel %vm558, %v2862, %v2863
      %v2865 = vrot.slane %v2580, 2
      %v2866 = vsel %vm558, %v2863, %v2865
      %v2867 = vrot.slane %v2581, 2
      %v2868 = vrot.slane %v2582, 2
      %v2869 = vsel %vm558, %v2867, %v2868
      %v2870 = vrot.slane %v2583, 2
      %v2871 = vsel %vm558, %v2868, %v2870
      %v2872 = vrot.slane %v2584, 2
      %v2873 = vrot.slane %v2585, 2
      %v2874 = vsel %vm558, %v2872, %v2873
      %v2875 = vrot.slane %v2586, 2
      %v2876 = vsel %vm558, %v2873, %v2875
      %v2877 = vrot.slane %v2587, 2
      %v2878 = vrot.slane %v2588, 2
      %v2879 = vsel %vm558, %v2877, %v2878
      %v2880 = vrot.slane %v2589, 2
      %v2881 = vsel %vm558, %v2878, %v2880
      %v2882 = vrot.slane %v2590, 2
      %v2883 = vrot.slane %v2591, 2
      %v2884 = vsel %vm558, %v2882, %v2883
      %v2885 = vrot.slane %v2592, 2
      %v2886 = vsel %vm558, %v2883, %v2885
      %v2887 = vrot.slane %v2593, 2
      %v2888 = vrot.slane %v2594, 2
      %v2889 = vsel %vm558, %v2887, %v2888
      %v2890 = vrot.slane %v2595, 2
      %v2891 = vsel %vm558, %v2888, %v2890
      %v2892 = vrot.slane %v2596, 2
      %v2893 = vrot.slane %v2597, 2
      %v2894 = vsel %vm558, %v2892, %v2893
      %v2895 = vrot.slane %v2598, 2
      %v2896 = vsel %vm558, %v2893, %v2895
      %v2897 = vrot.slane %v2599, 2
      %v2898 = vrot.slane %v2600, 2
      %v2899 = vsel %vm558, %v2897, %v2898
      %v2900 = vrot.slane %v2601, 2
      %v2901 = vsel %vm558, %v2898, %v2900
      %v2902 = vrot.slane %v2602, 2
      %v2903 = vrot.slane %v2603, 2
      %v2904 = vsel %vm558, %v2902, %v2903
      %v2905 = vrot.slane %v2604, 2
      %v2906 = vsel %vm558, %v2903, %v2905
      %v2907 = vrot.slane %v2605, 2
      %v2908 = vrot.slane %v2606, 2
      %v2909 = vsel %vm558, %v2907, %v2908
      %v2910 = vrot.slane %v2607, 2
      %v2911 = vsel %vm558, %v2908, %v2910
      %v2912 = vrot.slane %v2608, 2
      %v2913 = vrot.slane %v2609, 2
      %v2914 = vsel %vm558, %v2912, %v2913
      %v2915 = vrot.slane %v2610, 2
      %v2916 = vsel %vm558, %v2913, %v2915
      %v2917 = vrot.slane %v2611, 2
      %v2918 = vrot.slane %v2612, 2
      %v2919 = vsel %vm558, %v2917, %v2918
      %v2920 = vrot.slane %v2613, 2
      %v2921 = vsel %vm558, %v2918, %v2920
      %v2922 = vrot.slane %v2614, 2
      %v2923 = vrot.slane %v2615, 2
      %v2924 = vsel %vm558, %v2922, %v2923
      %v2925 = vrot.slane %v2616, 2
      %v2926 = vsel %vm558, %v2923, %v2925
      %2959 = vst [vmem:[#allocation4 + $0x10] sm:$0xff] %v2849
      %2960 = vst [vmem:[#allocation4 + $0x58] sm:$0xff] %v2851
      %2961 = vst [vmem:[#allocation4 + $0xa0] sm:$0xff] %v2854
      %2962 = vst [vmem:[#allocation4 + $0xe8] sm:$0xff] %v2856
      %2963 = vst [vmem:[#allocation4 + $0x130] sm:$0xff] %v2859
      %2964 = vst [vmem:[#allocation4 + $0x178] sm:$0xff] %v2861
      %2965 = vst [vmem:[#allocation4 + $0x1c0] sm:$0xff] %v2864
      %2966 = vst [vmem:[#allocation4 + $0x208] sm:$0xff] %v2866
      %2967 = vst [vmem:[#allocation4 + $0x250] sm:$0xff] %v2869
      %2968 = vst [vmem:[#allocation4 + $0x298] sm:$0xff] %v2871
      %2969 = vst [vmem:[#allocation4 + $0x2e0] sm:$0xff] %v2874
      %2970 = vst [vmem:[#allocation4 + $0x328] sm:$0xff] %v2876
      %2971 = vst [vmem:[#allocation4 + $0x370] sm:$0xff] %v2879
      %2972 = vst [vmem:[#allocation4 + $0x3b8] sm:$0xff] %v2881
      %2973 = vst [vmem:[#allocation4 + $0x400] sm:$0xff] %v2884
      %2974 = vst [vmem:[#allocation4 + $0x448] sm:$0xff] %v2886
      %2975 = vst [vmem:[#allocation4 + $0x490] sm:$0xff] %v2889
      %2976 = vst [vmem:[#allocation4 + $0x4d8] sm:$0xff] %v2891
      %2977 = vst [vmem:[#allocation4 + $0x520] sm:$0xff] %v2894
      %2978 = vst [vmem:[#allocation4 + $0x568] sm:$0xff] %v2896
      %2979 = vst [vmem:[#allocation4 + $0x5b0] sm:$0xff] %v2899
      %2980 = vst [vmem:[#allocation4 + $0x5f8] sm:$0xff] %v2901
      %2981 = vst [vmem:[#allocation4 + $0x640] sm:$0xff] %v2904
      %2982 = vst [vmem:[#allocation4 + $0x688] sm:$0xff] %v2906
      %2983 = vst [vmem:[#allocation4 + $0x6d0] sm:$0xff] %v2909
      %2984 = vst [vmem:[#allocation4 + $0x718] sm:$0xff] %v2911
      %2985 = vst [vmem:[#allocation4 + $0x760] sm:$0xff] %v2914
      %2986 = vst [vmem:[#allocation4 + $0x7a8] sm:$0xff] %v2916
      %2987 = vst [vmem:[#allocation4 + $0x7f0] sm:$0xff] %v2919
      %2988 = vst [vmem:[#allocation4 + $0x838] sm:$0xff] %v2921
      %2989 = vst [vmem:[#allocation4 + $0x880] sm:$0xff] %v2924
      %2990 = vst [vmem:[#allocation4 + $0x8c8] sm:$0xff] %v2926
      %2991 = vst [vmem:[#allocation4 + $0x18] sm:$0xff] %v2572
      %2992 = vst [vmem:[#allocation4 + $0x60] sm:$0xff] %v2573
      %2993 = vst [vmem:[#allocation4 + $0xa8] sm:$0xff] %v2575
      %2994 = vst [vmem:[#allocation4 + $0xf0] sm:$0xff] %v2576
      %2995 = vst [vmem:[#allocation4 + $0x138] sm:$0xff] %v2578
      %2996 = vst [vmem:[#allocation4 + $0x180] sm:$0xff] %v2579
      %2997 = vst [vmem:[#allocation4 + $0x1c8] sm:$0xff] %v2581
      %2998 = vst [vmem:[#allocation4 + $0x210] sm:$0xff] %v2582
      %2999 = vst [vmem:[#allocation4 + $0x258] sm:$0xff] %v2584
      %3000 = vst [vmem:[#allocation4 + $0x2a0] sm:$0xff] %v2585
      %3001 = vst [vmem:[#allocation4 + $0x2e8] sm:$0xff] %v2587
      %3002 = vst [vmem:[#allocation4 + $0x330] sm:$0xff] %v2588
      %3003 = vst [vmem:[#allocation4 + $0x378] sm:$0xff] %v2590
      %3004 = vst [vmem:[#allocation4 + $0x3c0] sm:$0xff] %v2591
      %3005 = vst [vmem:[#allocation4 + $0x408] sm:$0xff] %v2593
      %3006 = vst [vmem:[#allocation4 + $0x450] sm:$0xff] %v2594
      %3007 = vst [vmem:[#allocation4 + $0x498] sm:$0xff] %v2596
      %3008 = vst [vmem:[#allocation4 + $0x4e0] sm:$0xff] %v2597
      %3009 = vst [vmem:[#allocation4 + $0x528] sm:$0xff] %v2599
      %3010 = vst [vmem:[#allocation4 + $0x570] sm:$0xff] %v2600
      %3011 = vst [vmem:[#allocation4 + $0x5b8] sm:$0xff] %v2602
      %3012 = vst [vmem:[#allocation4 + $0x600] sm:$0xff] %v2603
      %3013 = vst [vmem:[#allocation4 + $0x648] sm:$0xff] %v2605
      %3014 = vst [vmem:[#allocation4 + $0x690] sm:$0xff] %v2606
      %3015 = vst [vmem:[#allocation4 + $0x6d8] sm:$0xff] %v2608
      %3016 = vst [vmem:[#allocation4 + $0x720] sm:$0xff] %v2609
      %3017 = vst [vmem:[#allocation4 + $0x768] sm:$0xff] %v2611
      %3018 = vst [vmem:[#allocation4 + $0x7b0] sm:$0xff] %v2612
      %3019 = vst [vmem:[#allocation4 + $0x7f8] sm:$0xff] %v2614
      %3020 = vst [vmem:[#allocation4 + $0x840] sm:$0xff] %v2615
      %3021 = vst [vmem:[#allocation4 + $0x888] sm:$0xff] %v2617
      %3022 = vst [vmem:[#allocation4 + $0x8d0] sm:$0xff] %v2618
      %v3026 = vrot.slane %v2617, 1
      %v3027 = vrot.slane %v2618, 1
      %v3028 = vsel %vm413, %v3026, %v3027
      %v3029 = vrot.slane %v2619, 1
      %v3030 = vsel %vm413, %v3027, %v3029
      %3033 = vst [vmem:[#allocation4 + $0x20] sm:$0xff] %v2710
      %3034 = vst [vmem:[#allocation4 + $0x68] sm:$0xff] %v2712
      %3035 = vst [vmem:[#allocation4 + $0xb0] sm:$0xff] %v2715
      %3036 = vst [vmem:[#allocation4 + $0xf8] sm:$0xff] %v2717
      %3037 = vst [vmem:[#allocation4 + $0x140] sm:$0xff] %v2720
      %3038 = vst [vmem:[#allocation4 + $0x188] sm:$0xff] %v2722
      %3039 = vst [vmem:[#allocation4 + $0x1d0] sm:$0xff] %v2725
      %3040 = vst [vmem:[#allocation4 + $0x218] sm:$0xff] %v2727
      %3041 = vst [vmem:[#allocation4 + $0x260] sm:$0xff] %v2730
      %3042 = vst [vmem:[#allocation4 + $0x2a8] sm:$0xff] %v2732
      %3043 = vst [vmem:[#allocation4 + $0x2f0] sm:$0xff] %v2735
      %3044 = vst [vmem:[#allocation4 + $0x338] sm:$0xff] %v2737
      %3045 = vst [vmem:[#allocation4 + $0x380] sm:$0xff] %v2740
      %3046 = vst [vmem:[#allocation4 + $0x3c8] sm:$0xff] %v2742
      %3047 = vst [vmem:[#allocation4 + $0x410] sm:$0xff] %v2745
      %3048 = vst [vmem:[#allocation4 + $0x458] sm:$0xff] %v2747
      %3049 = vst [vmem:[#allocation4 + $0x4a0] sm:$0xff] %v2750
      %3050 = vst [vmem:[#allocation4 + $0x4e8] sm:$0xff] %v2752
      %3051 = vst [vmem:[#allocation4 + $0x530] sm:$0xff] %v2755
      %3052 = vst [vmem:[#allocation4 + $0x578] sm:$0xff] %v2757
      %3053 = vst [vmem:[#allocation4 + $0x5c0] sm:$0xff] %v2760
      %3054 = vst [vmem:[#allocation4 + $0x608] sm:$0xff] %v2762
      %3055 = vst [vmem:[#allocation4 + $0x650] sm:$0xff] %v2765
      %3056 = vst [vmem:[#allocation4 + $0x698] sm:$0xff] %v2767
      %3057 = vst [vmem:[#allocation4 + $0x6e0] sm:$0xff] %v2770
      %3058 = vst [vmem:[#allocation4 + $0x728] sm:$0xff] %v2772
      %3059 = vst [vmem:[#allocation4 + $0x770] sm:$0xff] %v2775
      %3060 = vst [vmem:[#allocation4 + $0x7b8] sm:$0xff] %v2777
      %3061 = vst [vmem:[#allocation4 + $0x800] sm:$0xff] %v2780
      %3062 = vst [vmem:[#allocation4 + $0x848] sm:$0xff] %v2782
      %3063 = vst [vmem:[#allocation4 + $0x890] sm:$0xff] %v3028
      %3064 = vst [vmem:[#allocation4 + $0x8d8] sm:$0xff] %v3030
      %v3065 = vrot.slane %v2617, 2
      %v3066 = vrot.slane %v2618, 2
      %v3067 = vsel %vm558, %v3065, %v3066
      %v3068 = vrot.slane %v2619, 2
      %v3069 = vsel %vm558, %v3066, %v3068
      %3072 = vst [vmem:[#allocation4 + $0x28] sm:$0xff] %v2854
      %3073 = vst [vmem:[#allocation4 + $0x70] sm:$0xff] %v2856
      %3074 = vst [vmem:[#allocation4 + $0xb8] sm:$0xff] %v2859
      %3075 = vst [vmem:[#allocation4 + $0x100] sm:$0xff] %v2861
      %3076 = vst [vmem:[#allocation4 + $0x148] sm:$0xff] %v2864
      %3077 = vst [vmem:[#allocation4 + $0x190] sm:$0xff] %v2866
      %3078 = vst [vmem:[#allocation4 + $0x1d8] sm:$0xff] %v2869
      %3079 = vst [vmem:[#allocation4 + $0x220] sm:$0xff] %v2871
      %3080 = vst [vmem:[#allocation4 + $0x268] sm:$0xff] %v2874
      %3081 = vst [vmem:[#allocation4 + $0x2b0] sm:$0xff] %v2876
      %3082 = vst [vmem:[#allocation4 + $0x2f8] sm:$0xff] %v2879
      %3083 = vst [vmem:[#allocation4 + $0x340] sm:$0xff] %v2881
      %3084 = vst [vmem:[#allocation4 + $0x388] sm:$0xff] %v2884
      %3085 = vst [vmem:[#allocation4 + $0x3d0] sm:$0xff] %v2886
      %3086 = vst [vmem:[#allocation4 + $0x418] sm:$0xff] %v2889
      %3087 = vst [vmem:[#allocation4 + $0x460] sm:$0xff] %v2891
      %3088 = vst [vmem:[#allocation4 + $0x4a8] sm:$0xff] %v2894
      %3089 = vst [vmem:[#allocation4 + $0x4f0] sm:$0xff] %v2896
      %3090 = vst [vmem:[#allocation4 + $0x538] sm:$0xff] %v2899
      %3091 = vst [vmem:[#allocation4 + $0x580] sm:$0xff] %v2901
      %3092 = vst [vmem:[#allocation4 + $0x5c8] sm:$0xff] %v2904
      %3093 = vst [vmem:[#allocation4 + $0x610] sm:$0xff] %v2906
      %3094 = vst [vmem:[#allocation4 + $0x658] sm:$0xff] %v2909
      %3095 = vst [vmem:[#allocation4 + $0x6a0] sm:$0xff] %v2911
      %3096 = vst [vmem:[#allocation4 + $0x6e8] sm:$0xff] %v2914
      %3097 = vst [vmem:[#allocation4 + $0x730] sm:$0xff] %v2916
      %3098 = vst [vmem:[#allocation4 + $0x778] sm:$0xff] %v2919
      %3099 = vst [vmem:[#allocation4 + $0x7c0] sm:$0xff] %v2921
      %3100 = vst [vmem:[#allocation4 + $0x808] sm:$0xff] %v2924
      %3101 = vst [vmem:[#allocation4 + $0x850] sm:$0xff] %v2926
      %3102 = vst [vmem:[#allocation4 + $0x898] sm:$0xff] %v3067
      %3103 = vst [vmem:[#allocation4 + $0x8e0] sm:$0xff] %v3069
      %3104 = vst [vmem:[#allocation4 + $0x30] sm:$0xff] %v2575
      %3105 = vst [vmem:[#allocation4 + $0x78] sm:$0xff] %v2576
      %3106 = vst [vmem:[#allocation4 + $0xc0] sm:$0xff] %v2578
      %3107 = vst [vmem:[#allocation4 + $0x108] sm:$0xff] %v2579
      %3108 = vst [vmem:[#allocation4 + $0x150] sm:$0xff] %v2581
      %3109 = vst [vmem:[#allocation4 + $0x198] sm:$0xff] %v2582
      %3110 = vst [vmem:[#allocation4 + $0x1e0] sm:$0xff] %v2584
      %3111 = vst [vmem:[#allocation4 + $0x228] sm:$0xff] %v2585
      %3112 = vst [vmem:[#allocation4 + $0x270] sm:$0xff] %v2587
      %3113 = vst [vmem:[#allocation4 + $0x2b8] sm:$0xff] %v2588
      %3114 = vst [vmem:[#allocation4 + $0x300] sm:$0xff] %v2590
      %3115 = vst [vmem:[#allocation4 + $0x348] sm:$0xff] %v2591
      %3116 = vst [vmem:[#allocation4 + $0x390] sm:$0xff] %v2593
      %3117 = vst [vmem:[#allocation4 + $0x3d8] sm:$0xff] %v2594
      %3118 = vst [vmem:[#allocation4 + $0x420] sm:$0xff] %v2596
      %3119 = vst [vmem:[#allocation4 + $0x468] sm:$0xff] %v2597
      %3120 = vst [vmem:[#allocation4 + $0x4b0] sm:$0xff] %v2599
      %3121 = vst [vmem:[#allocation4 + $0x4f8] sm:$0xff] %v2600
      %3122 = vst [vmem:[#allocation4 + $0x540] sm:$0xff] %v2602
      %3123 = vst [vmem:[#allocation4 + $0x588] sm:$0xff] %v2603
      %3124 = vst [vmem:[#allocation4 + $0x5d0] sm:$0xff] %v2605
      %3125 = vst [vmem:[#allocation4 + $0x618] sm:$0xff] %v2606
      %3126 = vst [vmem:[#allocation4 + $0x660] sm:$0xff] %v2608
      %3127 = vst [vmem:[#allocation4 + $0x6a8] sm:$0xff] %v2609
      %3128 = vst [vmem:[#allocation4 + $0x6f0] sm:$0xff] %v2611
      %3129 = vst [vmem:[#allocation4 + $0x738] sm:$0xff] %v2612
      %3130 = vst [vmem:[#allocation4 + $0x780] sm:$0xff] %v2614
      %3131 = vst [vmem:[#allocation4 + $0x7c8] sm:$0xff] %v2615
      %3132 = vst [vmem:[#allocation4 + $0x810] sm:$0xff] %v2617
      %3133 = vst [vmem:[#allocation4 + $0x858] sm:$0xff] %v2618
      %3134 = vst [vmem:[#allocation4 + $0x8a0] sm:$0xff] %v2620
      %3135 = vst [vmem:[#allocation4 + $0x8e8] sm:$0xff] %v2621
      %v3139 = vrot.slane %v2620, 1
      %v3140 = vrot.slane %v2621, 1
      %v3141 = vsel %vm413, %v3139, %v3140
      %v3142 = vrot.slane %v2622, 1
      %v3143 = vsel %vm413, %v3140, %v3142
      %3146 = vst [vmem:[#allocation4 + $0x38] sm:$0xff] %v2715
      %3147 = vst [vmem:[#allocation4 + $0x80] sm:$0xff] %v2717
      %3148 = vst [vmem:[#allocation4 + $0xc8] sm:$0xff] %v2720
      %3149 = vst [vmem:[#allocation4 + $0x110] sm:$0xff] %v2722
      %3150 = vst [vmem:[#allocation4 + $0x158] sm:$0xff] %v2725
      %3151 = vst [vmem:[#allocation4 + $0x1a0] sm:$0xff] %v2727
      %3152 = vst [vmem:[#allocation4 + $0x1e8] sm:$0xff] %v2730
      %3153 = vst [vmem:[#allocation4 + $0x230] sm:$0xff] %v2732
      %3154 = vst [vmem:[#allocation4 + $0x278] sm:$0xff] %v2735
      %3155 = vst [vmem:[#allocation4 + $0x2c0] sm:$0xff] %v2737
      %3156 = vst [vmem:[#allocation4 + $0x308] sm:$0xff] %v2740
      %3157 = vst [vmem:[#allocation4 + $0x350] sm:$0xff] %v2742
      %3158 = vst [vmem:[#allocation4 + $0x398] sm:$0xff] %v2745
      %3159 = vst [vmem:[#allocation4 + $0x3e0] sm:$0xff] %v2747
      %3160 = vst [vmem:[#allocation4 + $0x428] sm:$0xff] %v2750
      %3161 = vst [vmem:[#allocation4 + $0x470] sm:$0xff] %v2752
      %3162 = vst [vmem:[#allocation4 + $0x4b8] sm:$0xff] %v2755
      %3163 = vst [vmem:[#allocation4 + $0x500] sm:$0xff] %v2757
      %3164 = vst [vmem:[#allocation4 + $0x548] sm:$0xff] %v2760
      %3165 = vst [vmem:[#allocation4 + $0x590] sm:$0xff] %v2762
      %3166 = vst [vmem:[#allocation4 + $0x5d8] sm:$0xff] %v2765
      %3167 = vst [vmem:[#allocation4 + $0x620] sm:$0xff] %v2767
      %3168 = vst [vmem:[#allocation4 + $0x668] sm:$0xff] %v2770
      %3169 = vst [vmem:[#allocation4 + $0x6b0] sm:$0xff] %v2772
      %3170 = vst [vmem:[#allocation4 + $0x6f8] sm:$0xff] %v2775
      %3171 = vst [vmem:[#allocation4 + $0x740] sm:$0xff] %v2777
      %3172 = vst [vmem:[#allocation4 + $0x788] sm:$0xff] %v2780
      %3173 = vst [vmem:[#allocation4 + $0x7d0] sm:$0xff] %v2782
      %3174 = vst [vmem:[#allocation4 + $0x818] sm:$0xff] %v3028
      %3175 = vst [vmem:[#allocation4 + $0x860] sm:$0xff] %v3030
      %3176 = vst [vmem:[#allocation4 + $0x8a8] sm:$0xff] %v3141
      %3177 = vst [vmem:[#allocation4 + $0x8f0] sm:$0xff] %v3143
      %v3178 = vrot.slane %v2620, 2
      %v3179 = vrot.slane %v2621, 2
      %v3180 = vsel %vm558, %v3178, %v3179
      %v3181 = vrot.slane %v2622, 2
      %v3182 = vsel %vm558, %v3179, %v3181
      %3185 = vst [vmem:[#allocation4 + $0x40] sm:$0xff] %v2859
      %3186 = vst [vmem:[#allocation4 + $0x88] sm:$0xff] %v2861
      %3187 = vst [vmem:[#allocation4 + $0xd0] sm:$0xff] %v2864
      %3188 = vst [vmem:[#allocation4 + $0x118] sm:$0xff] %v2866
      %3189 = vst [vmem:[#allocation4 + $0x160] sm:$0xff] %v2869
      %3190 = vst [vmem:[#allocation4 + $0x1a8] sm:$0xff] %v2871
      %3191 = vst [vmem:[#allocation4 + $0x1f0] sm:$0xff] %v2874
      %3192 = vst [vmem:[#allocation4 + $0x238] sm:$0xff] %v2876
      %3193 = vst [vmem:[#allocation4 + $0x280] sm:$0xff] %v2879
      %3194 = vst [vmem:[#allocation4 + $0x2c8] sm:$0xff] %v2881
      %3195 = vst [vmem:[#allocation4 + $0x310] sm:$0xff] %v2884
      %3196 = vst [vmem:[#allocation4 + $0x358] sm:$0xff] %v2886
      %3197 = vst [vmem:[#allocation4 + $0x3a0] sm:$0xff] %v2889
      %3198 = vst [vmem:[#allocation4 + $0x3e8] sm:$0xff] %v2891
      %3199 = vst [vmem:[#allocation4 + $0x430] sm:$0xff] %v2894
      %3200 = vst [vmem:[#allocation4 + $0x478] sm:$0xff] %v2896
      %3201 = vst [vmem:[#allocation4 + $0x4c0] sm:$0xff] %v2899
      %3202 = vst [vmem:[#allocation4 + $0x508] sm:$0xff] %v2901
      %3203 = vst [vmem:[#allocation4 + $0x550] sm:$0xff] %v2904
      %3204 = vst [vmem:[#allocation4 + $0x598] sm:$0xff] %v2906
      %3205 = vst [vmem:[#allocation4 + $0x5e0] sm:$0xff] %v2909
      %3206 = vst [vmem:[#allocation4 + $0x628] sm:$0xff] %v2911
      %3207 = vst [vmem:[#allocation4 + $0x670] sm:$0xff] %v2914
      %3208 = vst [vmem:[#allocation4 + $0x6b8] sm:$0xff] %v2916
      %3209 = vst [vmem:[#allocation4 + $0x700] sm:$0xff] %v2919
      %3210 = vst [vmem:[#allocation4 + $0x748] sm:$0xff] %v2921
      %3211 = vst [vmem:[#allocation4 + $0x790] sm:$0xff] %v2924
      %3212 = vst [vmem:[#allocation4 + $0x7d8] sm:$0xff] %v2926
      %3213 = vst [vmem:[#allocation4 + $0x820] sm:$0xff] %v3067
      %3214 = vst [vmem:[#allocation4 + $0x868] sm:$0xff] %v3069
      %3215 = vst [vmem:[#allocation4 + $0x8b0] sm:$0xff] %v3180
      %3216 = vst [vmem:[#allocation4 + $0x8f8] sm:$0xff] %v3182
      %v3217 = vld [vmem:[#allocation4] sm:$0xff]
      %v3218 = vld [vmem:[#allocation4 + $0x8] sm:$0xff]
      %v3219 = vld [vmem:[#allocation4 + $0x10] sm:$0xff]
      %v3220 = vld [vmem:[#allocation4 + $0x18] sm:$0xff]
      %v3221 = vld [vmem:[#allocation4 + $0x20] sm:$0xff]
      %v3222 = vld [vmem:[#allocation4 + $0x28] sm:$0xff]
      %v3223 = vld [vmem:[#allocation4 + $0x30] sm:$0xff]
      %v3224 = vld [vmem:[#allocation4 + $0x38] sm:$0xff]
      %v3225 = vld [vmem:[#allocation4 + $0x40] sm:$0xff]
      %v3226 = vld [vmem:[#allocation4 + $0x48] sm:$0xff]
      %v3227 = vld [vmem:[#allocation4 + $0x50] sm:$0xff]
      %v3228 = vld [vmem:[#allocation4 + $0x58] sm:$0xff]
      %v3229 = vld [vmem:[#allocation4 + $0x60] sm:$0xff]
      %v3230 = vld [vmem:[#allocation4 + $0x68] sm:$0xff]
      %v3231 = vld [vmem:[#allocation4 + $0x70] sm:$0xff]
      %v3232 = vld [vmem:[#allocation4 + $0x78] sm:$0xff]
      %v3233 = vld [vmem:[#allocation4 + $0x80] sm:$0xff]
      %v3234 = vld [vmem:[#allocation4 + $0x88] sm:$0xff]
      %v3235 = vld [vmem:[#allocation4 + $0x90] sm:$0xff]
      %v3236 = vld [vmem:[#allocation4 + $0x98] sm:$0xff]
      %v3237 = vld [vmem:[#allocation4 + $0xa0] sm:$0xff]
      %v3238 = vld [vmem:[#allocation4 + $0xa8] sm:$0xff]
      %v3239 = vld [vmem:[#allocation4 + $0xb0] sm:$0xff]
      %v3240 = vld [vmem:[#allocation4 + $0xb8] sm:$0xff]
      %v3241 = vld [vmem:[#allocation4 + $0xc0] sm:$0xff]
      %v3242 = vld [vmem:[#allocation4 + $0xc8] sm:$0xff]
      %v3243 = vld [vmem:[#allocation4 + $0xd0] sm:$0xff]
      %v3244 = vld [vmem:[#allocation4 + $0xd8] sm:$0xff]
      %v3245 = vld [vmem:[#allocation4 + $0xe0] sm:$0xff]
      %v3246 = vld [vmem:[#allocation4 + $0xe8] sm:$0xff]
      %v3247 = vld [vmem:[#allocation4 + $0xf0] sm:$0xff]
      %v3248 = vld [vmem:[#allocation4 + $0xf8] sm:$0xff]
      %v3249 = vld [vmem:[#allocation4 + $0x100] sm:$0xff]
      %v3250 = vld [vmem:[#allocation4 + $0x108] sm:$0xff]
      %v3251 = vld [vmem:[#allocation4 + $0x110] sm:$0xff]
      %v3252 = vld [vmem:[#allocation4 + $0x118] sm:$0xff]
      %v3253 = vld [vmem:[#allocation4 + $0x120] sm:$0xff]
      %v3254 = vld [vmem:[#allocation4 + $0x128] sm:$0xff]
      %v3255 = vld [vmem:[#allocation4 + $0x130] sm:$0xff]
      %v3256 = vld [vmem:[#allocation4 + $0x138] sm:$0xff]
      %v3257 = vld [vmem:[#allocation4 + $0x140] sm:$0xff]
      %v3258 = vld [vmem:[#allocation4 + $0x148] sm:$0xff]
      %v3259 = vld [vmem:[#allocation4 + $0x150] sm:$0xff]
      %v3260 = vld [vmem:[#allocation4 + $0x158] sm:$0xff]
      %v3261 = vld [vmem:[#allocation4 + $0x160] sm:$0xff]
      %v3262 = vld [vmem:[#allocation4 + $0x168] sm:$0xff]
      %v3263 = vld [vmem:[#allocation4 + $0x170] sm:$0xff]
      %v3264 = vld [vmem:[#allocation4 + $0x178] sm:$0xff]
      %v3265 = vld [vmem:[#allocation4 + $0x180] sm:$0xff]
      %v3266 = vld [vmem:[#allocation4 + $0x188] sm:$0xff]
      %v3267 = vld [vmem:[#allocation4 + $0x190] sm:$0xff]
      %v3268 = vld [vmem:[#allocation4 + $0x198] sm:$0xff]
      %v3269 = vld [vmem:[#allocation4 + $0x1a0] sm:$0xff]
      %v3270 = vld [vmem:[#allocation4 + $0x1a8] sm:$0xff]
      %v3271 = vld [vmem:[#allocation4 + $0x1b0] sm:$0xff]
      %v3272 = vld [vmem:[#allocation4 + $0x1b8] sm:$0xff]
      %v3273 = vld [vmem:[#allocation4 + $0x1c0] sm:$0xff]
      %v3274 = vld [vmem:[#allocation4 + $0x1c8] sm:$0xff]
      %v3275 = vld [vmem:[#allocation4 + $0x1d0] sm:$0xff]
      %v3276 = vld [vmem:[#allocation4 + $0x1d8] sm:$0xff]
      %v3277 = vld [vmem:[#allocation4 + $0x1e0] sm:$0xff]
      %v3278 = vld [vmem:[#allocation4 + $0x1e8] sm:$0xff]
      %v3279 = vld [vmem:[#allocation4 + $0x1f0] sm:$0xff]
      %v3280 = vld [vmem:[#allocation4 + $0x1f8] sm:$0xff]
      %v3281 = vld [vmem:[#allocation4 + $0x200] sm:$0xff]
      %v3282 = vld [vmem:[#allocation4 + $0x208] sm:$0xff]
      %v3283 = vld [vmem:[#allocation4 + $0x210] sm:$0xff]
      %v3284 = vld [vmem:[#allocation4 + $0x218] sm:$0xff]
      %v3285 = vld [vmem:[#allocation4 + $0x220] sm:$0xff]
      %v3286 = vld [vmem:[#allocation4 + $0x228] sm:$0xff]
      %v3287 = vld [vmem:[#allocation4 + $0x230] sm:$0xff]
      %v3288 = vld [vmem:[#allocation4 + $0x238] sm:$0xff]
      %v3289 = vld [vmem:[#allocation4 + $0x240] sm:$0xff]
      %v3290 = vld [vmem:[#allocation4 + $0x248] sm:$0xff]
      %v3291 = vld [vmem:[#allocation4 + $0x250] sm:$0xff]
      %v3292 = vld [vmem:[#allocation4 + $0x258] sm:$0xff]
      %v3293 = vld [vmem:[#allocation4 + $0x260] sm:$0xff]
      %v3294 = vld [vmem:[#allocation4 + $0x268] sm:$0xff]
      %v3295 = vld [vmem:[#allocation4 + $0x270] sm:$0xff]
      %v3296 = vld [vmem:[#allocation4 + $0x278] sm:$0xff]
      %v3297 = vld [vmem:[#allocation4 + $0x280] sm:$0xff]
      %v3298 = vld [vmem:[#allocation4 + $0x288] sm:$0xff]
      %v3299 = vld [vmem:[#allocation4 + $0x290] sm:$0xff]
      %v3300 = vld [vmem:[#allocation4 + $0x298] sm:$0xff]
      %v3301 = vld [vmem:[#allocation4 + $0x2a0] sm:$0xff]
      %v3302 = vld [vmem:[#allocation4 + $0x2a8] sm:$0xff]
      %v3303 = vld [vmem:[#allocation4 + $0x2b0] sm:$0xff]
      %v3304 = vld [vmem:[#allocation4 + $0x2b8] sm:$0xff]
      %v3305 = vld [vmem:[#allocation4 + $0x2c0] sm:$0xff]
      %v3306 = vld [vmem:[#allocation4 + $0x2c8] sm:$0xff]
      %v3307 = vld [vmem:[#allocation4 + $0x2d0] sm:$0xff]
      %v3308 = vld [vmem:[#allocation4 + $0x2d8] sm:$0xff]
      %v3309 = vld [vmem:[#allocation4 + $0x2e0] sm:$0xff]
      %v3310 = vld [vmem:[#allocation4 + $0x2e8] sm:$0xff]
      %v3311 = vld [vmem:[#allocation4 + $0x2f0] sm:$0xff]
      %v3312 = vld [vmem:[#allocation4 + $0x2f8] sm:$0xff]
      %v3313 = vld [vmem:[#allocation4 + $0x300] sm:$0xff]
      %v3314 = vld [vmem:[#allocation4 + $0x308] sm:$0xff]
      %v3315 = vld [vmem:[#allocation4 + $0x310] sm:$0xff]
      %v3316 = vld [vmem:[#allocation4 + $0x318] sm:$0xff]
      %v3317 = vld [vmem:[#allocation4 + $0x320] sm:$0xff]
      %v3318 = vld [vmem:[#allocation4 + $0x328] sm:$0xff]
      %v3319 = vld [vmem:[#allocation4 + $0x330] sm:$0xff]
      %v3320 = vld [vmem:[#allocation4 + $0x338] sm:$0xff]
      %v3321 = vld [vmem:[#allocation4 + $0x340] sm:$0xff]
      %v3322 = vld [vmem:[#allocation4 + $0x348] sm:$0xff]
      %v3323 = vld [vmem:[#allocation4 + $0x350] sm:$0xff]
      %v3324 = vld [vmem:[#allocation4 + $0x358] sm:$0xff]
      %v3325 = vld [vmem:[#allocation4 + $0x360] sm:$0xff]
      %v3326 = vld [vmem:[#allocation4 + $0x368] sm:$0xff]
      %v3327 = vld [vmem:[#allocation4 + $0x370] sm:$0xff]
      %v3328 = vld [vmem:[#allocation4 + $0x378] sm:$0xff]
      %v3329 = vld [vmem:[#allocation4 + $0x380] sm:$0xff]
      %v3330 = vld [vmem:[#allocation4 + $0x388] sm:$0xff]
      %v3331 = vld [vmem:[#allocation4 + $0x390] sm:$0xff]
      %v3332 = vld [vmem:[#allocation4 + $0x398] sm:$0xff]
      %v3333 = vld [vmem:[#allocation4 + $0x3a0] sm:$0xff]
      %v3334 = vld [vmem:[#allocation4 + $0x3a8] sm:$0xff]
      %v3335 = vld [vmem:[#allocation4 + $0x3b0] sm:$0xff]
      %v3336 = vld [vmem:[#allocation4 + $0x3b8] sm:$0xff]
      %v3337 = vld [vmem:[#allocation4 + $0x3c0] sm:$0xff]
      %v3338 = vld [vmem:[#allocation4 + $0x3c8] sm:$0xff]
      %v3339 = vld [vmem:[#allocation4 + $0x3d0] sm:$0xff]
      %v3340 = vld [vmem:[#allocation4 + $0x3d8] sm:$0xff]
      %v3341 = vld [vmem:[#allocation4 + $0x3e0] sm:$0xff]
      %v3342 = vld [vmem:[#allocation4 + $0x3e8] sm:$0xff]
      %v3343 = vld [vmem:[#allocation4 + $0x3f0] sm:$0xff]
      %v3344 = vld [vmem:[#allocation4 + $0x3f8] sm:$0xff]
      %v3345 = vld [vmem:[#allocation4 + $0x400] sm:$0xff]
      %v3346 = vld [vmem:[#allocation4 + $0x408] sm:$0xff]
      %v3347 = vld [vmem:[#allocation4 + $0x410] sm:$0xff]
      %v3348 = vld [vmem:[#allocation4 + $0x418] sm:$0xff]
      %v3349 = vld [vmem:[#allocation4 + $0x420] sm:$0xff]
      %v3350 = vld [vmem:[#allocation4 + $0x428] sm:$0xff]
      %v3351 = vld [vmem:[#allocation4 + $0x430] sm:$0xff]
      %v3352 = vld [vmem:[#allocation4 + $0x438] sm:$0xff]
      %v3353 = vld [vmem:[#allocation4 + $0x440] sm:$0xff]
      %v3354 = vld [vmem:[#allocation4 + $0x448] sm:$0xff]
      %v3355 = vld [vmem:[#allocation4 + $0x450] sm:$0xff]
      %v3356 = vld [vmem:[#allocation4 + $0x458] sm:$0xff]
      %v3357 = vld [vmem:[#allocation4 + $0x460] sm:$0xff]
      %v3358 = vld [vmem:[#allocation4 + $0x468] sm:$0xff]
      %v3359 = vld [vmem:[#allocation4 + $0x470] sm:$0xff]
      %v3360 = vld [vmem:[#allocation4 + $0x478] sm:$0xff]
      %v3361 = vld [vmem:[#allocation4 + $0x480] sm:$0xff]
      %v3362 = vld [vmem:[#allocation4 + $0x488] sm:$0xff]
      %v3363 = vld [vmem:[#allocation4 + $0x490] sm:$0xff]
      %v3364 = vld [vmem:[#allocation4 + $0x498] sm:$0xff]
      %v3365 = vld [vmem:[#allocation4 + $0x4a0] sm:$0xff]
      %v3366 = vld [vmem:[#allocation4 + $0x4a8] sm:$0xff]
      %v3367 = vld [vmem:[#allocation4 + $0x4b0] sm:$0xff]
      %v3368 = vld [vmem:[#allocation4 + $0x4b8] sm:$0xff]
      %v3369 = vld [vmem:[#allocation4 + $0x4c0] sm:$0xff]
      %v3370 = vld [vmem:[#allocation4 + $0x4c8] sm:$0xff]
      %v3371 = vld [vmem:[#allocation4 + $0x4d0] sm:$0xff]
      %v3372 = vld [vmem:[#allocation4 + $0x4d8] sm:$0xff]
      %v3373 = vld [vmem:[#allocation4 + $0x4e0] sm:$0xff]
      %v3374 = vld [vmem:[#allocation4 + $0x4e8] sm:$0xff]
      %v3375 = vld [vmem:[#allocation4 + $0x4f0] sm:$0xff]
      %v3376 = vld [vmem:[#allocation4 + $0x4f8] sm:$0xff]
      %v3377 = vld [vmem:[#allocation4 + $0x500] sm:$0xff]
      %v3378 = vld [vmem:[#allocation4 + $0x508] sm:$0xff]
      %v3379 = vld [vmem:[#allocation4 + $0x510] sm:$0xff]
      %v3380 = vld [vmem:[#allocation4 + $0x518] sm:$0xff]
      %v3381 = vld [vmem:[#allocation4 + $0x520] sm:$0xff]
      %v3382 = vld [vmem:[#allocation4 + $0x528] sm:$0xff]
      %v3383 = vld [vmem:[#allocation4 + $0x530] sm:$0xff]
      %v3384 = vld [vmem:[#allocation4 + $0x538] sm:$0xff]
      %v3385 = vld [vmem:[#allocation4 + $0x540] sm:$0xff]
      %v3386 = vld [vmem:[#allocation4 + $0x548] sm:$0xff]
      %v3387 = vld [vmem:[#allocation4 + $0x550] sm:$0xff]
      %v3388 = vld [vmem:[#allocation4 + $0x558] sm:$0xff]
      %v3389 = vld [vmem:[#allocation4 + $0x560] sm:$0xff]
      %v3390 = vld [vmem:[#allocation4 + $0x568] sm:$0xff]
      %v3391 = vld [vmem:[#allocation4 + $0x570] sm:$0xff]
      %v3392 = vld [vmem:[#allocation4 + $0x578] sm:$0xff]
      %v3393 = vld [vmem:[#allocation4 + $0x580] sm:$0xff]
      %v3394 = vld [vmem:[#allocation4 + $0x588] sm:$0xff]
      %v3395 = vld [vmem:[#allocation4 + $0x590] sm:$0xff]
      %v3396 = vld [vmem:[#allocation4 + $0x598] sm:$0xff]
      %v3397 = vld [vmem:[#allocation4 + $0x5a0] sm:$0xff]
      %v3398 = vld [vmem:[#allocation4 + $0x5a8] sm:$0xff]
      %v3399 = vld [vmem:[#allocation4 + $0x5b0] sm:$0xff]
      %v3400 = vld [vmem:[#allocation4 + $0x5b8] sm:$0xff]
      %v3401 = vld [vmem:[#allocation4 + $0x5c0] sm:$0xff]
      %v3402 = vld [vmem:[#allocation4 + $0x5c8] sm:$0xff]
      %v3403 = vld [vmem:[#allocation4 + $0x5d0] sm:$0xff]
      %v3404 = vld [vmem:[#allocation4 + $0x5d8] sm:$0xff]
      %v3405 = vld [vmem:[#allocation4 + $0x5e0] sm:$0xff]
      %v3406 = vld [vmem:[#allocation4 + $0x5e8] sm:$0xff]
      %v3407 = vld [vmem:[#allocation4 + $0x5f0] sm:$0xff]
      %v3408 = vld [vmem:[#allocation4 + $0x5f8] sm:$0xff]
      %v3409 = vld [vmem:[#allocation4 + $0x600] sm:$0xff]
      %v3410 = vld [vmem:[#allocation4 + $0x608] sm:$0xff]
      %v3411 = vld [vmem:[#allocation4 + $0x610] sm:$0xff]
      %v3412 = vld [vmem:[#allocation4 + $0x618] sm:$0xff]
      %v3413 = vld [vmem:[#allocation4 + $0x620] sm:$0xff]
      %v3414 = vld [vmem:[#allocation4 + $0x628] sm:$0xff]
      %v3415 = vld [vmem:[#allocation4 + $0x630] sm:$0xff]
      %v3416 = vld [vmem:[#allocation4 + $0x638] sm:$0xff]
      %v3417 = vld [vmem:[#allocation4 + $0x640] sm:$0xff]
      %v3418 = vld [vmem:[#allocation4 + $0x648] sm:$0xff]
      %v3419 = vld [vmem:[#allocation4 + $0x650] sm:$0xff]
      %v3420 = vld [vmem:[#allocation4 + $0x658] sm:$0xff]
      %v3421 = vld [vmem:[#allocation4 + $0x660] sm:$0xff]
      %v3422 = vld [vmem:[#allocation4 + $0x668] sm:$0xff]
      %v3423 = vld [vmem:[#allocation4 + $0x670] sm:$0xff]
      %v3424 = vld [vmem:[#allocation4 + $0x678] sm:$0xff]
      %v3425 = vld [vmem:[#allocation4 + $0x680] sm:$0xff]
      %v3426 = vld [vmem:[#allocation4 + $0x688] sm:$0xff]
      %v3427 = vld [vmem:[#allocation4 + $0x690] sm:$0xff]
      %v3428 = vld [vmem:[#allocation4 + $0x698] sm:$0xff]
      %v3429 = vld [vmem:[#allocation4 + $0x6a0] sm:$0xff]
      %v3430 = vld [vmem:[#allocation4 + $0x6a8] sm:$0xff]
      %v3431 = vld [vmem:[#allocation4 + $0x6b0] sm:$0xff]
      %v3432 = vld [vmem:[#allocation4 + $0x6b8] sm:$0xff]
      %v3433 = vld [vmem:[#allocation4 + $0x6c0] sm:$0xff]
      %v3434 = vld [vmem:[#allocation4 + $0x6c8] sm:$0xff]
      %v3435 = vld [vmem:[#allocation4 + $0x6d0] sm:$0xff]
      %v3436 = vld [vmem:[#allocation4 + $0x6d8] sm:$0xff]
      %v3437 = vld [vmem:[#allocation4 + $0x6e0] sm:$0xff]
      %v3438 = vld [vmem:[#allocation4 + $0x6e8] sm:$0xff]
      %v3439 = vld [vmem:[#allocation4 + $0x6f0] sm:$0xff]
      %v3440 = vld [vmem:[#allocation4 + $0x6f8] sm:$0xff]
      %v3441 = vld [vmem:[#allocation4 + $0x700] sm:$0xff]
      %v3442 = vld [vmem:[#allocation4 + $0x708] sm:$0xff]
      %v3443 = vld [vmem:[#allocation4 + $0x710] sm:$0xff]
      %v3444 = vld [vmem:[#allocation4 + $0x718] sm:$0xff]
      %v3445 = vld [vmem:[#allocation4 + $0x720] sm:$0xff]
      %v3446 = vld [vmem:[#allocation4 + $0x728] sm:$0xff]
      %v3447 = vld [vmem:[#allocation4 + $0x730] sm:$0xff]
      %v3448 = vld [vmem:[#allocation4 + $0x738] sm:$0xff]
      %v3449 = vld [vmem:[#allocation4 + $0x740] sm:$0xff]
      %v3450 = vld [vmem:[#allocation4 + $0x748] sm:$0xff]
      %v3451 = vld [vmem:[#allocation4 + $0x750] sm:$0xff]
      %v3452 = vld [vmem:[#allocation4 + $0x758] sm:$0xff]
      %v3453 = vld [vmem:[#allocation4 + $0x760] sm:$0xff]
      %v3454 = vld [vmem:[#allocation4 + $0x768] sm:$0xff]
      %v3455 = vld [vmem:[#allocation4 + $0x770] sm:$0xff]
      %v3456 = vld [vmem:[#allocation4 + $0x778] sm:$0xff]
      %v3457 = vld [vmem:[#allocation4 + $0x780] sm:$0xff]
      %v3458 = vld [vmem:[#allocation4 + $0x788] sm:$0xff]
      %v3459 = vld [vmem:[#allocation4 + $0x790] sm:$0xff]
      %v3460 = vld [vmem:[#allocation4 + $0x798] sm:$0xff]
      %v3461 = vld [vmem:[#allocation4 + $0x7a0] sm:$0xff]
      %v3462 = vld [vmem:[#allocation4 + $0x7a8] sm:$0xff]
      %v3463 = vld [vmem:[#allocation4 + $0x7b0] sm:$0xff]
      %v3464 = vld [vmem:[#allocation4 + $0x7b8] sm:$0xff]
      %v3465 = vld [vmem:[#allocation4 + $0x7c0] sm:$0xff]
      %v3466 = vld [vmem:[#allocation4 + $0x7c8] sm:$0xff]
      %v3467 = vld [vmem:[#allocation4 + $0x7d0] sm:$0xff]
      %v3468 = vld [vmem:[#allocation4 + $0x7d8] sm:$0xff]
      %v3469 = vld [vmem:[#allocation4 + $0x7e0] sm:$0xff]
      %v3470 = vld [vmem:[#allocation4 + $0x7e8] sm:$0xff]
      %v3471 = vld [vmem:[#allocation4 + $0x7f0] sm:$0xff]
      %v3472 = vld [vmem:[#allocation4 + $0x7f8] sm:$0xff]
      %v3473 = vld [vmem:[#allocation4 + $0x800] sm:$0xff]
      %v3474 = vld [vmem:[#allocation4 + $0x808] sm:$0xff]
      %v3475 = vld [vmem:[#allocation4 + $0x810] sm:$0xff]
      %v3476 = vld [vmem:[#allocation4 + $0x818] sm:$0xff]
      %v3477 = vld [vmem:[#allocation4 + $0x820] sm:$0xff]
      %v3478 = vld [vmem:[#allocation4 + $0x828] sm:$0xff]
      %v3479 = vld [vmem:[#allocation4 + $0x830] sm:$0xff]
      %v3480 = vld [vmem:[#allocation4 + $0x838] sm:$0xff]
      %v3481 = vld [vmem:[#allocation4 + $0x840] sm:$0xff]
      %v3482 = vld [vmem:[#allocation4 + $0x848] sm:$0xff]
      %v3483 = vld [vmem:[#allocation4 + $0x850] sm:$0xff]
      %v3484 = vld [vmem:[#allocation4 + $0x858] sm:$0xff]
      %v3485 = vld [vmem:[#allocation4 + $0x860] sm:$0xff]
      %v3486 = vld [vmem:[#allocation4 + $0x868] sm:$0xff]
      %v3487 = vld [vmem:[#allocation4 + $0x870] sm:$0xff]
      %v3488 = vld [vmem:[#allocation4 + $0x878] sm:$0xff]
      %v3489 = vld [vmem:[#allocation4 + $0x880] sm:$0xff]
      %v3490 = vld [vmem:[#allocation4 + $0x888] sm:$0xff]
      %v3491 = vld [vmem:[#allocation4 + $0x890] sm:$0xff]
      %v3492 = vld [vmem:[#allocation4 + $0x898] sm:$0xff]
      %v3493 = vld [vmem:[#allocation4 + $0x8a0] sm:$0xff]
      %v3494 = vld [vmem:[#allocation4 + $0x8a8] sm:$0xff]
      %v3495 = vld [vmem:[#allocation4 + $0x8b0] sm:$0xff]
      %v3496 = vld [vmem:[#allocation4 + $0x8b8] sm:$0xff]
      %v3497 = vld [vmem:[#allocation4 + $0x8c0] sm:$0xff]
      %v3498 = vld [vmem:[#allocation4 + $0x8c8] sm:$0xff]
      %v3499 = vld [vmem:[#allocation4 + $0x8d0] sm:$0xff]
      %v3500 = vld [vmem:[#allocation4 + $0x8d8] sm:$0xff]
      %v3501 = vld [vmem:[#allocation4 + $0x8e0] sm:$0xff]
      %v3502 = vld [vmem:[#allocation4 + $0x8e8] sm:$0xff]
      %v3503 = vld [vmem:[#allocation4 + $0x8f0] sm:$0xff]
      %v3504 = vld [vmem:[#allocation4 + $0x8f8] sm:$0xff]
      %v3505 = vld [vmem:[%s4] sm:$0xff]
      %v3506 = vld [vmem:[%s4 + $0x8] sm:$0xff]
      %v3507 = vld [vmem:[%s4 + $0x10] sm:$0xff]
      %v3508 = vld [vmem:[%s4 + $0x18] sm:$0xff]
      %v3509 = vld [vmem:[%s4 + $0x20] sm:$0xff]
      %v3510 = vld [vmem:[%s4 + $0x28] sm:$0xff]
      %v3511 = vld [vmem:[%s4 + $0x30] sm:$0xff]
      %v3512 = vld [vmem:[%s4 + $0x38] sm:$0xff]
      %v3513 = vld [vmem:[%s4 + $0x40] sm:$0xff]
      %v3514 = vld [vmem:[%s4 + $0x48] sm:$0xff]
      %v3515 = vld [vmem:[%s4 + $0x50] sm:$0xff]
      %v3516 = vld [vmem:[%s4 + $0x58] sm:$0xff]
      %v3517 = vld [vmem:[%s4 + $0x60] sm:$0xff]
      %v3518 = vld [vmem:[%s4 + $0x68] sm:$0xff]
      %v3519 = vld [vmem:[%s4 + $0x70] sm:$0xff]
      %v3520 = vld [vmem:[%s4 + $0x78] sm:$0xff]
      %v3521 = vld [vmem:[%s4 + $0x80] sm:$0xff]
      %v3522 = vld [vmem:[%s4 + $0x88] sm:$0xff]
      %v3523 = vld [vmem:[%s4 + $0x90] sm:$0xff]
      %v3524 = vld [vmem:[%s4 + $0x98] sm:$0xff]
      %v3525 = vld [vmem:[%s4 + $0xa0] sm:$0xff]
      %v3526 = vld [vmem:[%s4 + $0xa8] sm:$0xff]
      %v3527 = vld [vmem:[%s4 + $0xb0] sm:$0xff]
      %v3528 = vld [vmem:[%s4 + $0xb8] sm:$0xff]
      %v3529 = vld [vmem:[%s4 + $0xc0] sm:$0xff]
      %v3530 = vld [vmem:[%s4 + $0xc8] sm:$0xff]
      %v3531 = vld [vmem:[%s4 + $0xd0] sm:$0xff]
      %v3532 = vld [vmem:[%s4 + $0xd8] sm:$0xff]
      %v3533 = vld [vmem:[%s4 + $0xe0] sm:$0xff]
      %v3534 = vld [vmem:[%s4 + $0xe8] sm:$0xff]
      %v3535 = vld [vmem:[%s4 + $0xf0] sm:$0xff]
      %v3536 = vld [vmem:[%s4 + $0xf8] sm:$0xff]
      %v3537 = vld [vmem:[%s4 + $0x100] sm:$0xff]
      %v3538 = vld [vmem:[%s4 + $0x108] sm:$0xff]
      %v3539 = vld [vmem:[%s4 + $0x110] sm:$0xff]
      %v3540 = vld [vmem:[%s4 + $0x118] sm:$0xff]
      %v3541 = vld [vmem:[%s4 + $0x120] sm:$0xff]
      %v3542 = vld [vmem:[%s4 + $0x128] sm:$0xff]
      %v3543 = vld [vmem:[%s4 + $0x130] sm:$0xff]
      %v3544 = vld [vmem:[%s4 + $0x138] sm:$0xff]
      %v3545 = vld [vmem:[%s4 + $0x140] sm:$0xff]
      %v3546 = vld [vmem:[%s4 + $0x148] sm:$0xff]
      %v3547 = vld [vmem:[%s4 + $0x150] sm:$0xff]
      %v3548 = vld [vmem:[%s4 + $0x158] sm:$0xff]
      %v3549 = vld [vmem:[%s4 + $0x160] sm:$0xff]
      %v3550 = vld [vmem:[%s4 + $0x168] sm:$0xff]
      %v3551 = vld [vmem:[%s4 + $0x170] sm:$0xff]
      %v3552 = vld [vmem:[%s4 + $0x178] sm:$0xff]
      %v3553 = vld [vmem:[%s4 + $0x180] sm:$0xff]
      %v3554 = vld [vmem:[%s4 + $0x188] sm:$0xff]
      %v3555 = vld [vmem:[%s4 + $0x190] sm:$0xff]
      %v3556 = vld [vmem:[%s4 + $0x198] sm:$0xff]
      %v3557 = vld [vmem:[%s4 + $0x1a0] sm:$0xff]
      %v3558 = vld [vmem:[%s4 + $0x1a8] sm:$0xff]
      %v3559 = vld [vmem:[%s4 + $0x1b0] sm:$0xff]
      %v3560 = vld [vmem:[%s4 + $0x1b8] sm:$0xff]
      %v3561 = vld [vmem:[%s4 + $0x1c0] sm:$0xff]
      %v3562 = vld [vmem:[%s4 + $0x1c8] sm:$0xff]
      %v3563 = vld [vmem:[%s4 + $0x1d0] sm:$0xff]
      %v3564 = vld [vmem:[%s4 + $0x1d8] sm:$0xff]
      %v3565 = vld [vmem:[%s4 + $0x1e0] sm:$0xff]
      %v3566 = vld [vmem:[%s4 + $0x1e8] sm:$0xff]
      %v3567 = vld [vmem:[%s4 + $0x1f0] sm:$0xff]
      %v3568 = vld [vmem:[%s4 + $0x1f8] sm:$0xff]
      %v3569 = vld [vmem:[%s4 + $0x200] sm:$0xff]
      %v3570 = vld [vmem:[%s4 + $0x208] sm:$0xff]
      %v3571 = vld [vmem:[%s4 + $0x210] sm:$0xff]
      %v3572 = vld [vmem:[%s4 + $0x218] sm:$0xff]
      %v3573 = vld [vmem:[%s4 + $0x220] sm:$0xff]
      %v3574 = vld [vmem:[%s4 + $0x228] sm:$0xff]
      %v3575 = vld [vmem:[%s4 + $0x230] sm:$0xff]
      %v3576 = vld [vmem:[%s4 + $0x238] sm:$0xff]
      %v3577 = vld [vmem:[%s4 + $0x240] sm:$0xff]
      %v3578 = vld [vmem:[%s4 + $0x248] sm:$0xff]
      %v3579 = vld [vmem:[%s4 + $0x250] sm:$0xff]
      %v3580 = vld [vmem:[%s4 + $0x258] sm:$0xff]
      %v3581 = vld [vmem:[%s4 + $0x260] sm:$0xff]
      %v3582 = vld [vmem:[%s4 + $0x268] sm:$0xff]
      %v3583 = vld [vmem:[%s4 + $0x270] sm:$0xff]
      %v3584 = vld [vmem:[%s4 + $0x278] sm:$0xff]
      %v3585 = vld [vmem:[%s4 + $0x280] sm:$0xff]
      %v3586 = vld [vmem:[%s4 + $0x288] sm:$0xff]
      %v3587 = vld [vmem:[%s4 + $0x290] sm:$0xff]
      %v3588 = vld [vmem:[%s4 + $0x298] sm:$0xff]
      %v3589 = vld [vmem:[%s4 + $0x2a0] sm:$0xff]
      %v3590 = vld [vmem:[%s4 + $0x2a8] sm:$0xff]
      %v3591 = vld [vmem:[%s4 + $0x2b0] sm:$0xff]
      %v3592 = vld [vmem:[%s4 + $0x2b8] sm:$0xff]
      %v3593 = vld [vmem:[%s4 + $0x2c0] sm:$0xff]
      %v3594 = vld [vmem:[%s4 + $0x2c8] sm:$0xff]
      %v3595 = vld [vmem:[%s4 + $0x2d0] sm:$0xff]
      %v3596 = vld [vmem:[%s4 + $0x2d8] sm:$0xff]
      %v3597 = vld [vmem:[%s4 + $0x2e0] sm:$0xff]
      %v3598 = vld [vmem:[%s4 + $0x2e8] sm:$0xff]
      %v3599 = vld [vmem:[%s4 + $0x2f0] sm:$0xff]
      %v3600 = vld [vmem:[%s4 + $0x2f8] sm:$0xff]
      %v3601 = vld [vmem:[%s4 + $0x300] sm:$0xff]
      %v3602 = vld [vmem:[%s4 + $0x308] sm:$0xff]
      %v3603 = vld [vmem:[%s4 + $0x310] sm:$0xff]
      %v3604 = vld [vmem:[%s4 + $0x318] sm:$0xff]
      %v3605 = vld [vmem:[%s4 + $0x320] sm:$0xff]
      %v3606 = vld [vmem:[%s4 + $0x328] sm:$0xff]
      %v3607 = vld [vmem:[%s4 + $0x330] sm:$0xff]
      %v3608 = vld [vmem:[%s4 + $0x338] sm:$0xff]
      %v3609 = vld [vmem:[%s4 + $0x340] sm:$0xff]
      %v3610 = vld [vmem:[%s4 + $0x348] sm:$0xff]
      %v3611 = vld [vmem:[%s4 + $0x350] sm:$0xff]
      %v3612 = vld [vmem:[%s4 + $0x358] sm:$0xff]
      %v3613 = vld [vmem:[%s4 + $0x360] sm:$0xff]
      %v3614 = vld [vmem:[%s4 + $0x368] sm:$0xff]
      %v3615 = vld [vmem:[%s4 + $0x370] sm:$0xff]
      %v3616 = vld [vmem:[%s4 + $0x378] sm:$0xff]
      %v3617 = vld [vmem:[%s4 + $0x380] sm:$0xff]
      %v3618 = vld [vmem:[%s4 + $0x388] sm:$0xff]
      %v3619 = vld [vmem:[%s4 + $0x390] sm:$0xff]
      %v3620 = vld [vmem:[%s4 + $0x398] sm:$0xff]
      %v3621 = vld [vmem:[%s4 + $0x3a0] sm:$0xff]
      %v3622 = vld [vmem:[%s4 + $0x3a8] sm:$0xff]
      %v3623 = vld [vmem:[%s4 + $0x3b0] sm:$0xff]
      %v3624 = vld [vmem:[%s4 + $0x3b8] sm:$0xff]
      %v3625 = vld [vmem:[%s4 + $0x3c0] sm:$0xff]
      %v3626 = vld [vmem:[%s4 + $0x3c8] sm:$0xff]
      %v3627 = vld [vmem:[%s4 + $0x3d0] sm:$0xff]
      %v3628 = vld [vmem:[%s4 + $0x3d8] sm:$0xff]
      %v3629 = vld [vmem:[%s4 + $0x3e0] sm:$0xff]
      %v3630 = vld [vmem:[%s4 + $0x3e8] sm:$0xff]
      %v3631 = vld [vmem:[%s4 + $0x3f0] sm:$0xff]
      %v3632 = vld [vmem:[%s4 + $0x3f8] sm:$0xff]
      %v3633 = vld [vmem:[%s4 + $0x400] sm:$0xff]
      %v3634 = vld [vmem:[%s4 + $0x408] sm:$0xff]
      %v3635 = vld [vmem:[%s4 + $0x410] sm:$0xff]
      %v3636 = vld [vmem:[%s4 + $0x418] sm:$0xff]
      %v3637 = vld [vmem:[%s4 + $0x420] sm:$0xff]
      %v3638 = vld [vmem:[%s4 + $0x428] sm:$0xff]
      %v3639 = vld [vmem:[%s4 + $0x430] sm:$0xff]
      %v3640 = vld [vmem:[%s4 + $0x438] sm:$0xff]
      %v3641 = vld [vmem:[%s4 + $0x440] sm:$0xff]
      %v3642 = vld [vmem:[%s4 + $0x448] sm:$0xff]
      %v3643 = vld [vmem:[%s4 + $0x450] sm:$0xff]
      %v3644 = vld [vmem:[%s4 + $0x458] sm:$0xff]
      %v3645 = vld [vmem:[%s4 + $0x460] sm:$0xff]
      %v3646 = vld [vmem:[%s4 + $0x468] sm:$0xff]
      %v3647 = vld [vmem:[%s4 + $0x470] sm:$0xff]
      %v3648 = vld [vmem:[%s4 + $0x478] sm:$0xff]
      %3649 = vmatpush.msra.mxu0 %v3520
      %3650 = vmatpush.msra.mxu0 %v3519
      %3651 = vmatpush.msra.mxu0 %v3518
      %3652 = vmatpush.msra.mxu0 %v3517
      %3653 = vmatpush.msra.mxu0 %v3516
      %3654 = vmatpush.msra.mxu0 %v3515
      %3655 = vmatpush.msra.mxu0 %v3514
      %3656 = vmatpush.msra.mxu0 %v3513
      %3657 = vmatpush.msra.mxu0 %v3512
      %3658 = vmatpush.msra.mxu0 %v3511
      %3659 = vmatpush.msra.mxu0 %v3510
      %3660 = vmatpush.msra.mxu0 %v3509
      %3661 = vmatpush.msra.mxu0 %v3508
      %3662 = vmatpush.msra.mxu0 %v3507
      %3663 = vmatpush.msra.mxu0 %v3506
      %3664 = vmatpush.msra.mxu0 %v3505
      %3665 = vmatmul.f32.gmra.mxu0 %v3217
      %v3666 = vpop.f32.mrf.mxu0
      %v3667 = vadd.f32 0.0, %v3666
      %3668 = vmatmul.f32.gmra.mxu0 %v3226
      %v3669 = vpop.f32.mrf.mxu0
      %v3670 = vadd.f32 0.0, %v3669
      %3671 = vmatmul.f32.gmra.mxu0 %v3235
      %v3672 = vpop.f32.mrf.mxu0
      %v3673 = vadd.f32 0.0, %v3672
      %3674 = vmatmul.f32.gmra.mxu0 %v3244
      %v3675 = vpop.f32.mrf.mxu0
      %v3676 = vadd.f32 0.0, %v3675
      %3677 = vmatmul.f32.gmra.mxu0 %v3253
      %v3678 = vpop.f32.mrf.mxu0
      %v3679 = vadd.f32 0.0, %v3678
      %3680 = vmatmul.f32.gmra.mxu0 %v3262
      %v3681 = vpop.f32.mrf.mxu0
      %v3682 = vadd.f32 0.0, %v3681
      %3683 = vmatmul.f32.gmra.mxu0 %v3271
      %v3684 = vpop.f32.mrf.mxu0
      %v3685 = vadd.f32 0.0, %v3684
      %3686 = vmatmul.f32.gmra.mxu0 %v3280
      %v3687 = vpop.f32.mrf.mxu0
      %v3688 = vadd.f32 0.0, %v3687
      %3689 = vmatmul.f32.gmra.mxu0 %v3289
      %v3690 = vpop.f32.mrf.mxu0
      %v3691 = vadd.f32 0.0, %v3690
      %3692 = vmatmul.f32.gmra.mxu0 %v3298
      %v3693 = vpop.f32.mrf.mxu0
      %v3694 = vadd.f32 0.0, %v3693
      %3695 = vmatmul.f32.gmra.mxu0 %v3307
      %v3696 = vpop.f32.mrf.mxu0
      %v3697 = vadd.f32 0.0, %v3696
      %3698 = vmatmul.f32.gmra.mxu0 %v3316
      %v3699 = vpop.f32.mrf.mxu0
      %v3700 = vadd.f32 0.0, %v3699
      %3701 = vmatmul.f32.gmra.mxu0 %v3325
      %v3702 = vpop.f32.mrf.mxu0
      %v3703 = vadd.f32 0.0, %v3702
      %3704 = vmatmul.f32.gmra.mxu0 %v3334
      %v3705 = vpop.f32.mrf.mxu0
      %v3706 = vadd.f32 0.0, %v3705
      %3707 = vmatmul.f32.gmra.mxu0 %v3343
      %v3708 = vpop.f32.mrf.mxu0
      %v3709 = vadd.f32 0.0, %v3708
      %3710 = vmatmul.f32.gmra.mxu0 %v3352
      %v3711 = vpop.f32.mrf.mxu0
      %v3712 = vadd.f32 0.0, %v3711
      %3713 = vmatmul.f32.gmra.mxu0 %v3361
      %v3714 = vpop.f32.mrf.mxu0
      %v3715 = vadd.f32 0.0, %v3714
      %3716 = vmatmul.f32.gmra.mxu0 %v3370
      %v3717 = vpop.f32.mrf.mxu0
      %v3718 = vadd.f32 0.0, %v3717
      %3719 = vmatmul.f32.gmra.mxu0 %v3379
      %v3720 = vpop.f32.mrf.mxu0
      %v3721 = vadd.f32 0.0, %v3720
      %3722 = vmatmul.f32.gmra.mxu0 %v3388
      %v3723 = vpop.f32.mrf.mxu0
      %v3724 = vadd.f32 0.0, %v3723
      %3725 = vmatmul.f32.gmra.mxu0 %v3397
      %v3726 = vpop.f32.mrf.mxu0
      %v3727 = vadd.f32 0.0, %v3726
      %3728 = vmatmul.f32.gmra.mxu0 %v3406
      %v3729 = vpop.f32.mrf.mxu0
      %v3730 = vadd.f32 0.0, %v3729
      %3731 = vmatmul.f32.gmra.mxu0 %v3415
      %v3732 = vpop.f32.mrf.mxu0
      %v3733 = vadd.f32 0.0, %v3732
      %3734 = vmatmul.f32.gmra.mxu0 %v3424
      %v3735 = vpop.f32.mrf.mxu0
      %v3736 = vadd.f32 0.0, %v3735
      %3737 = vmatmul.f32.gmra.mxu0 %v3433
      %v3738 = vpop.f32.mrf.mxu0
      %v3739 = vadd.f32 0.0, %v3738
      %3740 = vmatmul.f32.gmra.mxu0 %v3442
      %v3741 = vpop.f32.mrf.mxu0
      %v3742 = vadd.f32 0.0, %v3741
      %3743 = vmatmul.f32.gmra.mxu0 %v3451
      %v3744 = vpop.f32.mrf.mxu0
      %v3745 = vadd.f32 0.0, %v3744
      %3746 = vmatmul.f32.gmra.mxu0 %v3460
      %v3747 = vpop.f32.mrf.mxu0
      %v3748 = vadd.f32 0.0, %v3747
      %3749 = vmatmul.f32.gmra.mxu0 %v3469
      %v3750 = vpop.f32.mrf.mxu0
      %v3751 = vadd.f32 0.0, %v3750
      %3752 = vmatmul.f32.gmra.mxu0 %v3478
      %v3753 = vpop.f32.mrf.mxu0
      %v3754 = vadd.f32 0.0, %v3753
      %3755 = vmatmul.f32.gmra.mxu0 %v3487
      %v3756 = vpop.f32.mrf.mxu0
      %v3757 = vadd.f32 0.0, %v3756
      %3758 = vmatmul.f32.gmra.mxu0 %v3496
      %v3759 = vpop.f32.mrf.mxu0
      %v3760 = vadd.f32 0.0, %v3759
      %3761 = vdwg.mxu0
      %3762 = vmatpush.msra.mxu0 %v3536
      %3763 = vmatpush.msra.mxu0 %v3535
      %3764 = vmatpush.msra.mxu0 %v3534
      %3765 = vmatpush.msra.mxu0 %v3533
      %3766 = vmatpush.msra.mxu0 %v3532
      %3767 = vmatpush.msra.mxu0 %v3531
      %3768 = vmatpush.msra.mxu0 %v3530
      %3769 = vmatpush.msra.mxu0 %v3529
      %3770 = vmatpush.msra.mxu0 %v3528
      %3771 = vmatpush.msra.mxu0 %v3527
      %3772 = vmatpush.msra.mxu0 %v3526
      %3773 = vmatpush.msra.mxu0 %v3525
      %3774 = vmatpush.msra.mxu0 %v3524
      %3775 = vmatpush.msra.mxu0 %v3523
      %3776 = vmatpush.msra.mxu0 %v3522
      %3777 = vmatpush.msra.mxu0 %v3521
      %3778 = vmatmul.f32.gmra.mxu0 %v3218
      %v3779 = vpop.f32.mrf.mxu0
      %v3780 = vadd.f32 %v3667, %v3779
      %3781 = vmatmul.f32.gmra.mxu0 %v3227
      %v3782 = vpop.f32.mrf.mxu0
      %v3783 = vadd.f32 %v3670, %v3782
      %3784 = vmatmul.f32.gmra.mxu0 %v3236
      %v3785 = vpop.f32.mrf.mxu0
      %v3786 = vadd.f32 %v3673, %v3785
      %3787 = vmatmul.f32.gmra.mxu0 %v3245
      %v3788 = vpop.f32.mrf.mxu0
      %v3789 = vadd.f32 %v3676, %v3788
      %3790 = vmatmul.f32.gmra.mxu0 %v3254
      %v3791 = vpop.f32.mrf.mxu0
      %v3792 = vadd.f32 %v3679, %v3791
      %3793 = vmatmul.f32.gmra.mxu0 %v3263
      %v3794 = vpop.f32.mrf.mxu0
      %v3795 = vadd.f32 %v3682, %v3794
      %3796 = vmatmul.f32.gmra.mxu0 %v3272
      %v3797 = vpop.f32.mrf.mxu0
      %v3798 = vadd.f32 %v3685, %v3797
      %3799 = vmatmul.f32.gmra.mxu0 %v3281
      %v3800 = vpop.f32.mrf.mxu0
      %v3801 = vadd.f32 %v3688, %v3800
      %3802 = vmatmul.f32.gmra.mxu0 %v3290
      %v3803 = vpop.f32.mrf.mxu0
      %v3804 = vadd.f32 %v3691, %v3803
      %3805 = vmatmul.f32.gmra.mxu0 %v3299
      %v3806 = vpop.f32.mrf.mxu0
      %v3807 = vadd.f32 %v3694, %v3806
      %3808 = vmatmul.f32.gmra.mxu0 %v3308
      %v3809 = vpop.f32.mrf.mxu0
      %v3810 = vadd.f32 %v3697, %v3809
      %3811 = vmatmul.f32.gmra.mxu0 %v3317
      %v3812 = vpop.f32.mrf.mxu0
      %v3813 = vadd.f32 %v3700, %v3812
      %3814 = vmatmul.f32.gmra.mxu0 %v3326
      %v3815 = vpop.f32.mrf.mxu0
      %v3816 = vadd.f32 %v3703, %v3815
      %3817 = vmatmul.f32.gmra.mxu0 %v3335
      %v3818 = vpop.f32.mrf.mxu0
      %v3819 = vadd.f32 %v3706, %v3818
      %3820 = vmatmul.f32.gmra.mxu0 %v3344
      %v3821 = vpop.f32.mrf.mxu0
      %v3822 = vadd.f32 %v3709, %v3821
      %3823 = vmatmul.f32.gmra.mxu0 %v3353
      %v3824 = vpop.f32.mrf.mxu0
      %v3825 = vadd.f32 %v3712, %v3824
      %3826 = vmatmul.f32.gmra.mxu0 %v3362
      %v3827 = vpop.f32.mrf.mxu0
      %v3828 = vadd.f32 %v3715, %v3827
      %3829 = vmatmul.f32.gmra.mxu0 %v3371
      %v3830 = vpop.f32.mrf.mxu0
      %v3831 = vadd.f32 %v3718, %v3830
      %3832 = vmatmul.f32.gmra.mxu0 %v3380
      %v3833 = vpop.f32.mrf.mxu0
      %v3834 = vadd.f32 %v3721, %v3833
      %3835 = vmatmul.f32.gmra.mxu0 %v3389
      %v3836 = vpop.f32.mrf.mxu0
      %v3837 = vadd.f32 %v3724, %v3836
      %3838 = vmatmul.f32.gmra.mxu0 %v3398
      %v3839 = vpop.f32.mrf.mxu0
      %v3840 = vadd.f32 %v3727, %v3839
      %3841 = vmatmul.f32.gmra.mxu0 %v3407
      %v3842 = vpop.f32.mrf.mxu0
      %v3843 = vadd.f32 %v3730, %v3842
      %3844 = vmatmul.f32.gmra.mxu0 %v3416
      %v3845 = vpop.f32.mrf.mxu0
      %v3846 = vadd.f32 %v3733, %v3845
      %3847 = vmatmul.f32.gmra.mxu0 %v3425
      %v3848 = vpop.f32.mrf.mxu0
      %v3849 = vadd.f32 %v3736, %v3848
      %3850 = vmatmul.f32.gmra.mxu0 %v3434
      %v3851 = vpop.f32.mrf.mxu0
      %v3852 = vadd.f32 %v3739, %v3851
      %3853 = vmatmul.f32.gmra.mxu0 %v3443
      %v3854 = vpop.f32.mrf.mxu0
      %v3855 = vadd.f32 %v3742, %v3854
      %3856 = vmatmul.f32.gmra.mxu0 %v3452
      %v3857 = vpop.f32.mrf.mxu0
      %v3858 = vadd.f32 %v3745, %v3857
      %3859 = vmatmul.f32.gmra.mxu0 %v3461
      %v3860 = vpop.f32.mrf.mxu0
      %v3861 = vadd.f32 %v3748, %v3860
      %3862 = vmatmul.f32.gmra.mxu0 %v3470
      %v3863 = vpop.f32.mrf.mxu0
      %v3864 = vadd.f32 %v3751, %v3863
      %3865 = vmatmul.f32.gmra.mxu0 %v3479
      %v3866 = vpop.f32.mrf.mxu0
      %v3867 = vadd.f32 %v3754, %v3866
      %3868 = vmatmul.f32.gmra.mxu0 %v3488
      %v3869 = vpop.f32.mrf.mxu0
      %v3870 = vadd.f32 %v3757, %v3869
      %3871 = vmatmul.f32.gmra.mxu0 %v3497
      %v3872 = vpop.f32.mrf.mxu0
      %v3873 = vadd.f32 %v3760, %v3872
      %3874 = vdwg.mxu0
      %3875 = vmatpush.msra.mxu0 %v3552
      %3876 = vmatpush.msra.mxu0 %v3551
      %3877 = vmatpush.msra.mxu0 %v3550
      %3878 = vmatpush.msra.mxu0 %v3549
      %3879 = vmatpush.msra.mxu0 %v3548
      %3880 = vmatpush.msra.mxu0 %v3547
      %3881 = vmatpush.msra.mxu0 %v3546
      %3882 = vmatpush.msra.mxu0 %v3545
      %3883 = vmatpush.msra.mxu0 %v3544
      %3884 = vmatpush.msra.mxu0 %v3543
      %3885 = vmatpush.msra.mxu0 %v3542
      %3886 = vmatpush.msra.mxu0 %v3541
      %3887 = vmatpush.msra.mxu0 %v3540
      %3888 = vmatpush.msra.mxu0 %v3539
      %3889 = vmatpush.msra.mxu0 %v3538
      %3890 = vmatpush.msra.mxu0 %v3537
      %3891 = vmatmul.f32.gmra.mxu0 %v3219
      %v3892 = vpop.f32.mrf.mxu0
      %v3893 = vadd.f32 %v3780, %v3892
      %3894 = vmatmul.f32.gmra.mxu0 %v3228
      %v3895 = vpop.f32.mrf.mxu0
      %v3896 = vadd.f32 %v3783, %v3895
      %3897 = vmatmul.f32.gmra.mxu0 %v3237
      %v3898 = vpop.f32.mrf.mxu0
      %v3899 = vadd.f32 %v3786, %v3898
      %3900 = vmatmul.f32.gmra.mxu0 %v3246
      %v3901 = vpop.f32.mrf.mxu0
      %v3902 = vadd.f32 %v3789, %v3901
      %3903 = vmatmul.f32.gmra.mxu0 %v3255
      %v3904 = vpop.f32.mrf.mxu0
      %v3905 = vadd.f32 %v3792, %v3904
      %3906 = vmatmul.f32.gmra.mxu0 %v3264
      %v3907 = vpop.f32.mrf.mxu0
      %v3908 = vadd.f32 %v3795, %v3907
      %3909 = vmatmul.f32.gmra.mxu0 %v3273
      %v3910 = vpop.f32.mrf.mxu0
      %v3911 = vadd.f32 %v3798, %v3910
      %3912 = vmatmul.f32.gmra.mxu0 %v3282
      %v3913 = vpop.f32.mrf.mxu0
      %v3914 = vadd.f32 %v3801, %v3913
      %3915 = vmatmul.f32.gmra.mxu0 %v3291
      %v3916 = vpop.f32.mrf.mxu0
      %v3917 = vadd.f32 %v3804, %v3916
      %3918 = vmatmul.f32.gmra.mxu0 %v3300
      %v3919 = vpop.f32.mrf.mxu0
      %v3920 = vadd.f32 %v3807, %v3919
      %3921 = vmatmul.f32.gmra.mxu0 %v3309
      %v3922 = vpop.f32.mrf.mxu0
      %v3923 = vadd.f32 %v3810, %v3922
      %3924 = vmatmul.f32.gmra.mxu0 %v3318
      %v3925 = vpop.f32.mrf.mxu0
      %v3926 = vadd.f32 %v3813, %v3925
      %3927 = vmatmul.f32.gmra.mxu0 %v3327
      %v3928 = vpop.f32.mrf.mxu0
      %v3929 = vadd.f32 %v3816, %v3928
      %3930 = vmatmul.f32.gmra.mxu0 %v3336
      %v3931 = vpop.f32.mrf.mxu0
      %v3932 = vadd.f32 %v3819, %v3931
      %3933 = vmatmul.f32.gmra.mxu0 %v3345
      %v3934 = vpop.f32.mrf.mxu0
      %v3935 = vadd.f32 %v3822, %v3934
      %3936 = vmatmul.f32.gmra.mxu0 %v3354
      %v3937 = vpop.f32.mrf.mxu0
      %v3938 = vadd.f32 %v3825, %v3937
      %3939 = vmatmul.f32.gmra.mxu0 %v3363
      %v3940 = vpop.f32.mrf.mxu0
      %v3941 = vadd.f32 %v3828, %v3940
      %3942 = vmatmul.f32.gmra.mxu0 %v3372
      %v3943 = vpop.f32.mrf.mxu0
      %v3944 = vadd.f32 %v3831, %v3943
      %3945 = vmatmul.f32.gmra.mxu0 %v3381
      %v3946 = vpop.f32.mrf.mxu0
      %v3947 = vadd.f32 %v3834, %v3946
      %3948 = vmatmul.f32.gmra.mxu0 %v3390
      %v3949 = vpop.f32.mrf.mxu0
      %v3950 = vadd.f32 %v3837, %v3949
      %3951 = vmatmul.f32.gmra.mxu0 %v3399
      %v3952 = vpop.f32.mrf.mxu0
      %v3953 = vadd.f32 %v3840, %v3952
      %3954 = vmatmul.f32.gmra.mxu0 %v3408
      %v3955 = vpop.f32.mrf.mxu0
      %v3956 = vadd.f32 %v3843, %v3955
      %3957 = vmatmul.f32.gmra.mxu0 %v3417
      %v3958 = vpop.f32.mrf.mxu0
      %v3959 = vadd.f32 %v3846, %v3958
      %3960 = vmatmul.f32.gmra.mxu0 %v3426
      %v3961 = vpop.f32.mrf.mxu0
      %v3962 = vadd.f32 %v3849, %v3961
      %3963 = vmatmul.f32.gmra.mxu0 %v3435
      %v3964 = vpop.f32.mrf.mxu0
      %v3965 = vadd.f32 %v3852, %v3964
      %3966 = vmatmul.f32.gmra.mxu0 %v3444
      %v3967 = vpop.f32.mrf.mxu0
      %v3968 = vadd.f32 %v3855, %v3967
      %3969 = vmatmul.f32.gmra.mxu0 %v3453
      %v3970 = vpop.f32.mrf.mxu0
      %v3971 = vadd.f32 %v3858, %v3970
      %3972 = vmatmul.f32.gmra.mxu0 %v3462
      %v3973 = vpop.f32.mrf.mxu0
      %v3974 = vadd.f32 %v3861, %v3973
      %3975 = vmatmul.f32.gmra.mxu0 %v3471
      %v3976 = vpop.f32.mrf.mxu0
      %v3977 = vadd.f32 %v3864, %v3976
      %3978 = vmatmul.f32.gmra.mxu0 %v3480
      %v3979 = vpop.f32.mrf.mxu0
      %v3980 = vadd.f32 %v3867, %v3979
      %3981 = vmatmul.f32.gmra.mxu0 %v3489
      %v3982 = vpop.f32.mrf.mxu0
      %v3983 = vadd.f32 %v3870, %v3982
      %3984 = vmatmul.f32.gmra.mxu0 %v3498
      %v3985 = vpop.f32.mrf.mxu0
      %v3986 = vadd.f32 %v3873, %v3985
      %3987 = vdwg.mxu0
      %3988 = vmatpush.msra.mxu0 %v3568
      %3989 = vmatpush.msra.mxu0 %v3567
      %3990 = vmatpush.msra.mxu0 %v3566
      %3991 = vmatpush.msra.mxu0 %v3565
      %3992 = vmatpush.msra.mxu0 %v3564
      %3993 = vmatpush.msra.mxu0 %v3563
      %3994 = vmatpush.msra.mxu0 %v3562
      %3995 = vmatpush.msra.mxu0 %v3561
      %3996 = vmatpush.msra.mxu0 %v3560
      %3997 = vmatpush.msra.mxu0 %v3559
      %3998 = vmatpush.msra.mxu0 %v3558
      %3999 = vmatpush.msra.mxu0 %v3557
      %4000 = vmatpush.msra.mxu0 %v3556
      %4001 = vmatpush.msra.mxu0 %v3555
      %4002 = vmatpush.msra.mxu0 %v3554
      %4003 = vmatpush.msra.mxu0 %v3553
      %4004 = vmatmul.f32.gmra.mxu0 %v3220
      %v4005 = vpop.f32.mrf.mxu0
      %v4006 = vadd.f32 %v3893, %v4005
      %4007 = vmatmul.f32.gmra.mxu0 %v3229
      %v4008 = vpop.f32.mrf.mxu0
      %v4009 = vadd.f32 %v3896, %v4008
      %4010 = vmatmul.f32.gmra.mxu0 %v3238
      %v4011 = vpop.f32.mrf.mxu0
      %v4012 = vadd.f32 %v3899, %v4011
      %4013 = vmatmul.f32.gmra.mxu0 %v3247
      %v4014 = vpop.f32.mrf.mxu0
      %v4015 = vadd.f32 %v3902, %v4014
      %4016 = vmatmul.f32.gmra.mxu0 %v3256
      %v4017 = vpop.f32.mrf.mxu0
      %v4018 = vadd.f32 %v3905, %v4017
      %4019 = vmatmul.f32.gmra.mxu0 %v3265
      %v4020 = vpop.f32.mrf.mxu0
      %v4021 = vadd.f32 %v3908, %v4020
      %4022 = vmatmul.f32.gmra.mxu0 %v3274
      %v4023 = vpop.f32.mrf.mxu0
      %v4024 = vadd.f32 %v3911, %v4023
      %4025 = vmatmul.f32.gmra.mxu0 %v3283
      %v4026 = vpop.f32.mrf.mxu0
      %v4027 = vadd.f32 %v3914, %v4026
      %4028 = vmatmul.f32.gmra.mxu0 %v3292
      %v4029 = vpop.f32.mrf.mxu0
      %v4030 = vadd.f32 %v3917, %v4029
      %4031 = vmatmul.f32.gmra.mxu0 %v3301
      %v4032 = vpop.f32.mrf.mxu0
      %v4033 = vadd.f32 %v3920, %v4032
      %4034 = vmatmul.f32.gmra.mxu0 %v3310
      %v4035 = vpop.f32.mrf.mxu0
      %v4036 = vadd.f32 %v3923, %v4035
      %4037 = vmatmul.f32.gmra.mxu0 %v3319
      %v4038 = vpop.f32.mrf.mxu0
      %v4039 = vadd.f32 %v3926, %v4038
      %4040 = vmatmul.f32.gmra.mxu0 %v3328
      %v4041 = vpop.f32.mrf.mxu0
      %v4042 = vadd.f32 %v3929, %v4041
      %4043 = vmatmul.f32.gmra.mxu0 %v3337
      %v4044 = vpop.f32.mrf.mxu0
      %v4045 = vadd.f32 %v3932, %v4044
      %4046 = vmatmul.f32.gmra.mxu0 %v3346
      %v4047 = vpop.f32.mrf.mxu0
      %v4048 = vadd.f32 %v3935, %v4047
      %4049 = vmatmul.f32.gmra.mxu0 %v3355
      %v4050 = vpop.f32.mrf.mxu0
      %v4051 = vadd.f32 %v3938, %v4050
      %4052 = vmatmul.f32.gmra.mxu0 %v3364
      %v4053 = vpop.f32.mrf.mxu0
      %v4054 = vadd.f32 %v3941, %v4053
      %4055 = vmatmul.f32.gmra.mxu0 %v3373
      %v4056 = vpop.f32.mrf.mxu0
      %v4057 = vadd.f32 %v3944, %v4056
      %4058 = vmatmul.f32.gmra.mxu0 %v3382
      %v4059 = vpop.f32.mrf.mxu0
      %v4060 = vadd.f32 %v3947, %v4059
      %4061 = vmatmul.f32.gmra.mxu0 %v3391
      %v4062 = vpop.f32.mrf.mxu0
      %v4063 = vadd.f32 %v3950, %v4062
      %4064 = vmatmul.f32.gmra.mxu0 %v3400
      %v4065 = vpop.f32.mrf.mxu0
      %v4066 = vadd.f32 %v3953, %v4065
      %4067 = vmatmul.f32.gmra.mxu0 %v3409
      %v4068 = vpop.f32.mrf.mxu0
      %v4069 = vadd.f32 %v3956, %v4068
      %4070 = vmatmul.f32.gmra.mxu0 %v3418
      %v4071 = vpop.f32.mrf.mxu0
      %v4072 = vadd.f32 %v3959, %v4071
      %4073 = vmatmul.f32.gmra.mxu0 %v3427
      %v4074 = vpop.f32.mrf.mxu0
      %v4075 = vadd.f32 %v3962, %v4074
      %4076 = vmatmul.f32.gmra.mxu0 %v3436
      %v4077 = vpop.f32.mrf.mxu0
      %v4078 = vadd.f32 %v3965, %v4077
      %4079 = vmatmul.f32.gmra.mxu0 %v3445
      %v4080 = vpop.f32.mrf.mxu0
      %v4081 = vadd.f32 %v3968, %v4080
      %4082 = vmatmul.f32.gmra.mxu0 %v3454
      %v4083 = vpop.f32.mrf.mxu0
      %v4084 = vadd.f32 %v3971, %v4083
      %4085 = vmatmul.f32.gmra.mxu0 %v3463
      %v4086 = vpop.f32.mrf.mxu0
      %v4087 = vadd.f32 %v3974, %v4086
      %4088 = vmatmul.f32.gmra.mxu0 %v3472
      %v4089 = vpop.f32.mrf.mxu0
      %v4090 = vadd.f32 %v3977, %v4089
      %4091 = vmatmul.f32.gmra.mxu0 %v3481
      %v4092 = vpop.f32.mrf.mxu0
      %v4093 = vadd.f32 %v3980, %v4092
      %4094 = vmatmul.f32.gmra.mxu0 %v3490
      %v4095 = vpop.f32.mrf.mxu0
      %v4096 = vadd.f32 %v3983, %v4095
      %4097 = vmatmul.f32.gmra.mxu0 %v3499
      %v4098 = vpop.f32.mrf.mxu0
      %v4099 = vadd.f32 %v3986, %v4098
      %4100 = vdwg.mxu0
      %4101 = vmatpush.msra.mxu0 %v3584
      %4102 = vmatpush.msra.mxu0 %v3583
      %4103 = vmatpush.msra.mxu0 %v3582
      %4104 = vmatpush.msra.mxu0 %v3581
      %4105 = vmatpush.msra.mxu0 %v3580
      %4106 = vmatpush.msra.mxu0 %v3579
      %4107 = vmatpush.msra.mxu0 %v3578
      %4108 = vmatpush.msra.mxu0 %v3577
      %4109 = vmatpush.msra.mxu0 %v3576
      %4110 = vmatpush.msra.mxu0 %v3575
      %4111 = vmatpush.msra.mxu0 %v3574
      %4112 = vmatpush.msra.mxu0 %v3573
      %4113 = vmatpush.msra.mxu0 %v3572
      %4114 = vmatpush.msra.mxu0 %v3571
      %4115 = vmatpush.msra.mxu0 %v3570
      %4116 = vmatpush.msra.mxu0 %v3569
      %4117 = vmatmul.f32.gmra.mxu0 %v3221
      %v4118 = vpop.f32.mrf.mxu0
      %v4119 = vadd.f32 %v4006, %v4118
      %4120 = vmatmul.f32.gmra.mxu0 %v3230
      %v4121 = vpop.f32.mrf.mxu0
      %v4122 = vadd.f32 %v4009, %v4121
      %4123 = vmatmul.f32.gmra.mxu0 %v3239
      %v4124 = vpop.f32.mrf.mxu0
      %v4125 = vadd.f32 %v4012, %v4124
      %4126 = vmatmul.f32.gmra.mxu0 %v3248
      %v4127 = vpop.f32.mrf.mxu0
      %v4128 = vadd.f32 %v4015, %v4127
      %4129 = vmatmul.f32.gmra.mxu0 %v3257
      %v4130 = vpop.f32.mrf.mxu0
      %v4131 = vadd.f32 %v4018, %v4130
      %4132 = vmatmul.f32.gmra.mxu0 %v3266
      %v4133 = vpop.f32.mrf.mxu0
      %v4134 = vadd.f32 %v4021, %v4133
      %4135 = vmatmul.f32.gmra.mxu0 %v3275
      %v4136 = vpop.f32.mrf.mxu0
      %v4137 = vadd.f32 %v4024, %v4136
      %4138 = vmatmul.f32.gmra.mxu0 %v3284
      %v4139 = vpop.f32.mrf.mxu0
      %v4140 = vadd.f32 %v4027, %v4139
      %4141 = vmatmul.f32.gmra.mxu0 %v3293
      %v4142 = vpop.f32.mrf.mxu0
      %v4143 = vadd.f32 %v4030, %v4142
      %4144 = vmatmul.f32.gmra.mxu0 %v3302
      %v4145 = vpop.f32.mrf.mxu0
      %v4146 = vadd.f32 %v4033, %v4145
      %4147 = vmatmul.f32.gmra.mxu0 %v3311
      %v4148 = vpop.f32.mrf.mxu0
      %v4149 = vadd.f32 %v4036, %v4148
      %4150 = vmatmul.f32.gmra.mxu0 %v3320
      %v4151 = vpop.f32.mrf.mxu0
      %v4152 = vadd.f32 %v4039, %v4151
      %4153 = vmatmul.f32.gmra.mxu0 %v3329
      %v4154 = vpop.f32.mrf.mxu0
      %v4155 = vadd.f32 %v4042, %v4154
      %4156 = vmatmul.f32.gmra.mxu0 %v3338
      %v4157 = vpop.f32.mrf.mxu0
      %v4158 = vadd.f32 %v4045, %v4157
      %4159 = vmatmul.f32.gmra.mxu0 %v3347
      %v4160 = vpop.f32.mrf.mxu0
      %v4161 = vadd.f32 %v4048, %v4160
      %4162 = vmatmul.f32.gmra.mxu0 %v3356
      %v4163 = vpop.f32.mrf.mxu0
      %v4164 = vadd.f32 %v4051, %v4163
      %4165 = vmatmul.f32.gmra.mxu0 %v3365
      %v4166 = vpop.f32.mrf.mxu0
      %v4167 = vadd.f32 %v4054, %v4166
      %4168 = vmatmul.f32.gmra.mxu0 %v3374
      %v4169 = vpop.f32.mrf.mxu0
      %v4170 = vadd.f32 %v4057, %v4169
      %4171 = vmatmul.f32.gmra.mxu0 %v3383
      %v4172 = vpop.f32.mrf.mxu0
      %v4173 = vadd.f32 %v4060, %v4172
      %4174 = vmatmul.f32.gmra.mxu0 %v3392
      %v4175 = vpop.f32.mrf.mxu0
      %v4176 = vadd.f32 %v4063, %v4175
      %4177 = vmatmul.f32.gmra.mxu0 %v3401
      %v4178 = vpop.f32.mrf.mxu0
      %v4179 = vadd.f32 %v4066, %v4178
      %4180 = vmatmul.f32.gmra.mxu0 %v3410
      %v4181 = vpop.f32.mrf.mxu0
      %v4182 = vadd.f32 %v4069, %v4181
      %4183 = vmatmul.f32.gmra.mxu0 %v3419
      %v4184 = vpop.f32.mrf.mxu0
      %v4185 = vadd.f32 %v4072, %v4184
      %4186 = vmatmul.f32.gmra.mxu0 %v3428
      %v4187 = vpop.f32.mrf.mxu0
      %v4188 = vadd.f32 %v4075, %v4187
      %4189 = vmatmul.f32.gmra.mxu0 %v3437
      %v4190 = vpop.f32.mrf.mxu0
      %v4191 = vadd.f32 %v4078, %v4190
      %4192 = vmatmul.f32.gmra.mxu0 %v3446
      %v4193 = vpop.f32.mrf.mxu0
      %v4194 = vadd.f32 %v4081, %v4193
      %4195 = vmatmul.f32.gmra.mxu0 %v3455
      %v4196 = vpop.f32.mrf.mxu0
      %v4197 = vadd.f32 %v4084, %v4196
      %4198 = vmatmul.f32.gmra.mxu0 %v3464
      %v4199 = vpop.f32.mrf.mxu0
      %v4200 = vadd.f32 %v4087, %v4199
      %4201 = vmatmul.f32.gmra.mxu0 %v3473
      %v4202 = vpop.f32.mrf.mxu0
      %v4203 = vadd.f32 %v4090, %v4202
      %4204 = vmatmul.f32.gmra.mxu0 %v3482
      %v4205 = vpop.f32.mrf.mxu0
      %v4206 = vadd.f32 %v4093, %v4205
      %4207 = vmatmul.f32.gmra.mxu0 %v3491
      %v4208 = vpop.f32.mrf.mxu0
      %v4209 = vadd.f32 %v4096, %v4208
      %4210 = vmatmul.f32.gmra.mxu0 %v3500
      %v4211 = vpop.f32.mrf.mxu0
      %v4212 = vadd.f32 %v4099, %v4211
      %4213 = vdwg.mxu0
      %4214 = vmatpush.msra.mxu0 %v3600
      %4215 = vmatpush.msra.mxu0 %v3599
      %4216 = vmatpush.msra.mxu0 %v3598
      %4217 = vmatpush.msra.mxu0 %v3597
      %4218 = vmatpush.msra.mxu0 %v3596
      %4219 = vmatpush.msra.mxu0 %v3595
      %4220 = vmatpush.msra.mxu0 %v3594
      %4221 = vmatpush.msra.mxu0 %v3593
      %4222 = vmatpush.msra.mxu0 %v3592
      %4223 = vmatpush.msra.mxu0 %v3591
      %4224 = vmatpush.msra.mxu0 %v3590
      %4225 = vmatpush.msra.mxu0 %v3589
      %4226 = vmatpush.msra.mxu0 %v3588
      %4227 = vmatpush.msra.mxu0 %v3587
      %4228 = vmatpush.msra.mxu0 %v3586
      %4229 = vmatpush.msra.mxu0 %v3585
      %4230 = vmatmul.f32.gmra.mxu0 %v3222
      %v4231 = vpop.f32.mrf.mxu0
      %v4232 = vadd.f32 %v4119, %v4231
      %4233 = vmatmul.f32.gmra.mxu0 %v3231
      %v4234 = vpop.f32.mrf.mxu0
      %v4235 = vadd.f32 %v4122, %v4234
      %4236 = vmatmul.f32.gmra.mxu0 %v3240
      %v4237 = vpop.f32.mrf.mxu0
      %v4238 = vadd.f32 %v4125, %v4237
      %4239 = vmatmul.f32.gmra.mxu0 %v3249
      %v4240 = vpop.f32.mrf.mxu0
      %v4241 = vadd.f32 %v4128, %v4240
      %4242 = vmatmul.f32.gmra.mxu0 %v3258
      %v4243 = vpop.f32.mrf.mxu0
      %v4244 = vadd.f32 %v4131, %v4243
      %4245 = vmatmul.f32.gmra.mxu0 %v3267
      %v4246 = vpop.f32.mrf.mxu0
      %v4247 = vadd.f32 %v4134, %v4246
      %4248 = vmatmul.f32.gmra.mxu0 %v3276
      %v4249 = vpop.f32.mrf.mxu0
      %v4250 = vadd.f32 %v4137, %v4249
      %4251 = vmatmul.f32.gmra.mxu0 %v3285
      %v4252 = vpop.f32.mrf.mxu0
      %v4253 = vadd.f32 %v4140, %v4252
      %4254 = vmatmul.f32.gmra.mxu0 %v3294
      %v4255 = vpop.f32.mrf.mxu0
      %v4256 = vadd.f32 %v4143, %v4255
      %4257 = vmatmul.f32.gmra.mxu0 %v3303
      %v4258 = vpop.f32.mrf.mxu0
      %v4259 = vadd.f32 %v4146, %v4258
      %4260 = vmatmul.f32.gmra.mxu0 %v3312
      %v4261 = vpop.f32.mrf.mxu0
      %v4262 = vadd.f32 %v4149, %v4261
      %4263 = vmatmul.f32.gmra.mxu0 %v3321
      %v4264 = vpop.f32.mrf.mxu0
      %v4265 = vadd.f32 %v4152, %v4264
      %4266 = vmatmul.f32.gmra.mxu0 %v3330
      %v4267 = vpop.f32.mrf.mxu0
      %v4268 = vadd.f32 %v4155, %v4267
      %4269 = vmatmul.f32.gmra.mxu0 %v3339
      %v4270 = vpop.f32.mrf.mxu0
      %v4271 = vadd.f32 %v4158, %v4270
      %4272 = vmatmul.f32.gmra.mxu0 %v3348
      %v4273 = vpop.f32.mrf.mxu0
      %v4274 = vadd.f32 %v4161, %v4273
      %4275 = vmatmul.f32.gmra.mxu0 %v3357
      %v4276 = vpop.f32.mrf.mxu0
      %v4277 = vadd.f32 %v4164, %v4276
      %4278 = vmatmul.f32.gmra.mxu0 %v3366
      %v4279 = vpop.f32.mrf.mxu0
      %v4280 = vadd.f32 %v4167, %v4279
      %4281 = vmatmul.f32.gmra.mxu0 %v3375
      %v4282 = vpop.f32.mrf.mxu0
      %v4283 = vadd.f32 %v4170, %v4282
      %4284 = vmatmul.f32.gmra.mxu0 %v3384
      %v4285 = vpop.f32.mrf.mxu0
      %v4286 = vadd.f32 %v4173, %v4285
      %4287 = vmatmul.f32.gmra.mxu0 %v3393
      %v4288 = vpop.f32.mrf.mxu0
      %v4289 = vadd.f32 %v4176, %v4288
      %4290 = vmatmul.f32.gmra.mxu0 %v3402
      %v4291 = vpop.f32.mrf.mxu0
      %v4292 = vadd.f32 %v4179, %v4291
      %4293 = vmatmul.f32.gmra.mxu0 %v3411
      %v4294 = vpop.f32.mrf.mxu0
      %v4295 = vadd.f32 %v4182, %v4294
      %4296 = vmatmul.f32.gmra.mxu0 %v3420
      %v4297 = vpop.f32.mrf.mxu0
      %v4298 = vadd.f32 %v4185, %v4297
      %4299 = vmatmul.f32.gmra.mxu0 %v3429
      %v4300 = vpop.f32.mrf.mxu0
      %v4301 = vadd.f32 %v4188, %v4300
      %4302 = vmatmul.f32.gmra.mxu0 %v3438
      %v4303 = vpop.f32.mrf.mxu0
      %v4304 = vadd.f32 %v4191, %v4303
      %4305 = vmatmul.f32.gmra.mxu0 %v3447
      %v4306 = vpop.f32.mrf.mxu0
      %v4307 = vadd.f32 %v4194, %v4306
      %4308 = vmatmul.f32.gmra.mxu0 %v3456
      %v4309 = vpop.f32.mrf.mxu0
      %v4310 = vadd.f32 %v4197, %v4309
      %4311 = vmatmul.f32.gmra.mxu0 %v3465
      %v4312 = vpop.f32.mrf.mxu0
      %v4313 = vadd.f32 %v4200, %v4312
      %4314 = vmatmul.f32.gmra.mxu0 %v3474
      %v4315 = vpop.f32.mrf.mxu0
      %v4316 = vadd.f32 %v4203, %v4315
      %4317 = vmatmul.f32.gmra.mxu0 %v3483
      %v4318 = vpop.f32.mrf.mxu0
      %v4319 = vadd.f32 %v4206, %v4318
      %4320 = vmatmul.f32.gmra.mxu0 %v3492
      %v4321 = vpop.f32.mrf.mxu0
      %v4322 = vadd.f32 %v4209, %v4321
      %4323 = vmatmul.f32.gmra.mxu0 %v3501
      %v4324 = vpop.f32.mrf.mxu0
      %v4325 = vadd.f32 %v4212, %v4324
      %4326 = vdwg.mxu0
      %4327 = vmatpush.msra.mxu0 %v3616
      %4328 = vmatpush.msra.mxu0 %v3615
      %4329 = vmatpush.msra.mxu0 %v3614
      %4330 = vmatpush.msra.mxu0 %v3613
      %4331 = vmatpush.msra.mxu0 %v3612
      %4332 = vmatpush.msra.mxu0 %v3611
      %4333 = vmatpush.msra.mxu0 %v3610
      %4334 = vmatpush.msra.mxu0 %v3609
      %4335 = vmatpush.msra.mxu0 %v3608
      %4336 = vmatpush.msra.mxu0 %v3607
      %4337 = vmatpush.msra.mxu0 %v3606
      %4338 = vmatpush.msra.mxu0 %v3605
      %4339 = vmatpush.msra.mxu0 %v3604
      %4340 = vmatpush.msra.mxu0 %v3603
      %4341 = vmatpush.msra.mxu0 %v3602
      %4342 = vmatpush.msra.mxu0 %v3601
      %4343 = vmatmul.f32.gmra.mxu0 %v3223
      %v4344 = vpop.f32.mrf.mxu0
      %v4345 = vadd.f32 %v4232, %v4344
      %4346 = vmatmul.f32.gmra.mxu0 %v3232
      %v4347 = vpop.f32.mrf.mxu0
      %v4348 = vadd.f32 %v4235, %v4347
      %4349 = vmatmul.f32.gmra.mxu0 %v3241
      %v4350 = vpop.f32.mrf.mxu0
      %v4351 = vadd.f32 %v4238, %v4350
      %4352 = vmatmul.f32.gmra.mxu0 %v3250
      %v4353 = vpop.f32.mrf.mxu0
      %v4354 = vadd.f32 %v4241, %v4353
      %4355 = vmatmul.f32.gmra.mxu0 %v3259
      %v4356 = vpop.f32.mrf.mxu0
      %v4357 = vadd.f32 %v4244, %v4356
      %4358 = vmatmul.f32.gmra.mxu0 %v3268
      %v4359 = vpop.f32.mrf.mxu0
      %v4360 = vadd.f32 %v4247, %v4359
      %4361 = vmatmul.f32.gmra.mxu0 %v3277
      %v4362 = vpop.f32.mrf.mxu0
      %v4363 = vadd.f32 %v4250, %v4362
      %4364 = vmatmul.f32.gmra.mxu0 %v3286
      %v4365 = vpop.f32.mrf.mxu0
      %v4366 = vadd.f32 %v4253, %v4365
      %4367 = vmatmul.f32.gmra.mxu0 %v3295
      %v4368 = vpop.f32.mrf.mxu0
      %v4369 = vadd.f32 %v4256, %v4368
      %4370 = vmatmul.f32.gmra.mxu0 %v3304
      %v4371 = vpop.f32.mrf.mxu0
      %v4372 = vadd.f32 %v4259, %v4371
      %4373 = vmatmul.f32.gmra.mxu0 %v3313
      %v4374 = vpop.f32.mrf.mxu0
      %v4375 = vadd.f32 %v4262, %v4374
      %4376 = vmatmul.f32.gmra.mxu0 %v3322
      %v4377 = vpop.f32.mrf.mxu0
      %v4378 = vadd.f32 %v4265, %v4377
      %4379 = vmatmul.f32.gmra.mxu0 %v3331
      %v4380 = vpop.f32.mrf.mxu0
      %v4381 = vadd.f32 %v4268, %v4380
      %4382 = vmatmul.f32.gmra.mxu0 %v3340
      %v4383 = vpop.f32.mrf.mxu0
      %v4384 = vadd.f32 %v4271, %v4383
      %4385 = vmatmul.f32.gmra.mxu0 %v3349
      %v4386 = vpop.f32.mrf.mxu0
      %v4387 = vadd.f32 %v4274, %v4386
      %4388 = vmatmul.f32.gmra.mxu0 %v3358
      %v4389 = vpop.f32.mrf.mxu0
      %v4390 = vadd.f32 %v4277, %v4389
      %4391 = vmatmul.f32.gmra.mxu0 %v3367
      %v4392 = vpop.f32.mrf.mxu0
      %v4393 = vadd.f32 %v4280, %v4392
      %4394 = vmatmul.f32.gmra.mxu0 %v3376
      %v4395 = vpop.f32.mrf.mxu0
      %v4396 = vadd.f32 %v4283, %v4395
      %4397 = vmatmul.f32.gmra.mxu0 %v3385
      %v4398 = vpop.f32.mrf.mxu0
      %v4399 = vadd.f32 %v4286, %v4398
      %4400 = vmatmul.f32.gmra.mxu0 %v3394
      %v4401 = vpop.f32.mrf.mxu0
      %v4402 = vadd.f32 %v4289, %v4401
      %4403 = vmatmul.f32.gmra.mxu0 %v3403
      %v4404 = vpop.f32.mrf.mxu0
      %v4405 = vadd.f32 %v4292, %v4404
      %4406 = vmatmul.f32.gmra.mxu0 %v3412
      %v4407 = vpop.f32.mrf.mxu0
      %v4408 = vadd.f32 %v4295, %v4407
      %4409 = vmatmul.f32.gmra.mxu0 %v3421
      %v4410 = vpop.f32.mrf.mxu0
      %v4411 = vadd.f32 %v4298, %v4410
      %4412 = vmatmul.f32.gmra.mxu0 %v3430
      %v4413 = vpop.f32.mrf.mxu0
      %v4414 = vadd.f32 %v4301, %v4413
      %4415 = vmatmul.f32.gmra.mxu0 %v3439
      %v4416 = vpop.f32.mrf.mxu0
      %v4417 = vadd.f32 %v4304, %v4416
      %4418 = vmatmul.f32.gmra.mxu0 %v3448
      %v4419 = vpop.f32.mrf.mxu0
      %v4420 = vadd.f32 %v4307, %v4419
      %4421 = vmatmul.f32.gmra.mxu0 %v3457
      %v4422 = vpop.f32.mrf.mxu0
      %v4423 = vadd.f32 %v4310, %v4422
      %4424 = vmatmul.f32.gmra.mxu0 %v3466
      %v4425 = vpop.f32.mrf.mxu0
      %v4426 = vadd.f32 %v4313, %v4425
      %4427 = vmatmul.f32.gmra.mxu0 %v3475
      %v4428 = vpop.f32.mrf.mxu0
      %v4429 = vadd.f32 %v4316, %v4428
      %4430 = vmatmul.f32.gmra.mxu0 %v3484
      %v4431 = vpop.f32.mrf.mxu0
      %v4432 = vadd.f32 %v4319, %v4431
      %4433 = vmatmul.f32.gmra.mxu0 %v3493
      %v4434 = vpop.f32.mrf.mxu0
      %v4435 = vadd.f32 %v4322, %v4434
      %4436 = vmatmul.f32.gmra.mxu0 %v3502
      %v4437 = vpop.f32.mrf.mxu0
      %v4438 = vadd.f32 %v4325, %v4437
      %4439 = vdwg.mxu0
      %4440 = vmatpush.msra.mxu0 %v3632
      %4441 = vmatpush.msra.mxu0 %v3631
      %4442 = vmatpush.msra.mxu0 %v3630
      %4443 = vmatpush.msra.mxu0 %v3629
      %4444 = vmatpush.msra.mxu0 %v3628
      %4445 = vmatpush.msra.mxu0 %v3627
      %4446 = vmatpush.msra.mxu0 %v3626
      %4447 = vmatpush.msra.mxu0 %v3625
      %4448 = vmatpush.msra.mxu0 %v3624
      %4449 = vmatpush.msra.mxu0 %v3623
      %4450 = vmatpush.msra.mxu0 %v3622
      %4451 = vmatpush.msra.mxu0 %v3621
      %4452 = vmatpush.msra.mxu0 %v3620
      %4453 = vmatpush.msra.mxu0 %v3619
      %4454 = vmatpush.msra.mxu0 %v3618
      %4455 = vmatpush.msra.mxu0 %v3617
      %4456 = vmatmul.f32.gmra.mxu0 %v3224
      %v4457 = vpop.f32.mrf.mxu0
      %v4458 = vadd.f32 %v4345, %v4457
      %4459 = vmatmul.f32.gmra.mxu0 %v3233
      %v4460 = vpop.f32.mrf.mxu0
      %v4461 = vadd.f32 %v4348, %v4460
      %4462 = vmatmul.f32.gmra.mxu0 %v3242
      %v4463 = vpop.f32.mrf.mxu0
      %v4464 = vadd.f32 %v4351, %v4463
      %4465 = vmatmul.f32.gmra.mxu0 %v3251
      %v4466 = vpop.f32.mrf.mxu0
      %v4467 = vadd.f32 %v4354, %v4466
      %4468 = vmatmul.f32.gmra.mxu0 %v3260
      %v4469 = vpop.f32.mrf.mxu0
      %v4470 = vadd.f32 %v4357, %v4469
      %4471 = vmatmul.f32.gmra.mxu0 %v3269
      %v4472 = vpop.f32.mrf.mxu0
      %v4473 = vadd.f32 %v4360, %v4472
      %4474 = vmatmul.f32.gmra.mxu0 %v3278
      %v4475 = vpop.f32.mrf.mxu0
      %v4476 = vadd.f32 %v4363, %v4475
      %4477 = vmatmul.f32.gmra.mxu0 %v3287
      %v4478 = vpop.f32.mrf.mxu0
      %v4479 = vadd.f32 %v4366, %v4478
      %4480 = vmatmul.f32.gmra.mxu0 %v3296
      %v4481 = vpop.f32.mrf.mxu0
      %v4482 = vadd.f32 %v4369, %v4481
      %4483 = vmatmul.f32.gmra.mxu0 %v3305
      %v4484 = vpop.f32.mrf.mxu0
      %v4485 = vadd.f32 %v4372, %v4484
      %4486 = vmatmul.f32.gmra.mxu0 %v3314
      %v4487 = vpop.f32.mrf.mxu0
      %v4488 = vadd.f32 %v4375, %v4487
      %4489 = vmatmul.f32.gmra.mxu0 %v3323
      %v4490 = vpop.f32.mrf.mxu0
      %v4491 = vadd.f32 %v4378, %v4490
      %4492 = vmatmul.f32.gmra.mxu0 %v3332
      %v4493 = vpop.f32.mrf.mxu0
      %v4494 = vadd.f32 %v4381, %v4493
      %4495 = vmatmul.f32.gmra.mxu0 %v3341
      %v4496 = vpop.f32.mrf.mxu0
      %v4497 = vadd.f32 %v4384, %v4496
      %4498 = vmatmul.f32.gmra.mxu0 %v3350
      %v4499 = vpop.f32.mrf.mxu0
      %v4500 = vadd.f32 %v4387, %v4499
      %4501 = vmatmul.f32.gmra.mxu0 %v3359
      %v4502 = vpop.f32.mrf.mxu0
      %v4503 = vadd.f32 %v4390, %v4502
      %4504 = vmatmul.f32.gmra.mxu0 %v3368
      %v4505 = vpop.f32.mrf.mxu0
      %v4506 = vadd.f32 %v4393, %v4505
      %4507 = vmatmul.f32.gmra.mxu0 %v3377
      %v4508 = vpop.f32.mrf.mxu0
      %v4509 = vadd.f32 %v4396, %v4508
      %4510 = vmatmul.f32.gmra.mxu0 %v3386
      %v4511 = vpop.f32.mrf.mxu0
      %v4512 = vadd.f32 %v4399, %v4511
      %4513 = vmatmul.f32.gmra.mxu0 %v3395
      %v4514 = vpop.f32.mrf.mxu0
      %v4515 = vadd.f32 %v4402, %v4514
      %4516 = vmatmul.f32.gmra.mxu0 %v3404
      %v4517 = vpop.f32.mrf.mxu0
      %v4518 = vadd.f32 %v4405, %v4517
      %4519 = vmatmul.f32.gmra.mxu0 %v3413
      %v4520 = vpop.f32.mrf.mxu0
      %v4521 = vadd.f32 %v4408, %v4520
      %4522 = vmatmul.f32.gmra.mxu0 %v3422
      %v4523 = vpop.f32.mrf.mxu0
      %v4524 = vadd.f32 %v4411, %v4523
      %4525 = vmatmul.f32.gmra.mxu0 %v3431
      %v4526 = vpop.f32.mrf.mxu0
      %v4527 = vadd.f32 %v4414, %v4526
      %4528 = vmatmul.f32.gmra.mxu0 %v3440
      %v4529 = vpop.f32.mrf.mxu0
      %v4530 = vadd.f32 %v4417, %v4529
      %4531 = vmatmul.f32.gmra.mxu0 %v3449
      %v4532 = vpop.f32.mrf.mxu0
      %v4533 = vadd.f32 %v4420, %v4532
      %4534 = vmatmul.f32.gmra.mxu0 %v3458
      %v4535 = vpop.f32.mrf.mxu0
      %v4536 = vadd.f32 %v4423, %v4535
      %4537 = vmatmul.f32.gmra.mxu0 %v3467
      %v4538 = vpop.f32.mrf.mxu0
      %v4539 = vadd.f32 %v4426, %v4538
      %4540 = vmatmul.f32.gmra.mxu0 %v3476
      %v4541 = vpop.f32.mrf.mxu0
      %v4542 = vadd.f32 %v4429, %v4541
      %4543 = vmatmul.f32.gmra.mxu0 %v3485
      %v4544 = vpop.f32.mrf.mxu0
      %v4545 = vadd.f32 %v4432, %v4544
      %4546 = vmatmul.f32.gmra.mxu0 %v3494
      %v4547 = vpop.f32.mrf.mxu0
      %v4548 = vadd.f32 %v4435, %v4547
      %4549 = vmatmul.f32.gmra.mxu0 %v3503
      %v4550 = vpop.f32.mrf.mxu0
      %v4551 = vadd.f32 %v4438, %v4550
      %4552 = vdwg.mxu0
      %4553 = vmatpush.msra.mxu0 %v3648
      %4554 = vmatpush.msra.mxu0 %v3647
      %4555 = vmatpush.msra.mxu0 %v3646
      %4556 = vmatpush.msra.mxu0 %v3645
      %4557 = vmatpush.msra.mxu0 %v3644
      %4558 = vmatpush.msra.mxu0 %v3643
      %4559 = vmatpush.msra.mxu0 %v3642
      %4560 = vmatpush.msra.mxu0 %v3641
      %4561 = vmatpush.msra.mxu0 %v3640
      %4562 = vmatpush.msra.mxu0 %v3639
      %4563 = vmatpush.msra.mxu0 %v3638
      %4564 = vmatpush.msra.mxu0 %v3637
      %4565 = vmatpush.msra.mxu0 %v3636
      %4566 = vmatpush.msra.mxu0 %v3635
      %4567 = vmatpush.msra.mxu0 %v3634
      %4568 = vmatpush.msra.mxu0 %v3633
      %4569 = vmatmul.f32.gmra.mxu0 %v3225
      %v4570 = vpop.f32.mrf.mxu0
      %v4571 = vadd.f32 %v4458, %v4570
      %4572 = vmatmul.f32.gmra.mxu0 %v3234
      %v4573 = vpop.f32.mrf.mxu0
      %v4574 = vadd.f32 %v4461, %v4573
      %4575 = vmatmul.f32.gmra.mxu0 %v3243
      %v4576 = vpop.f32.mrf.mxu0
      %v4577 = vadd.f32 %v4464, %v4576
      %4578 = vmatmul.f32.gmra.mxu0 %v3252
      %v4579 = vpop.f32.mrf.mxu0
      %v4580 = vadd.f32 %v4467, %v4579
      %4581 = vmatmul.f32.gmra.mxu0 %v3261
      %v4582 = vpop.f32.mrf.mxu0
      %v4583 = vadd.f32 %v4470, %v4582
      %4584 = vmatmul.f32.gmra.mxu0 %v3270
      %v4585 = vpop.f32.mrf.mxu0
      %v4586 = vadd.f32 %v4473, %v4585
      %4587 = vmatmul.f32.gmra.mxu0 %v3279
      %v4588 = vpop.f32.mrf.mxu0
      %v4589 = vadd.f32 %v4476, %v4588
      %4590 = vmatmul.f32.gmra.mxu0 %v3288
      %v4591 = vpop.f32.mrf.mxu0
      %v4592 = vadd.f32 %v4479, %v4591
      %4593 = vmatmul.f32.gmra.mxu0 %v3297
      %v4594 = vpop.f32.mrf.mxu0
      %v4595 = vadd.f32 %v4482, %v4594
      %4596 = vmatmul.f32.gmra.mxu0 %v3306
      %v4597 = vpop.f32.mrf.mxu0
      %v4598 = vadd.f32 %v4485, %v4597
      %4599 = vmatmul.f32.gmra.mxu0 %v3315
      %v4600 = vpop.f32.mrf.mxu0
      %v4601 = vadd.f32 %v4488, %v4600
      %4602 = vmatmul.f32.gmra.mxu0 %v3324
      %v4603 = vpop.f32.mrf.mxu0
      %v4604 = vadd.f32 %v4491, %v4603
      %4605 = vmatmul.f32.gmra.mxu0 %v3333
      %v4606 = vpop.f32.mrf.mxu0
      %v4607 = vadd.f32 %v4494, %v4606
      %4608 = vmatmul.f32.gmra.mxu0 %v3342
      %v4609 = vpop.f32.mrf.mxu0
      %v4610 = vadd.f32 %v4497, %v4609
      %4611 = vmatmul.f32.gmra.mxu0 %v3351
      %v4612 = vpop.f32.mrf.mxu0
      %v4613 = vadd.f32 %v4500, %v4612
      %4614 = vmatmul.f32.gmra.mxu0 %v3360
      %v4615 = vpop.f32.mrf.mxu0
      %v4616 = vadd.f32 %v4503, %v4615
      %4617 = vmatmul.f32.gmra.mxu0 %v3369
      %v4618 = vpop.f32.mrf.mxu0
      %v4619 = vadd.f32 %v4506, %v4618
      %4620 = vmatmul.f32.gmra.mxu0 %v3378
      %v4621 = vpop.f32.mrf.mxu0
      %v4622 = vadd.f32 %v4509, %v4621
      %4623 = vmatmul.f32.gmra.mxu0 %v3387
      %v4624 = vpop.f32.mrf.mxu0
      %v4625 = vadd.f32 %v4512, %v4624
      %4626 = vmatmul.f32.gmra.mxu0 %v3396
      %v4627 = vpop.f32.mrf.mxu0
      %v4628 = vadd.f32 %v4515, %v4627
      %4629 = vmatmul.f32.gmra.mxu0 %v3405
      %v4630 = vpop.f32.mrf.mxu0
      %v4631 = vadd.f32 %v4518, %v4630
      %4632 = vmatmul.f32.gmra.mxu0 %v3414
      %v4633 = vpop.f32.mrf.mxu0
      %v4634 = vadd.f32 %v4521, %v4633
      %4635 = vmatmul.f32.gmra.mxu0 %v3423
      %v4636 = vpop.f32.mrf.mxu0
      %v4637 = vadd.f32 %v4524, %v4636
      %4638 = vmatmul.f32.gmra.mxu0 %v3432
      %v4639 = vpop.f32.mrf.mxu0
      %v4640 = vadd.f32 %v4527, %v4639
      %4641 = vmatmul.f32.gmra.mxu0 %v3441
      %v4642 = vpop.f32.mrf.mxu0
      %v4643 = vadd.f32 %v4530, %v4642
      %4644 = vmatmul.f32.gmra.mxu0 %v3450
      %v4645 = vpop.f32.mrf.mxu0
      %v4646 = vadd.f32 %v4533, %v4645
      %4647 = vmatmul.f32.gmra.mxu0 %v3459
      %v4648 = vpop.f32.mrf.mxu0
      %v4649 = vadd.f32 %v4536, %v4648
      %4650 = vmatmul.f32.gmra.mxu0 %v3468
      %v4651 = vpop.f32.mrf.mxu0
      %v4652 = vadd.f32 %v4539, %v4651
      %4653 = vmatmul.f32.gmra.mxu0 %v3477
      %v4654 = vpop.f32.mrf.mxu0
      %v4655 = vadd.f32 %v4542, %v4654
      %4656 = vmatmul.f32.gmra.mxu0 %v3486
      %v4657 = vpop.f32.mrf.mxu0
      %v4658 = vadd.f32 %v4545, %v4657
      %4659 = vmatmul.f32.gmra.mxu0 %v3495
      %v4660 = vpop.f32.mrf.mxu0
      %v4661 = vadd.f32 %v4548, %v4660
      %4662 = vmatmul.f32.gmra.mxu0 %v3504
      %v4663 = vpop.f32.mrf.mxu0
      %v4664 = vadd.f32 %v4551, %v4663
      %4665 = vdwg.mxu0
      %v4666 = vld [vmem:[%s5] sm:$0x1]
      %v4668 = vperm.slane %v4666, 0
      %v4670 = vmul.f32 %v4571, %v4668
      %v4671 = vmul.f32 %v4574, %v4668
      %v4672 = vmul.f32 %v4577, %v4668
      %v4673 = vmul.f32 %v4580, %v4668
      %v4674 = vmul.f32 %v4583, %v4668
      %v4675 = vmul.f32 %v4586, %v4668
      %v4676 = vmul.f32 %v4589, %v4668
      %v4677 = vmul.f32 %v4592, %v4668
      %v4678 = vmul.f32 %v4595, %v4668
      %v4679 = vmul.f32 %v4598, %v4668
      %v4680 = vmul.f32 %v4601, %v4668
      %v4681 = vmul.f32 %v4604, %v4668
      %v4682 = vmul.f32 %v4607, %v4668
      %v4683 = vmul.f32 %v4610, %v4668
      %v4684 = vmul.f32 %v4613, %v4668
      %v4685 = vmul.f32 %v4616, %v4668
      %v4686 = vmul.f32 %v4619, %v4668
      %v4687 = vmul.f32 %v4622, %v4668
      %v4688 = vmul.f32 %v4625, %v4668
      %v4689 = vmul.f32 %v4628, %v4668
      %v4690 = vmul.f32 %v4631, %v4668
      %v4691 = vmul.f32 %v4634, %v4668
      %v4692 = vmul.f32 %v4637, %v4668
      %v4693 = vmul.f32 %v4640, %v4668
      %v4694 = vmul.f32 %v4643, %v4668
      %v4695 = vmul.f32 %v4646, %v4668
      %v4696 = vmul.f32 %v4649, %v4668
      %v4697 = vmul.f32 %v4652, %v4668
      %v4698 = vmul.f32 %v4655, %v4668
      %v4699 = vmul.f32 %v4658, %v4668
      %v4700 = vmul.f32 %v4661, %v4668
      %v4701 = vmul.f32 %v4664, %v4668
      %v4702 = vld [vmem:[%s6] sm:$0x1]
      %v4704 = vperm.slane %v4702, 0
      %v4706 = vadd.f32 %v4670, %v4704
      %v4707 = vadd.f32 %v4671, %v4704
      %v4708 = vadd.f32 %v4672, %v4704
      %v4709 = vadd.f32 %v4673, %v4704
      %v4710 = vadd.f32 %v4674, %v4704
      %v4711 = vadd.f32 %v4675, %v4704
      %v4712 = vadd.f32 %v4676, %v4704
      %v4713 = vadd.f32 %v4677, %v4704
      %v4714 = vadd.f32 %v4678, %v4704
      %v4715 = vadd.f32 %v4679, %v4704
      %v4716 = vadd.f32 %v4680, %v4704
      %v4717 = vadd.f32 %v4681, %v4704
      %v4718 = vadd.f32 %v4682, %v4704
      %v4719 = vadd.f32 %v4683, %v4704
      %v4720 = vadd.f32 %v4684, %v4704
      %v4721 = vadd.f32 %v4685, %v4704
      %v4722 = vadd.f32 %v4686, %v4704
      %v4723 = vadd.f32 %v4687, %v4704
      %v4724 = vadd.f32 %v4688, %v4704
      %v4725 = vadd.f32 %v4689, %v4704
      %v4726 = vadd.f32 %v4690, %v4704
      %v4727 = vadd.f32 %v4691, %v4704
      %v4728 = vadd.f32 %v4692, %v4704
      %v4729 = vadd.f32 %v4693, %v4704
      %v4730 = vadd.f32 %v4694, %v4704
      %v4731 = vadd.f32 %v4695, %v4704
      %v4732 = vadd.f32 %v4696, %v4704
      %v4733 = vadd.f32 %v4697, %v4704
      %v4734 = vadd.f32 %v4698, %v4704
      %v4735 = vadd.f32 %v4699, %v4704
      %v4736 = vadd.f32 %v4700, %v4704
      %v4737 = vadd.f32 %v4701, %v4704
      %v4738 = vmax.f32 %v4706, 0.0
      %v4739 = vmax.f32 %v4707, 0.0
      %v4740 = vmax.f32 %v4708, 0.0
      %v4741 = vmax.f32 %v4709, 0.0
      %v4742 = vmax.f32 %v4710, 0.0
      %v4743 = vmax.f32 %v4711, 0.0
      %v4744 = vmax.f32 %v4712, 0.0
      %v4745 = vmax.f32 %v4713, 0.0
      %v4746 = vmax.f32 %v4714, 0.0
      %v4747 = vmax.f32 %v4715, 0.0
      %v4748 = vmax.f32 %v4716, 0.0
      %v4749 = vmax.f32 %v4717, 0.0
      %v4750 = vmax.f32 %v4718, 0.0
      %v4751 = vmax.f32 %v4719, 0.0
      %v4752 = vmax.f32 %v4720, 0.0
      %v4753 = vmax.f32 %v4721, 0.0
      %v4754 = vmax.f32 %v4722, 0.0
      %v4755 = vmax.f32 %v4723, 0.0
      %v4756 = vmax.f32 %v4724, 0.0
      %v4757 = vmax.f32 %v4725, 0.0
      %v4758 = vmax.f32 %v4726, 0.0
      %v4759 = vmax.f32 %v4727, 0.0
      %v4760 = vmax.f32 %v4728, 0.0
      %v4761 = vmax.f32 %v4729, 0.0
      %v4762 = vmax.f32 %v4730, 0.0
      %v4763 = vmax.f32 %v4731, 0.0
      %v4764 = vmax.f32 %v4732, 0.0
      %v4765 = vmax.f32 %v4733, 0.0
      %v4766 = vmax.f32 %v4734, 0.0
      %v4767 = vmax.f32 %v4735, 0.0
      %v4768 = vmax.f32 %v4736, 0.0
      %v4769 = vmax.f32 %v4737, 0.0
      %4770 = vst [vmem:[%s278] sm:$0xff] %v4738
      %4771 = vst [vmem:[%s278 + $0x8] sm:$0xff] %v4739
      %4772 = vst [vmem:[%s278 + $0x10] sm:$0xff] %v4740
      %4773 = vst [vmem:[%s278 + $0x18] sm:$0xff] %v4741
      %4774 = vst [vmem:[%s278 + $0x20] sm:$0xff] %v4742
      %4775 = vst [vmem:[%s278 + $0x28] sm:$0xff] %v4743
      %4776 = vst [vmem:[%s278 + $0x30] sm:$0xff] %v4744
      %4777 = vst [vmem:[%s278 + $0x38] sm:$0xff] %v4745
      %4778 = vst [vmem:[%s278 + $0x40] sm:$0xff] %v4746
      %4779 = vst [vmem:[%s278 + $0x48] sm:$0xff] %v4747
      %4780 = vst [vmem:[%s278 + $0x50] sm:$0xff] %v4748
      %4781 = vst [vmem:[%s278 + $0x58] sm:$0xff] %v4749
      %4782 = vst [vmem:[%s278 + $0x60] sm:$0xff] %v4750
      %4783 = vst [vmem:[%s278 + $0x68] sm:$0xff] %v4751
      %4784 = vst [vmem:[%s278 + $0x70] sm:$0xff] %v4752
      %4785 = vst [vmem:[%s278 + $0x78] sm:$0xff] %v4753
      %4786 = vst [vmem:[%s278 + $0x80] sm:$0xff] %v4754
      %4787 = vst [vmem:[%s278 + $0x88] sm:$0xff] %v4755
      %4788 = vst [vmem:[%s278 + $0x90] sm:$0xff] %v4756
      %4789 = vst [vmem:[%s278 + $0x98] sm:$0xff] %v4757
      %4790 = vst [vmem:[%s278 + $0xa0] sm:$0xff] %v4758
      %4791 = vst [vmem:[%s278 + $0xa8] sm:$0xff] %v4759
      %4792 = vst [vmem:[%s278 + $0xb0] sm:$0xff] %v4760
      %4793 = vst [vmem:[%s278 + $0xb8] sm:$0xff] %v4761
      %4794 = vst [vmem:[%s278 + $0xc0] sm:$0xff] %v4762
      %4795 = vst [vmem:[%s278 + $0xc8] sm:$0xff] %v4763
      %4796 = vst [vmem:[%s278 + $0xd0] sm:$0xff] %v4764
      %4797 = vst [vmem:[%s278 + $0xd8] sm:$0xff] %v4765
      %4798 = vst [vmem:[%s278 + $0xe0] sm:$0xff] %v4766
      %4799 = vst [vmem:[%s278 + $0xe8] sm:$0xff] %v4767
      %4800 = vst [vmem:[%s278 + $0xf0] sm:$0xff] %v4768
      %4801 = vst [vmem:[%s278 + $0xf8] sm:$0xff] %v4769
      %p4802 = scmp.lt.s32.totalorder %s18, 1
      %s4803 = scalar_select %p4802, %s18, 1
      %s4804 = smul.addr %s4803, 32
      %s4805 = smul.addr %s4804, 8
      %s4806 = scalar_lea.vmem %s7, %s4805
      // Predicated region
      $region49: #{conv_block_forward.1} parent=47 // pred_check
        %p4807 = pneg %p188
      $region50: #{conv_block_forward.1} parent=47 // pred_check_branch
        %4809 = sbr.rel (%p4807) target = $region52
      $region51: #{conv_block_forward.1} parent=47 // pred_region
        _
      $region52: #{conv_block_forward.1} parent=47 // pred_fallthru
        _
    $region48: #{conv_block_forward.1} parent=5 // pred_fallthru
      _
    %p4810 = scmp.le.s32.totalorder 2, %s13
    // Predicated region
    $region53: #{conv_block_forward.1} parent=5 // pred_check
      %p4811 = pneg %p4810
    $region54: #{conv_block_forward.1} parent=5 // pred_check_branch
      %4813 = sbr.rel (%p4811) target = $region56
    $region55: #{conv_block_forward.1} parent=5 // pred_region
      %s4814 = ssub.s32 %s13, 2
      // Predicated region
      $region57: #{conv_block_forward.1} parent=55 // pred_check
        %p4815 = pneg %p194
      $region58: #{conv_block_forward.1} parent=55 // pred_check_branch
        %4817 = sbr.rel (%p4815) target = $region60
      $region59: #{conv_block_forward.1} parent=55 // pred_region
        %p4818 = scmp.lt.s32.totalorder %s19, 1
        %s4819 = scalar_select %p4818, %s19, 1
        %s4820 = smul.addr %s4819, 32
        %s4821 = smul.addr %s4820, 8
        %s4822 = scalar_lea.vmem %s7, %s4821
      $region60: #{conv_block_forward.1} parent=55 // pred_fallthru
        _
    $region56: #{conv_block_forward.1} parent=5 // pred_fallthru
      _
  $region6: #{conv_block_forward.1} parent=0 // loop_footer
    %s17 = sadd.s32 1, %s13
  $region7: #{conv_block_forward.1} parent=0 // loop_footer_branch
    %12 = sbr.rel target = $region3
  $region8: #{conv_block_forward.1} parent=0 // loop_exit
    _

</llo_original>
